<compile_context>
chip_gen: v7x
topology: tpu7x:2x2x1
jax: 0.10.0
libtpu: 0.0.40
codegen_flags: <defaults>
</compile_context>

<pallas_src>
import jax
import jax.numpy as jnp
from jax import lax
from jax.experimental import pallas as pl
from jax.experimental.pallas import tpu as pltpu

_F32 = jnp.float32
_HIGH = lax.Precision.HIGHEST


def _round_up(a, b):
    return (a + b - 1) // b * b


def _vmem_capacity_bytes():
    try:
        return int(pltpu.get_tpu_info().vmem_capacity_bytes)
    except Exception:
        return 64 * 1024 * 1024        # conservative fallback: v7x per-core VMEM


def _sigmoid(x):
    return 1.0 / (1.0 + jnp.exp(-x))


def _branches(theta, w1t, s1, b1, w2t, lw1, s2, b2, lw2, smat):
    """theta: (T, C) f32 spatial means -> kw_ct (C, K), l2_ct (C, T) in f32.

    Channels end up on sublanes so the apply pass can broadcast per-channel
    coefficients directly along the spatial (lane) axis.
    """
    theta_ct = jnp.transpose(theta)                                          # (C, T)

    # --- G branch: Linear -> BN(eval) -> ReLU -> Linear -> Softmax ----------
    g = jnp.dot(theta_ct, w1t, precision=_HIGH, preferred_element_type=_F32)  # (C, A)
    g = jnp.maximum(g * s1 + b1, 0.0)
    logits = jnp.dot(g, w2t, precision=_HIGH, preferred_element_type=_F32)    # (C, K)
    logits = logits - jnp.max(logits, axis=-1, keepdims=True)
    e = jnp.exp(logits)
    kw_ct = e / jnp.sum(e, axis=-1, keepdims=True)                            # (C, K)

    # --- L branch: Conv1d(k1) -> BN(eval) -> ReLU -> Conv1d(1) -> Sigmoid ---
    k1 = smat.shape[0]
    out1 = None
    for dk in range(k1):
        sh = jnp.dot(theta_ct, smat[dk], precision=_HIGH,
                     preferred_element_type=_F32)                             # (C, T) shifted
        term = jnp.dot(lw1[dk], sh, precision=_HIGH,
                       preferred_element_type=_F32)                           # (Cb, T)
        out1 = term if out1 is None else out1 + term
    out1 = jnp.maximum(out1 * s2 + b2, 0.0)
    l2_ct = _sigmoid(jnp.dot(lw2, out1, precision=_HIGH,
                             preferred_element_type=_F32))                    # (C, T)
    return kw_ct, l2_ct


def _adaptive_conv(x_ref, o_ref, kw_ct, l2_ct, T, K, pad):
    """y[t] = sum_k kw[:, k] * l2[:, t+k-pad] * x[t+k-pad]   (zero outside [0, T)).

    Pure VPU shifted multiply-accumulate; each x[s] slice is loaded + upcast
    exactly once, per-(t, k) channel coefficients are tiny (C, 1) vectors.
    """
    kvec = [kw_ct[:, k:k + 1] for k in range(K)]            # (C, 1) each
    lvec = [l2_ct[:, s:s + 1] for s in range(T)]            # (C, 1) each
    cache = {}

    def xs(s):
        if s not in cache:
            cache[s] = x_ref[0, s].astype(_F32)             # (C, L), upcast once
        return cache[s]

    for t in range(T):
        acc = None
        for k in range(K):
            s = t + k - pad
            if 0 <= s < T:
                term = (kvec[k] * lvec[s]) * xs(s)
                acc = term if acc is None else acc + term
        o_ref[0, t] = acc.astype(o_ref.dtype)


def _stats_kernel_factory(T, C, HW, tile, ragged, defer):
    inv_hw = 1.0 / float(HW)
    nck = tile // 128

    def kernel(x_ref, w1t_ref, s1_ref, b1_ref, w2t_ref, lw1_ref, s2_ref, b2_ref,
               lw2_ref, smat_ref, kw_ref, l2_ref, acc_ref):
        hw = pl.program_id(1)
        last = pl.num_programs(1) - 1

        @pl.when(hw == 0)
        def _():
            acc_ref[...] = jnp.zeros_like(acc_ref)

        xt = x_ref[0]                                        # (T, C, tile), native dtype

        def accumulate(masked):
            if masked:
                lane = lax.broadcasted_iota(jnp.int32, (1, 1, tile), 2)
                valid = (hw * tile + lane) < HW
            part = None
            for j in range(nck):                             # 128-lane chunks: VALU only
                ch = xt[..., j * 128:(j + 1) * 128].astype(_F32)
                if masked:
                    ch = jnp.where(valid[..., j * 128:(j + 1) * 128], ch, 0.0)
                part = ch if part is None else part + ch
            if defer:
                acc_ref[...] += part                         # (T, C, 128) scratch
            else:
                acc_ref[...] += jnp.sum(part, axis=-1)       # (T, C) scratch

        if ragged:
            @pl.when(hw < last)
            def _():
                accumulate(False)

            @pl.when(hw == last)
            def _():
                accumulate(True)
        else:
            accumulate(False)

        @pl.when(hw == last)
        def _():
            acc = acc_ref[...]
            theta = (jnp.sum(acc, axis=-1) if defer else acc) * inv_hw      # (T, C)
            kw_ct, l2_ct = _branches(theta, w1t_ref[...], s1_ref[...], b1_ref[...],
                                     w2t_ref[...], lw1_ref[...], s2_ref[...],
                                     b2_ref[...], lw2_ref[...], smat_ref[...])
            kw_ref[0] = kw_ct.astype(kw_ref.dtype)
            l2_ref[0] = l2_ct.astype(l2_ref.dtype)

    return kernel


def _apply_kernel_factory(T, K, pad):
    def kernel(x_ref, kw_ref, l2_ref, o_ref):
        _adaptive_conv(x_ref, o_ref, kw_ref[0], l2_ref[0], T, K, pad)
    return kernel


def _single_pass_kernel_factory(T, HW, K, pad):
    inv_hw = 1.0 / float(HW)

    def kernel(x_ref, w1t_ref, s1_ref, b1_ref, w2t_ref, lw1_ref, s2_ref, b2_ref,
               lw2_ref, smat_ref, o_ref):
        theta = jnp.sum(x_ref[0].astype(_F32), axis=-1) * inv_hw            # (T, C)
        kw_ct, l2_ct = _branches(theta, w1t_ref[...], s1_ref[...], b1_ref[...],
                                 w2t_ref[...], lw1_ref[...], s2_ref[...],
                                 b2_ref[...], lw2_ref[...], smat_ref[...])
        _adaptive_conv(x_ref, o_ref, kw_ct, l2_ct, T, K, pad)

    return kernel


def tam_forward(x, params, num_segments, alpha=2, adaptive_kernel_size=3, beta=4,
                conv1d_kernel_size=3, stride=1, pad=1, single_pass=None):
    n, c, h, w = x.shape
    T = num_segments
    assert n % T == 0, "batch must be a multiple of num_segments"
    B = n // T
    HW = h * w
    K = adaptive_kernel_size
    k1 = conv1d_kernel_size
    p1 = k1 // 2
    A = T * alpha
    Cb = c // beta
    assert Cb >= 1
    assert stride == 1 and (T + 2 * pad - K) + 1 == T, \
        "adaptive conv must preserve the number of segments"

    eps = 1e-5

    # ---- fold eval-mode BN; lay weights out for channels-on-sublanes math ----
    w1t = params['g_w1'].T.astype(_F32)                                      # (T, A)
    s1 = (params['g_bn_gamma'] / jnp.sqrt(params['g_bn_var'] + eps)).astype(_F32)
    b1 = params['g_bn_beta'].astype(_F32) - params['g_bn_mean'].astype(_F32) * s1
    s1 = s1.reshape(1, A)
    b1 = b1.reshape(1, A)
    w2t = params['g_w2'].T.astype(_F32)                                      # (A, K)
    lw1 = jnp.transpose(params['l_w1'], (2, 0, 1)).astype(_F32)              # (k1, Cb, C)
    s2 = (params['l_bn_gamma'] / jnp.sqrt(params['l_bn_var'] + eps)).astype(_F32)
    b2 = params['l_bn_beta'].astype(_F32) - params['l_bn_mean'].astype(_F32) * s2
    s2 = s2.reshape(Cb, 1)
    b2 = b2.reshape(Cb, 1)
    lw2 = params['l_w2'][:, :, 0].astype(_F32)                               # (C, Cb)
    # L-branch temporal shift matrices: smat[dk, s, t] = [s == t + dk - p1]
    idx = jnp.arange(T)
    smat = jnp.stack([(idx[:, None] == (idx[None, :] + dk - p1)).astype(_F32)
                      for dk in range(k1)], axis=0)                          # (k1, T, T)
    weights = (w1t, s1, b1, w2t, lw1, s2, b2, lw2, smat)

    x_r = x.reshape(B, T, c, HW)               # free reshape: no transpose / pad

    itemsize = jnp.dtype(x.dtype).itemsize
    LANE = 128
    HWb = _round_up(HW, LANE)

    vmem_cap = _vmem_capacity_bytes()
    budget = min(vmem_cap - (8 << 20), 100 << 20)

    def _limit(need):
        return int(min(max(need, 32 << 20), budget))

    def _const_specs(grid_rank):
        specs = []
        for wgt in weights:
            nd = wgt.ndim
            if grid_rank == 1:
                imap = (lambda nd_: (lambda b: (0,) * nd_))(nd)
            else:
                imap = (lambda nd_: (lambda b, hw: (0,) * nd_))(nd)
            specs.append(pl.BlockSpec(wgt.shape, imap))
        return specs

    # ---- single-pass path: x read from HBM exactly once ---------------------
    slab_native = T * c * HWb * itemsize
    slab_f32 = T * c * HWb * 4
    single_need = 4 * slab_native + slab_f32 + (K + 2) * c * HWb * 4 + (8 << 20)
    if single_pass is None:
        single_pass = single_need <= budget

    if single_pass:
        y = pl.pallas_call(
            _single_pass_kernel_factory(T, HW, K, pad),
            out_shape=jax.ShapeDtypeStruct((B, T, c, HW), x.dtype),
            grid=(B,),
            in_specs=[pl.BlockSpec((1, T, c, HW), lambda b: (b, 0, 0, 0))]
                     + _const_specs(1),
            out_specs=pl.BlockSpec((1, T, c, HW), lambda b: (b, 0, 0, 0)),
            compiler_params=pltpu.CompilerParams(
                dimension_semantics=("parallel",),
                vmem_limit_bytes=_limit(single_need)),
        )(x_r, *weights)
        return y.reshape(n, c, h, w)

    # ---- two-pass path: stats (theta -> kw/l2) then modulated adaptive conv --
    defer = (T * c * 128 * 4) <= min(8 << 20, budget // 4)
    acc_shape = (T, c, 128) if defer else (T, c)

    def apply_need(lanes):
        return 4 * T * c * lanes * itemsize + (K + 2) * c * lanes * 4 + (6 << 20)

    def stats_need(lanes):
        return (2 * T * c * lanes * itemsize + T * c * (512 if defer else 4)
                + 4 * T * c * 128 * 4 + (6 << 20))

    tile = min(1024, HWb)                       # lane-dense, cdiv grid (no pad copy)
    while tile > 128 and max(apply_need(tile), stats_need(tile)) > budget:
        tile -= 128
    n_hw = -(-HW // tile)
    ragged = (HW % tile) != 0

    kw, l2 = pl.pallas_call(
        _stats_kernel_factory(T, c, HW, tile, ragged, defer),
        out_shape=(jax.ShapeDtypeStruct((B, c, K), _F32),
                   jax.ShapeDtypeStruct((B, c, T), _F32)),
        grid=(B, n_hw),
        in_specs=[pl.BlockSpec((1, T, c, tile), lambda b, hw: (b, 0, 0, hw))]
                 + _const_specs(2),
        out_specs=(pl.BlockSpec((1, c, K), lambda b, hw: (b, 0, 0)),
                   pl.BlockSpec((1, c, T), lambda b, hw: (b, 0, 0))),
        scratch_shapes=[pltpu.VMEM(acc_shape, _F32)],
        compiler_params=pltpu.CompilerParams(
            dimension_semantics=("parallel", "arbitrary"),
            vmem_limit_bytes=_limit(stats_need(tile))),
    )(x_r, *weights)

    y = pl.pallas_call(
        _apply_kernel_factory(T, K, pad),
        out_shape=jax.ShapeDtypeStruct((B, T, c, HW), x.dtype),
        grid=(B, n_hw),
        in_specs=[pl.BlockSpec((1, T, c, tile), lambda b, hw: (b, 0, 0, hw)),
                  pl.BlockSpec((1, c, K), lambda b, hw: (b, 0, 0)),
                  pl.BlockSpec((1, c, T), lambda b, hw: (b, 0, 0))],
        out_specs=pl.BlockSpec((1, T, c, tile), lambda b, hw: (b, 0, 0, hw)),
        compiler_params=pltpu.CompilerParams(
            dimension_semantics=("parallel", "parallel"),
            vmem_limit_bytes=_limit(apply_need(tile))),
    )(x_r, kw, l2)

    return y.reshape(n, c, h, w)


def tam_reference(x, params, num_segments, alpha=2, adaptive_kernel_size=3, beta=4,
                  conv1d_kernel_size=3, stride=1, pad=1):
    """Pure-JAX reference mirroring the PyTorch forward (eval-mode BN)."""
    with jax.default_matmul_precision("highest"):
        n, c, h, w = x.shape
        T = num_segments
        B = n // T
        K = adaptive_kernel_size
        k1 = conv1d_kernel_size
        p1 = k1 // 2
        eps = 1e-5
        xp = x.reshape(B, T, c, h, w).transpose(0, 2, 1, 3, 4)        # (B, C, T, H, W)
        theta = xp.mean(axis=(3, 4))                                  # (B, C, T)

        th2 = theta.reshape(B * c, T)
        g = th2 @ params['g_w1'].T
        g = (g - params['g_bn_mean']) / jnp.sqrt(params['g_bn_var'] + eps) \
            * params['g_bn_gamma'] + params['g_bn_beta']
        g = jnp.maximum(g, 0.0)
        kw = jax.nn.softmax(g @ params['g_w2'].T, axis=-1).reshape(B, c, K)

        thp = jnp.pad(theta, ((0, 0), (0, 0), (p1, p1)))
        Cb = params['l_w1'].shape[0]
        o1 = jnp.zeros((B, Cb, T), jnp.float32)
        for dk in range(k1):
            o1 = o1 + jnp.einsum('oc,bct->bot', params['l_w1'][:, :, dk],
                                 thp[:, :, dk:dk + T])
        o1 = (o1 - params['l_bn_mean'][None, :, None]) \
            / jnp.sqrt(params['l_bn_var'][None, :, None] + eps) \
            * params['l_bn_gamma'][None, :, None] + params['l_bn_beta'][None, :, None]
        o1 = jnp.maximum(o1, 0.0)
        loc = jax.nn.sigmoid(jnp.einsum('co,bot->bct', params['l_w2'][:, :, 0], o1))

        new_x = xp * loc[:, :, :, None, None]
        nxp = jnp.pad(new_x, ((0, 0), (0, 0), (pad, pad), (0, 0), (0, 0)))
        y = jnp.zeros_like(xp)
        for k in range(K):
            y = y + kw[:, :, k][:, :, None, None, None] * nxp[:, :, k:k + T]
        return y.transpose(0, 2, 1, 3, 4).reshape(n, c, h, w)


if __name__ == "__main__":
    B, T = 2, 8                 # num_batches, num_segments
    C = 16                      # in_channels
    alpha, beta = 2, 4
    K, kc1 = 3, 3               # adaptive_kernel_size, conv1d_kernel_size
    A = T * alpha
    Cb = C // beta
    n = B * T

    ks = jax.random.split(jax.random.PRNGKey(0), 12)
    params = {
        'g_w1': 0.1 * jax.random.normal(ks[0], (A, T), jnp.float32),
        'g_bn_gamma': 1.0 + 0.1 * jax.random.normal(ks[1], (A,), jnp.float32),
        'g_bn_beta': 0.1 * jax.random.normal(ks[2], (A,), jnp.float32),
        'g_bn_mean': 0.05 * jax.random.normal(ks[3], (A,), jnp.float32),
        'g_bn_var': 1.0 + 0.2 * jax.random.uniform(ks[4], (A,), jnp.float32),
        'g_w2': 0.1 * jax.random.normal(ks[5], (K, A), jnp.float32),
        'l_w1': 0.1 * jax.random.normal(ks[6], (Cb, C, kc1), jnp.float32),
        'l_bn_gamma': 1.0 + 0.1 * jax.random.normal(ks[7], (Cb,), jnp.float32),
        'l_bn_beta': 0.1 * jax.random.normal(ks[8], (Cb,), jnp.float32),
        'l_bn_mean': 0.05 * jax.random.normal(ks[9], (Cb,), jnp.float32),
        'l_bn_var': 1.0 + 0.2 * jax.random.uniform(ks[10], (Cb,), jnp.float32),
        'l_w2': 0.1 * jax.random.normal(ks[11], (C, Cb, 1), jnp.float32),
    }

    def check(hh, ww, seed):
        x = jax.random.normal(jax.random.PRNGKey(seed), (n, C, hh, ww), jnp.float32)
        y_ref = tam_reference(x, params, num_segments=T, alpha=alpha,
                              adaptive_kernel_size=K, beta=beta,
                              conv1d_kernel_size=kc1)
        for sp in (True, False):          # single-pass (resident) and two-pass (tiled)
            y = tam_forward(x, params, num_segments=T, alpha=alpha,
                            adaptive_kernel_size=K, beta=beta,
                            conv1d_kernel_size=kc1, single_pass=sp)
            y = jax.block_until_ready(y)
            assert y.shape == x.shape
            err = float(jnp.max(jnp.abs(y - y_ref)))
            assert jnp.allclose(y, y_ref, atol=2e-3, rtol=2e-3), (hh, ww, sp, err)

    check(16, 16, 1)   # lane-aligned spatial size (HW = 256)
    check(40, 40, 2)   # ragged spatial size (HW = 1600): masked last tile,
                       # multi-tile accumulation, partial output blocks
    print("KERNEL_OK")
</pallas_src>

<mosaic_0001>
module attributes {stable_mosaic.version = 11 : i64} {
  func.func @kernel(%arg0: i32, %arg1: memref<1x8x16x256xf32, #tpu.memory_space<vmem>>, %arg2: memref<8x16xf32, #tpu.memory_space<vmem>>, %arg3: memref<1x16xf32, #tpu.memory_space<vmem>>, %arg4: memref<1x16xf32, #tpu.memory_space<vmem>>, %arg5: memref<16x3xf32, #tpu.memory_space<vmem>>, %arg6: memref<3x4x16xf32, #tpu.memory_space<vmem>>, %arg7: memref<4x1xf32, #tpu.memory_space<vmem>>, %arg8: memref<4x1xf32, #tpu.memory_space<vmem>>, %arg9: memref<16x4xf32, #tpu.memory_space<vmem>>, %arg10: memref<3x8x8xf32, #tpu.memory_space<vmem>>, %arg11: memref<1x8x16x256xf32, #tpu.memory_space<vmem>>) attributes {dimension_semantics = [#tpu.dimension_semantics<parallel>], iteration_bounds = array<i64: 2>, scalar_prefetch = 0 : i64, scratch_operands = 0 : i64, tpu.core_type = #tpu.core_type<tc>, window_params = [{transform_indices = @transform_0, window_bounds = array<i64: 1, 8, 16, 256>}, {pipeline_mode = #tpu.pipeline_mode<synchronous>, transform_indices = @transform_1, window_bounds = array<i64: 8, 16>}, {pipeline_mode = #tpu.pipeline_mode<synchronous>, transform_indices = @transform_2, window_bounds = array<i64: 1, 16>}, {pipeline_mode = #tpu.pipeline_mode<synchronous>, transform_indices = @transform_3, window_bounds = array<i64: 1, 16>}, {pipeline_mode = #tpu.pipeline_mode<synchronous>, transform_indices = @transform_4, window_bounds = array<i64: 16, 3>}, {pipeline_mode = #tpu.pipeline_mode<synchronous>, transform_indices = @transform_5, window_bounds = array<i64: 3, 4, 16>}, {pipeline_mode = #tpu.pipeline_mode<synchronous>, transform_indices = @transform_6, window_bounds = array<i64: 4, 1>}, {pipeline_mode = #tpu.pipeline_mode<synchronous>, transform_indices = @transform_7, window_bounds = array<i64: 4, 1>}, {pipeline_mode = #tpu.pipeline_mode<synchronous>, transform_indices = @transform_8, window_bounds = array<i64: 16, 4>}, {pipeline_mode = #tpu.pipeline_mode<synchronous>, transform_indices = @transform_9, window_bounds = array<i64: 3, 8, 8>}, {transform_indices = @transform_10, window_bounds = array<i64: 1, 8, 16, 256>}]} {
    %c0 = arith.constant 0 : index
    %c0_0 = arith.constant 0 : index
    %c0_1 = arith.constant 0 : index
    %c0_2 = arith.constant 0 : index
    %0 = vector.load %arg1[%c0, %c0_0, %c0_1, %c0_2] : memref<1x8x16x256xf32, #tpu.memory_space<vmem>>, vector<1x8x16x256xf32>
    %1 = vector.shape_cast %0 : vector<1x8x16x256xf32> to vector<8x16x256xf32>
    %cst = arith.constant dense<0.000000e+00> : vector<8x16xf32>
    %2 = vector.multi_reduction <add>, %1, %cst [2] : vector<8x16x256xf32> to vector<8x16xf32>
    %cst_3 = arith.constant 3.906250e-03 : f32
    %3 = vector.broadcast %cst_3 : f32 to vector<8x16xf32>
    %4 = arith.mulf %2, %3 : vector<8x16xf32>
    %c0_4 = arith.constant 0 : index
    %c0_5 = arith.constant 0 : index
    %5 = vector.load %arg2[%c0_4, %c0_5] : memref<8x16xf32, #tpu.memory_space<vmem>>, vector<8x16xf32>
    %c0_6 = arith.constant 0 : index
    %c0_7 = arith.constant 0 : index
    %6 = vector.load %arg3[%c0_6, %c0_7] : memref<1x16xf32, #tpu.memory_space<vmem>>, vector<1x16xf32>
    %c0_8 = arith.constant 0 : index
    %c0_9 = arith.constant 0 : index
    %7 = vector.load %arg4[%c0_8, %c0_9] : memref<1x16xf32, #tpu.memory_space<vmem>>, vector<1x16xf32>
    %c0_10 = arith.constant 0 : index
    %c0_11 = arith.constant 0 : index
    %8 = vector.load %arg5[%c0_10, %c0_11] : memref<16x3xf32, #tpu.memory_space<vmem>>, vector<16x3xf32>
    %c0_12 = arith.constant 0 : index
    %c0_13 = arith.constant 0 : index
    %c0_14 = arith.constant 0 : index
    %9 = vector.load %arg6[%c0_12, %c0_13, %c0_14] : memref<3x4x16xf32, #tpu.memory_space<vmem>>, vector<3x4x16xf32>
    %c0_15 = arith.constant 0 : index
    %c0_16 = arith.constant 0 : index
    %10 = vector.load %arg7[%c0_15, %c0_16] : memref<4x1xf32, #tpu.memory_space<vmem>>, vector<4x1xf32>
    %c0_17 = arith.constant 0 : index
    %c0_18 = arith.constant 0 : index
    %11 = vector.load %arg8[%c0_17, %c0_18] : memref<4x1xf32, #tpu.memory_space<vmem>>, vector<4x1xf32>
    %c0_19 = arith.constant 0 : index
    %c0_20 = arith.constant 0 : index
    %12 = vector.load %arg9[%c0_19, %c0_20] : memref<16x4xf32, #tpu.memory_space<vmem>>, vector<16x4xf32>
    %c0_21 = arith.constant 0 : index
    %c0_22 = arith.constant 0 : index
    %c0_23 = arith.constant 0 : index
    %13 = vector.load %arg10[%c0_21, %c0_22, %c0_23] : memref<3x8x8xf32, #tpu.memory_space<vmem>>, vector<3x8x8xf32>
    %14 = tpu.transpose %4, [1, 0] : vector<8x16xf32> -> vector<16x8xf32>
    %cst_24 = arith.constant dense<0.000000e+00> : vector<16x16xf32>
    %15 = tpu.matmul %14, %5, %cst_24 {dimension_numbers = #tpu.dot_dimension_numbers<[1], [0], [0], [1], [0, 0, 1, 1], [], []>, precision = #tpu.contract_precision<fp32>} : vector<16x8xf32>, vector<8x16xf32>, vector<16x16xf32> -> vector<16x16xf32>
    %16 = vector.broadcast %6 : vector<1x16xf32> to vector<16x16xf32>
    %17 = arith.mulf %15, %16 : vector<16x16xf32>
    %18 = vector.broadcast %7 : vector<1x16xf32> to vector<16x16xf32>
    %19 = arith.addf %17, %18 : vector<16x16xf32>
    %cst_25 = arith.constant 0.000000e+00 : f32
    %20 = vector.broadcast %cst_25 : f32 to vector<16x16xf32>
    %21 = arith.maximumf %19, %20 : vector<16x16xf32>
    %cst_26 = arith.constant dense<0.000000e+00> : vector<16x3xf32>
    %22 = tpu.matmul %21, %8, %cst_26 {dimension_numbers = #tpu.dot_dimension_numbers<[1], [0], [0], [1], [0, 0, 1, 1], [], []>, precision = #tpu.contract_precision<fp32>} : vector<16x16xf32>, vector<16x3xf32>, vector<16x3xf32> -> vector<16x3xf32>
    %cst_27 = arith.constant dense<0xFF800000> : vector<16xf32>
    %23 = vector.multi_reduction <maximumf>, %22, %cst_27 [1] : vector<16x3xf32> to vector<16xf32>
    %24 = vector.shape_cast %23 : vector<16xf32> to vector<16x1xf32>
    %25 = vector.broadcast %24 : vector<16x1xf32> to vector<16x3xf32>
    %26 = arith.subf %22, %25 : vector<16x3xf32>
    %27 = math.exp %26 : vector<16x3xf32>
    %cst_28 = arith.constant dense<0.000000e+00> : vector<16xf32>
    %28 = vector.multi_reduction <add>, %27, %cst_28 [1] : vector<16x3xf32> to vector<16xf32>
    %29 = vector.shape_cast %28 : vector<16xf32> to vector<16x1xf32>
    %30 = vector.broadcast %29 : vector<16x1xf32> to vector<16x3xf32>
    %31 = arith.divf %27, %30 : vector<16x3xf32>
    %32 = vector.extract_strided_slice %13 {offsets = [0, 0, 0], sizes = [1, 8, 8], strides = [1, 1, 1]} : vector<3x8x8xf32> to vector<1x8x8xf32>
    %33 = vector.shape_cast %32 : vector<1x8x8xf32> to vector<8x8xf32>
    %cst_29 = arith.constant dense<0.000000e+00> : vector<16x8xf32>
    %34 = tpu.matmul %14, %33, %cst_29 {dimension_numbers = #tpu.dot_dimension_numbers<[1], [0], [0], [1], [0, 0, 1, 1], [], []>, precision = #tpu.contract_precision<fp32>} : vector<16x8xf32>, vector<8x8xf32>, vector<16x8xf32> -> vector<16x8xf32>
    %35 = vector.extract_strided_slice %9 {offsets = [0, 0, 0], sizes = [1, 4, 16], strides = [1, 1, 1]} : vector<3x4x16xf32> to vector<1x4x16xf32>
    %36 = vector.shape_cast %35 : vector<1x4x16xf32> to vector<4x16xf32>
    %cst_30 = arith.constant dense<0.000000e+00> : vector<4x8xf32>
    %37 = tpu.matmul %36, %34, %cst_30 {dimension_numbers = #tpu.dot_dimension_numbers<[1], [0], [0], [1], [0, 0, 1, 1], [], []>, precision = #tpu.contract_precision<fp32>} : vector<4x16xf32>, vector<16x8xf32>, vector<4x8xf32> -> vector<4x8xf32>
    %38 = vector.extract_strided_slice %13 {offsets = [1, 0, 0], sizes = [1, 8, 8], strides = [1, 1, 1]} : vector<3x8x8xf32> to vector<1x8x8xf32>
    %39 = vector.shape_cast %38 : vector<1x8x8xf32> to vector<8x8xf32>
    %cst_31 = arith.constant dense<0.000000e+00> : vector<16x8xf32>
    %40 = tpu.matmul %14, %39, %cst_31 {dimension_numbers = #tpu.dot_dimension_numbers<[1], [0], [0], [1], [0, 0, 1, 1], [], []>, precision = #tpu.contract_precision<fp32>} : vector<16x8xf32>, vector<8x8xf32>, vector<16x8xf32> -> vector<16x8xf32>
    %41 = vector.extract_strided_slice %9 {offsets = [1, 0, 0], sizes = [1, 4, 16], strides = [1, 1, 1]} : vector<3x4x16xf32> to vector<1x4x16xf32>
    %42 = vector.shape_cast %41 : vector<1x4x16xf32> to vector<4x16xf32>
    %cst_32 = arith.constant dense<0.000000e+00> : vector<4x8xf32>
    %43 = tpu.matmul %42, %40, %cst_32 {dimension_numbers = #tpu.dot_dimension_numbers<[1], [0], [0], [1], [0, 0, 1, 1], [], []>, precision = #tpu.contract_precision<fp32>} : vector<4x16xf32>, vector<16x8xf32>, vector<4x8xf32> -> vector<4x8xf32>
    %44 = arith.addf %37, %43 : vector<4x8xf32>
    %45 = vector.extract_strided_slice %13 {offsets = [2, 0, 0], sizes = [1, 8, 8], strides = [1, 1, 1]} : vector<3x8x8xf32> to vector<1x8x8xf32>
    %46 = vector.shape_cast %45 : vector<1x8x8xf32> to vector<8x8xf32>
    %cst_33 = arith.constant dense<0.000000e+00> : vector<16x8xf32>
    %47 = tpu.matmul %14, %46, %cst_33 {dimension_numbers = #tpu.dot_dimension_numbers<[1], [0], [0], [1], [0, 0, 1, 1], [], []>, precision = #tpu.contract_precision<fp32>} : vector<16x8xf32>, vector<8x8xf32>, vector<16x8xf32> -> vector<16x8xf32>
    %48 = vector.extract_strided_slice %9 {offsets = [2, 0, 0], sizes = [1, 4, 16], strides = [1, 1, 1]} : vector<3x4x16xf32> to vector<1x4x16xf32>
    %49 = vector.shape_cast %48 : vector<1x4x16xf32> to vector<4x16xf32>
    %cst_34 = arith.constant dense<0.000000e+00> : vector<4x8xf32>
    %50 = tpu.matmul %49, %47, %cst_34 {dimension_numbers = #tpu.dot_dimension_numbers<[1], [0], [0], [1], [0, 0, 1, 1], [], []>, precision = #tpu.contract_precision<fp32>} : vector<4x16xf32>, vector<16x8xf32>, vector<4x8xf32> -> vector<4x8xf32>
    %51 = arith.addf %44, %50 : vector<4x8xf32>
    %52 = vector.broadcast %10 : vector<4x1xf32> to vector<4x8xf32>
    %53 = arith.mulf %51, %52 : vector<4x8xf32>
    %54 = vector.broadcast %11 : vector<4x1xf32> to vector<4x8xf32>
    %55 = arith.addf %53, %54 : vector<4x8xf32>
    %cst_35 = arith.constant 0.000000e+00 : f32
    %56 = vector.broadcast %cst_35 : f32 to vector<4x8xf32>
    %57 = arith.maximumf %55, %56 : vector<4x8xf32>
    %cst_36 = arith.constant dense<0.000000e+00> : vector<16x8xf32>
    %58 = tpu.matmul %12, %57, %cst_36 {dimension_numbers = #tpu.dot_dimension_numbers<[1], [0], [0], [1], [0, 0, 1, 1], [], []>, precision = #tpu.contract_precision<fp32>} : vector<16x4xf32>, vector<4x8xf32>, vector<16x8xf32> -> vector<16x8xf32>
    %cst_37 = arith.constant 0.000000e+00 : f32
    %59 = vector.broadcast %cst_37 : f32 to vector<16x8xf32>
    %60 = arith.subf %59, %58 : vector<16x8xf32>
    %61 = math.exp %60 : vector<16x8xf32>
    %cst_38 = arith.constant 1.000000e+00 : f32
    %62 = vector.broadcast %cst_38 : f32 to vector<16x8xf32>
    %63 = arith.addf %62, %61 : vector<16x8xf32>
    %cst_39 = arith.constant 1.000000e+00 : f32
    %64 = vector.broadcast %cst_39 : f32 to vector<16x8xf32>
    %65 = arith.divf %64, %63 : vector<16x8xf32>
    %66 = vector.extract_strided_slice %31 {offsets = [0, 0], sizes = [16, 1], strides = [1, 1]} : vector<16x3xf32> to vector<16x1xf32>
    %67 = vector.extract_strided_slice %31 {offsets = [0, 1], sizes = [16, 1], strides = [1, 1]} : vector<16x3xf32> to vector<16x1xf32>
    %68 = vector.extract_strided_slice %31 {offsets = [0, 2], sizes = [16, 1], strides = [1, 1]} : vector<16x3xf32> to vector<16x1xf32>
    %69 = vector.extract_strided_slice %65 {offsets = [0, 0], sizes = [16, 1], strides = [1, 1]} : vector<16x8xf32> to vector<16x1xf32>
    %70 = vector.extract_strided_slice %65 {offsets = [0, 1], sizes = [16, 1], strides = [1, 1]} : vector<16x8xf32> to vector<16x1xf32>
    %71 = vector.extract_strided_slice %65 {offsets = [0, 2], sizes = [16, 1], strides = [1, 1]} : vector<16x8xf32> to vector<16x1xf32>
    %72 = vector.extract_strided_slice %65 {offsets = [0, 3], sizes = [16, 1], strides = [1, 1]} : vector<16x8xf32> to vector<16x1xf32>
    %73 = vector.extract_strided_slice %65 {offsets = [0, 4], sizes = [16, 1], strides = [1, 1]} : vector<16x8xf32> to vector<16x1xf32>
    %74 = vector.extract_strided_slice %65 {offsets = [0, 5], sizes = [16, 1], strides = [1, 1]} : vector<16x8xf32> to vector<16x1xf32>
    %75 = vector.extract_strided_slice %65 {offsets = [0, 6], sizes = [16, 1], strides = [1, 1]} : vector<16x8xf32> to vector<16x1xf32>
    %76 = vector.extract_strided_slice %65 {offsets = [0, 7], sizes = [16, 1], strides = [1, 1]} : vector<16x8xf32> to vector<16x1xf32>
    %77 = arith.mulf %67, %69 : vector<16x1xf32>
    %c0_40 = arith.constant 0 : index
    %c0_41 = arith.constant 0 : index
    %c0_42 = arith.constant 0 : index
    %c0_43 = arith.constant 0 : index
    %78 = vector.load %arg1[%c0_40, %c0_41, %c0_42, %c0_43] : memref<1x8x16x256xf32, #tpu.memory_space<vmem>>, vector<1x1x16x256xf32>
    %79 = vector.shape_cast %78 : vector<1x1x16x256xf32> to vector<16x256xf32>
    %80 = vector.broadcast %77 : vector<16x1xf32> to vector<16x256xf32>
    %81 = arith.mulf %80, %79 : vector<16x256xf32>
    %82 = arith.mulf %68, %70 : vector<16x1xf32>
    %c0_44 = arith.constant 0 : index
    %c1 = arith.constant 1 : index
    %c0_45 = arith.constant 0 : index
    %c0_46 = arith.constant 0 : index
    %83 = vector.load %arg1[%c0_44, %c1, %c0_45, %c0_46] : memref<1x8x16x256xf32, #tpu.memory_space<vmem>>, vector<1x1x16x256xf32>
    %84 = vector.shape_cast %83 : vector<1x1x16x256xf32> to vector<16x256xf32>
    %85 = vector.broadcast %82 : vector<16x1xf32> to vector<16x256xf32>
    %86 = arith.mulf %85, %84 : vector<16x256xf32>
    %87 = arith.addf %81, %86 : vector<16x256xf32>
    %c0_47 = arith.constant 0 : index
    %c0_48 = arith.constant 0 : index
    %c0_49 = arith.constant 0 : index
    %c0_50 = arith.constant 0 : index
    %88 = vector.load %arg11[%c0_47, %c0_48, %c0_49, %c0_50] : memref<1x8x16x256xf32, #tpu.memory_space<vmem>>, vector<1x1x16x256xf32>
    %89 = vector.shape_cast %88 : vector<1x1x16x256xf32> to vector<16x256xf32>
    %90 = vector.shape_cast %87 : vector<16x256xf32> to vector<1x1x16x256xf32>
    tpu.vector_store %arg11[%c0_47, %c0_48, %c0_49, %c0_50], %90 {strides = array<i32>} : memref<1x8x16x256xf32, #tpu.memory_space<vmem>>, vector<1x1x16x256xf32>,
    %91 = arith.mulf %66, %69 : vector<16x1xf32>
    %92 = vector.broadcast %91 : vector<16x1xf32> to vector<16x256xf32>
    %93 = arith.mulf %92, %79 : vector<16x256xf32>
    %94 = arith.mulf %67, %70 : vector<16x1xf32>
    %95 = vector.broadcast %94 : vector<16x1xf32> to vector<16x256xf32>
    %96 = arith.mulf %95, %84 : vector<16x256xf32>
    %97 = arith.addf %93, %96 : vector<16x256xf32>
    %98 = arith.mulf %68, %71 : vector<16x1xf32>
    %c0_51 = arith.constant 0 : index
    %c2 = arith.constant 2 : index
    %c0_52 = arith.constant 0 : index
    %c0_53 = arith.constant 0 : index
    %99 = vector.load %arg1[%c0_51, %c2, %c0_52, %c0_53] : memref<1x8x16x256xf32, #tpu.memory_space<vmem>>, vector<1x1x16x256xf32>
    %100 = vector.shape_cast %99 : vector<1x1x16x256xf32> to vector<16x256xf32>
    %101 = vector.broadcast %98 : vector<16x1xf32> to vector<16x256xf32>
    %102 = arith.mulf %101, %100 : vector<16x256xf32>
    %103 = arith.addf %97, %102 : vector<16x256xf32>
    %c0_54 = arith.constant 0 : index
    %c1_55 = arith.constant 1 : index
    %c0_56 = arith.constant 0 : index
    %c0_57 = arith.constant 0 : index
    %104 = vector.load %arg11[%c0_54, %c1_55, %c0_56, %c0_57] : memref<1x8x16x256xf32, #tpu.memory_space<vmem>>, vector<1x1x16x256xf32>
    %105 = vector.shape_cast %104 : vector<1x1x16x256xf32> to vector<16x256xf32>
    %106 = vector.shape_cast %103 : vector<16x256xf32> to vector<1x1x16x256xf32>
    tpu.vector_store %arg11[%c0_54, %c1_55, %c0_56, %c0_57], %106 {strides = array<i32>} : memref<1x8x16x256xf32, #tpu.memory_space<vmem>>, vector<1x1x16x256xf32>,
    %107 = arith.mulf %66, %70 : vector<16x1xf32>
    %108 = vector.broadcast %107 : vector<16x1xf32> to vector<16x256xf32>
    %109 = arith.mulf %108, %84 : vector<16x256xf32>
    %110 = arith.mulf %67, %71 : vector<16x1xf32>
    %111 = vector.broadcast %110 : vector<16x1xf32> to vector<16x256xf32>
    %112 = arith.mulf %111, %100 : vector<16x256xf32>
    %113 = arith.addf %109, %112 : vector<16x256xf32>
    %114 = arith.mulf %68, %72 : vector<16x1xf32>
    %c0_58 = arith.constant 0 : index
    %c3 = arith.constant 3 : index
    %c0_59 = arith.constant 0 : index
    %c0_60 = arith.constant 0 : index
    %115 = vector.load %arg1[%c0_58, %c3, %c0_59, %c0_60] : memref<1x8x16x256xf32, #tpu.memory_space<vmem>>, vector<1x1x16x256xf32>
    %116 = vector.shape_cast %115 : vector<1x1x16x256xf32> to vector<16x256xf32>
    %117 = vector.broadcast %114 : vector<16x1xf32> to vector<16x256xf32>
    %118 = arith.mulf %117, %116 : vector<16x256xf32>
    %119 = arith.addf %113, %118 : vector<16x256xf32>
    %c0_61 = arith.constant 0 : index
    %c2_62 = arith.constant 2 : index
    %c0_63 = arith.constant 0 : index
    %c0_64 = arith.constant 0 : index
    %120 = vector.load %arg11[%c0_61, %c2_62, %c0_63, %c0_64] : memref<1x8x16x256xf32, #tpu.memory_space<vmem>>, vector<1x1x16x256xf32>
    %121 = vector.shape_cast %120 : vector<1x1x16x256xf32> to vector<16x256xf32>
    %122 = vector.shape_cast %119 : vector<16x256xf32> to vector<1x1x16x256xf32>
    tpu.vector_store %arg11[%c0_61, %c2_62, %c0_63, %c0_64], %122 {strides = array<i32>} : memref<1x8x16x256xf32, #tpu.memory_space<vmem>>, vector<1x1x16x256xf32>,
    %123 = arith.mulf %66, %71 : vector<16x1xf32>
    %124 = vector.broadcast %123 : vector<16x1xf32> to vector<16x256xf32>
    %125 = arith.mulf %124, %100 : vector<16x256xf32>
    %126 = arith.mulf %67, %72 : vector<16x1xf32>
    %127 = vector.broadcast %126 : vector<16x1xf32> to vector<16x256xf32>
    %128 = arith.mulf %127, %116 : vector<16x256xf32>
    %129 = arith.addf %125, %128 : vector<16x256xf32>
    %130 = arith.mulf %68, %73 : vector<16x1xf32>
    %c0_65 = arith.constant 0 : index
    %c4 = arith.constant 4 : index
    %c0_66 = arith.constant 0 : index
    %c0_67 = arith.constant 0 : index
    %131 = vector.load %arg1[%c0_65, %c4, %c0_66, %c0_67] : memref<1x8x16x256xf32, #tpu.memory_space<vmem>>, vector<1x1x16x256xf32>
    %132 = vector.shape_cast %131 : vector<1x1x16x256xf32> to vector<16x256xf32>
    %133 = vector.broadcast %130 : vector<16x1xf32> to vector<16x256xf32>
    %134 = arith.mulf %133, %132 : vector<16x256xf32>
    %135 = arith.addf %129, %134 : vector<16x256xf32>
    %c0_68 = arith.constant 0 : index
    %c3_69 = arith.constant 3 : index
    %c0_70 = arith.constant 0 : index
    %c0_71 = arith.constant 0 : index
    %136 = vector.load %arg11[%c0_68, %c3_69, %c0_70, %c0_71] : memref<1x8x16x256xf32, #tpu.memory_space<vmem>>, vector<1x1x16x256xf32>
    %137 = vector.shape_cast %136 : vector<1x1x16x256xf32> to vector<16x256xf32>
    %138 = vector.shape_cast %135 : vector<16x256xf32> to vector<1x1x16x256xf32>
    tpu.vector_store %arg11[%c0_68, %c3_69, %c0_70, %c0_71], %138 {strides = array<i32>} : memref<1x8x16x256xf32, #tpu.memory_space<vmem>>, vector<1x1x16x256xf32>,
    %139 = arith.mulf %66, %72 : vector<16x1xf32>
    %140 = vector.broadcast %139 : vector<16x1xf32> to vector<16x256xf32>
    %141 = arith.mulf %140, %116 : vector<16x256xf32>
    %142 = arith.mulf %67, %73 : vector<16x1xf32>
    %143 = vector.broadcast %142 : vector<16x1xf32> to vector<16x256xf32>
    %144 = arith.mulf %143, %132 : vector<16x256xf32>
    %145 = arith.addf %141, %144 : vector<16x256xf32>
    %146 = arith.mulf %68, %74 : vector<16x1xf32>
    %c0_72 = arith.constant 0 : index
    %c5 = arith.constant 5 : index
    %c0_73 = arith.constant 0 : index
    %c0_74 = arith.constant 0 : index
    %147 = vector.load %arg1[%c0_72, %c5, %c0_73, %c0_74] : memref<1x8x16x256xf32, #tpu.memory_space<vmem>>, vector<1x1x16x256xf32>
    %148 = vector.shape_cast %147 : vector<1x1x16x256xf32> to vector<16x256xf32>
    %149 = vector.broadcast %146 : vector<16x1xf32> to vector<16x256xf32>
    %150 = arith.mulf %149, %148 : vector<16x256xf32>
    %151 = arith.addf %145, %150 : vector<16x256xf32>
    %c0_75 = arith.constant 0 : index
    %c4_76 = arith.constant 4 : index
    %c0_77 = arith.constant 0 : index
    %c0_78 = arith.constant 0 : index
    %152 = vector.load %arg11[%c0_75, %c4_76, %c0_77, %c0_78] : memref<1x8x16x256xf32, #tpu.memory_space<vmem>>, vector<1x1x16x256xf32>
    %153 = vector.shape_cast %152 : vector<1x1x16x256xf32> to vector<16x256xf32>
    %154 = vector.shape_cast %151 : vector<16x256xf32> to vector<1x1x16x256xf32>
    tpu.vector_store %arg11[%c0_75, %c4_76, %c0_77, %c0_78], %154 {strides = array<i32>} : memref<1x8x16x256xf32, #tpu.memory_space<vmem>>, vector<1x1x16x256xf32>,
    %155 = arith.mulf %66, %73 : vector<16x1xf32>
    %156 = vector.broadcast %155 : vector<16x1xf32> to vector<16x256xf32>
    %157 = arith.mulf %156, %132 : vector<16x256xf32>
    %158 = arith.mulf %67, %74 : vector<16x1xf32>
    %159 = vector.broadcast %158 : vector<16x1xf32> to vector<16x256xf32>
    %160 = arith.mulf %159, %148 : vector<16x256xf32>
    %161 = arith.addf %157, %160 : vector<16x256xf32>
    %162 = arith.mulf %68, %75 : vector<16x1xf32>
    %c0_79 = arith.constant 0 : index
    %c6 = arith.constant 6 : index
    %c0_80 = arith.constant 0 : index
    %c0_81 = arith.constant 0 : index
    %163 = vector.load %arg1[%c0_79, %c6, %c0_80, %c0_81] : memref<1x8x16x256xf32, #tpu.memory_space<vmem>>, vector<1x1x16x256xf32>
    %164 = vector.shape_cast %163 : vector<1x1x16x256xf32> to vector<16x256xf32>
    %165 = vector.broadcast %162 : vector<16x1xf32> to vector<16x256xf32>
    %166 = arith.mulf %165, %164 : vector<16x256xf32>
    %167 = arith.addf %161, %166 : vector<16x256xf32>
    %c0_82 = arith.constant 0 : index
    %c5_83 = arith.constant 5 : index
    %c0_84 = arith.constant 0 : index
    %c0_85 = arith.constant 0 : index
    %168 = vector.load %arg11[%c0_82, %c5_83, %c0_84, %c0_85] : memref<1x8x16x256xf32, #tpu.memory_space<vmem>>, vector<1x1x16x256xf32>
    %169 = vector.shape_cast %168 : vector<1x1x16x256xf32> to vector<16x256xf32>
    %170 = vector.shape_cast %167 : vector<16x256xf32> to vector<1x1x16x256xf32>
    tpu.vector_store %arg11[%c0_82, %c5_83, %c0_84, %c0_85], %170 {strides = array<i32>} : memref<1x8x16x256xf32, #tpu.memory_space<vmem>>, vector<1x1x16x256xf32>,
    %171 = arith.mulf %66, %74 : vector<16x1xf32>
    %172 = vector.broadcast %171 : vector<16x1xf32> to vector<16x256xf32>
    %173 = arith.mulf %172, %148 : vector<16x256xf32>
    %174 = arith.mulf %67, %75 : vector<16x1xf32>
    %175 = vector.broadcast %174 : vector<16x1xf32> to vector<16x256xf32>
    %176 = arith.mulf %175, %164 : vector<16x256xf32>
    %177 = arith.addf %173, %176 : vector<16x256xf32>
    %178 = arith.mulf %68, %76 : vector<16x1xf32>
    %c0_86 = arith.constant 0 : index
    %c7 = arith.constant 7 : index
    %c0_87 = arith.constant 0 : index
    %c0_88 = arith.constant 0 : index
    %179 = vector.load %arg1[%c0_86, %c7, %c0_87, %c0_88] : memref<1x8x16x256xf32, #tpu.memory_space<vmem>>, vector<1x1x16x256xf32>
    %180 = vector.shape_cast %179 : vector<1x1x16x256xf32> to vector<16x256xf32>
    %181 = vector.broadcast %178 : vector<16x1xf32> to vector<16x256xf32>
    %182 = arith.mulf %181, %180 : vector<16x256xf32>
    %183 = arith.addf %177, %182 : vector<16x256xf32>
    %c0_89 = arith.constant 0 : index
    %c6_90 = arith.constant 6 : index
    %c0_91 = arith.constant 0 : index
    %c0_92 = arith.constant 0 : index
    %184 = vector.load %arg11[%c0_89, %c6_90, %c0_91, %c0_92] : memref<1x8x16x256xf32, #tpu.memory_space<vmem>>, vector<1x1x16x256xf32>
    %185 = vector.shape_cast %184 : vector<1x1x16x256xf32> to vector<16x256xf32>
    %186 = vector.shape_cast %183 : vector<16x256xf32> to vector<1x1x16x256xf32>
    tpu.vector_store %arg11[%c0_89, %c6_90, %c0_91, %c0_92], %186 {strides = array<i32>} : memref<1x8x16x256xf32, #tpu.memory_space<vmem>>, vector<1x1x16x256xf32>,
    %187 = arith.mulf %66, %75 : vector<16x1xf32>
    %188 = vector.broadcast %187 : vector<16x1xf32> to vector<16x256xf32>
    %189 = arith.mulf %188, %164 : vector<16x256xf32>
    %190 = arith.mulf %67, %76 : vector<16x1xf32>
    %191 = vector.broadcast %190 : vector<16x1xf32> to vector<16x256xf32>
    %192 = arith.mulf %191, %180 : vector<16x256xf32>
    %193 = arith.addf %189, %192 : vector<16x256xf32>
    %c0_93 = arith.constant 0 : index
    %c7_94 = arith.constant 7 : index
    %c0_95 = arith.constant 0 : index
    %c0_96 = arith.constant 0 : index
    %194 = vector.load %arg11[%c0_93, %c7_94, %c0_95, %c0_96] : memref<1x8x16x256xf32, #tpu.memory_space<vmem>>, vector<1x1x16x256xf32>
    %195 = vector.shape_cast %194 : vector<1x1x16x256xf32> to vector<16x256xf32>
    %196 = vector.shape_cast %193 : vector<16x256xf32> to vector<1x1x16x256xf32>
    tpu.vector_store %arg11[%c0_93, %c7_94, %c0_95, %c0_96], %196 {strides = array<i32>} : memref<1x8x16x256xf32, #tpu.memory_space<vmem>>, vector<1x1x16x256xf32>,
    return
  }
  func.func @transform_0(%arg0: i32) -> (i32, i32, i32, i32) {
    %c0_i32 = arith.constant 0 : i32
    %c0_i32_0 = arith.constant 0 : i32
    %c0_i32_1 = arith.constant 0 : i32
    %c0_i32_2 = arith.constant 0 : i32
    return %arg0, %c0_i32, %c0_i32_0, %c0_i32_1 : i32, i32, i32, i32
  }
  func.func @transform_1(%arg0: i32) -> (i32, i32) {
    %c0_i32 = arith.constant 0 : i32
    %c0_i32_0 = arith.constant 0 : i32
    %c0_i32_1 = arith.constant 0 : i32
    return %c0_i32, %c0_i32_0 : i32, i32
  }
  func.func @transform_2(%arg0: i32) -> (i32, i32) {
    %c0_i32 = arith.constant 0 : i32
    %c0_i32_0 = arith.constant 0 : i32
    %c0_i32_1 = arith.constant 0 : i32
    return %c0_i32, %c0_i32_0 : i32, i32
  }
  func.func @transform_3(%arg0: i32) -> (i32, i32) {
    %c0_i32 = arith.constant 0 : i32
    %c0_i32_0 = arith.constant 0 : i32
    %c0_i32_1 = arith.constant 0 : i32
    return %c0_i32, %c0_i32_0 : i32, i32
  }
  func.func @transform_4(%arg0: i32) -> (i32, i32) {
    %c0_i32 = arith.constant 0 : i32
    %c0_i32_0 = arith.constant 0 : i32
    %c0_i32_1 = arith.constant 0 : i32
    return %c0_i32, %c0_i32_0 : i32, i32
  }
  func.func @transform_5(%arg0: i32) -> (i32, i32, i32) {
    %c0_i32 = arith.constant 0 : i32
    %c0_i32_0 = arith.constant 0 : i32
    %c0_i32_1 = arith.constant 0 : i32
    %c0_i32_2 = arith.constant 0 : i32
    return %c0_i32, %c0_i32_0, %c0_i32_1 : i32, i32, i32
  }
  func.func @transform_6(%arg0: i32) -> (i32, i32) {
    %c0_i32 = arith.constant 0 : i32
    %c0_i32_0 = arith.constant 0 : i32
    %c0_i32_1 = arith.constant 0 : i32
    return %c0_i32, %c0_i32_0 : i32, i32
  }
  func.func @transform_7(%arg0: i32) -> (i32, i32) {
    %c0_i32 = arith.constant 0 : i32
    %c0_i32_0 = arith.constant 0 : i32
    %c0_i32_1 = arith.constant 0 : i32
    return %c0_i32, %c0_i32_0 : i32, i32
  }
  func.func @transform_8(%arg0: i32) -> (i32, i32) {
    %c0_i32 = arith.constant 0 : i32
    %c0_i32_0 = arith.constant 0 : i32
    %c0_i32_1 = arith.constant 0 : i32
    return %c0_i32, %c0_i32_0 : i32, i32
  }
  func.func @transform_9(%arg0: i32) -> (i32, i32, i32) {
    %c0_i32 = arith.constant 0 : i32
    %c0_i32_0 = arith.constant 0 : i32
    %c0_i32_1 = arith.constant 0 : i32
    %c0_i32_2 = arith.constant 0 : i32
    return %c0_i32, %c0_i32_0, %c0_i32_1 : i32, i32, i32
  }
  func.func @transform_10(%arg0: i32) -> (i32, i32, i32, i32) {
    %c0_i32 = arith.constant 0 : i32
    %c0_i32_0 = arith.constant 0 : i32
    %c0_i32_1 = arith.constant 0 : i32
    %c0_i32_2 = arith.constant 0 : i32
    return %arg0, %c0_i32, %c0_i32_0, %c0_i32_1 : i32, i32, i32, i32
  }
}

</mosaic_0001>

<llo_original>
// kernel: tpu_custom_call.1
$region0: #{tpu_custom_call.1}
  #allocation0 [shape = 'u32[]', space=smem, size = 0x4, offset = 0x4, fixed_abs, tag = 'smem constant byte address 0x4 - core index']
  #allocation1 [shape = 'u32[144,128]{1,0:T(1,128)}', space=vmem, size = 0x12000, scoped, tag = 'internal scratch']
  %s0 = inlined_call_operand.hbm [shape: f32[2,8,16,256], index: 0, kind: input, shape index: {}]
  %s1 = inlined_call_operand.vmem [shape: f32[8,16], index: 1, kind: input, shape index: {}]
  %s2 = inlined_call_operand.vmem [shape: f32[1,16], index: 2, kind: input, shape index: {}]
  %s3 = inlined_call_operand.vmem [shape: f32[1,16], index: 3, kind: input, shape index: {}]
  %s4 = inlined_call_operand.vmem [shape: f32[16,3], index: 4, kind: input, shape index: {}]
  %s5 = inlined_call_operand.vmem [shape: f32[3,4,16], index: 5, kind: input, shape index: {}]
  %s6 = inlined_call_operand.vmem [shape: f32[4,1], index: 6, kind: input, shape index: {}]
  %s7 = inlined_call_operand.vmem [shape: f32[4,1], index: 7, kind: input, shape index: {}]
  %s8 = inlined_call_operand.vmem [shape: f32[16,4], index: 8, kind: input, shape index: {}]
  %s9 = inlined_call_operand.vmem [shape: f32[3,8,8], index: 9, kind: input, shape index: {}]
  %s10 = inlined_call_operand.hbm [shape: f32[2,8,16,256], index: 10, kind: output, shape index: {}]
  %s11 = sld [smem:[#allocation0]]
  $region77: #{tpu_custom_call.1} parent=0
    _
  %s13 = ssub.s32 1, %s11
  %s14 = scalar_select 0, %s13, %s11
  $region1: #{tpu_custom_call.1} parent=0
    #allocation2 [shape = 'u8[262144]{0}', space=vmem, size = 0x40000, scoped, tag = 'input window, operand 0']
    #allocation3 [shape = 's32[2]{0}', space=sflag, size = 0x8, scoped, tag = 'scoped memory for tpu_custom_call.1']
    #allocation4 [shape = 's32[2]{0}', space=sflag, size = 0x8, scoped, tag = 'scoped memory for tpu_custom_call.1']
    #allocation5 [shape = 'u8[262144]{0}', space=vmem, size = 0x40000, scoped, tag = 'output window, operand 0']
    %15 = vsyncpa [#allocation3], 0
    %s16 = scalar_lea.sflag [#allocation3], 1
    %17 = vsyncpa %s16, 0
    %18 = vsyncpa [#allocation4], 0
    %s19 = scalar_lea.sflag [#allocation4], 1
    %20 = vsyncpa %s19, 0
    loop: start=0, step=1, limit=4
    $region2: #{tpu_custom_call.1} parent=1 // loop_pre_header
      _
    $region3: #{tpu_custom_call.1} parent=1 // loop_header
      %s22 = sphi 0, %s26
      %p23 = scmp.ge.s32.totalorder %s22, 4
      %s32 = sphi 0, %s34
      %s35 = sphi 0, %s32
      %s36 = sphi 0, %s35
      %s52 = sphi 0, %s36
      %s56 = sphi 0, %s56
      %s58 = sphi 0, %s56
      %s59 = sphi 0, %s58
      %s73 = sphi 0, %s59
      %s77 = sphi 0, %s77
      %s79 = sphi 0, %s77
      %s80 = sphi 0, %s79
      %s94 = sphi 0, %s80
      %s98 = sphi 0, %s98
      %s100 = sphi 0, %s98
      %s101 = sphi 0, %s100
      %s115 = sphi 0, %s101
      %s119 = sphi 0, %s119
      %s121 = sphi 0, %s119
      %s122 = sphi 0, %s121
      %s136 = sphi 0, %s122
      %s140 = sphi 0, %s140
      %s142 = sphi 0, %s140
      %s143 = sphi 0, %s142
      %s157 = sphi 0, %s143
      %s161 = sphi 0, %s161
      %s163 = sphi 0, %s161
      %s164 = sphi 0, %s163
      %s178 = sphi 0, %s164
      %s182 = sphi 0, %s182
      %s184 = sphi 0, %s182
      %s185 = sphi 0, %s184
      %s199 = sphi 0, %s185
      %s203 = sphi 0, %s203
      %s205 = sphi 0, %s203
      %s206 = sphi 0, %s205
      %s220 = sphi 0, %s206
      %s224 = sphi 0, %s224
      %s226 = sphi 0, %s224
      %s227 = sphi 0, %s226
      %s241 = sphi 0, %s227
      %s247 = sphi 0, %s249
      %s250 = sphi 0, %s247
      %s251 = sphi 0, %s250
      %s267 = sphi 0, %s251
    $region4: #{tpu_custom_call.1} parent=1 // loop_header_branch
      %25 = sbr.rel (%p23) target = $region8
    $region5: #{tpu_custom_call.1} parent=1 // loop_body
      %s27 = ssub.s32 %s22, 1
      %s28 = ssub.s32 %s22, 2
      %s29 = sadd.s32 %s22, 1
      %s30 = ssub.s32 %s22, %s29
      %p31 = scmp.eq.s32.totalorder %s30, 0
      %s33 = sadd.s32 %s32, 1
      %s34 = scalar_select %p31, %s32, %s33
      %p37 = pneg %p31
      %p38 = scmp.eq.s32.totalorder %s22, 1
      %p39 = por %p37, %p38
      %p40 = scmp.ne.s32.totalorder %s32, %s35
      %p41 = scmp.eq.s32.totalorder %s22, 0
      %p42 = por %p40, %p41
      %p43 = scmp.ne.s32.totalorder %s32, %s35
      %p44 = scmp.eq.s32.totalorder %s27, 1
      %p45 = por %p43, %p44
      %p46 = scmp.ne.s32.totalorder %s35, %s36
      %p47 = scmp.eq.s32.totalorder %s27, 0
      %p48 = por %p46, %p47
      %p49 = scmp.ne.s32.totalorder %s35, %s36
      %p50 = scmp.eq.s32.totalorder %s28, 1
      %p51 = por %p49, %p50
      %p53 = scmp.ne.s32.totalorder %s36, %s52
      %p54 = scmp.eq.s32.totalorder %s28, 0
      %p55 = por %p53, %p54
      %s57 = sadd.s32 %s56, 1
      %p60 = scmp.eq.s32.totalorder %s22, 1
      %p61 = scmp.ne.s32.totalorder %s56, %s58
      %p62 = scmp.eq.s32.totalorder %s22, 0
      %p63 = por %p61, %p62
      %p64 = scmp.ne.s32.totalorder %s56, %s58
      %p65 = scmp.eq.s32.totalorder %s27, 1
      %p66 = por %p64, %p65
      %p67 = scmp.ne.s32.totalorder %s58, %s59
      %p68 = scmp.eq.s32.totalorder %s27, 0
      %p69 = por %p67, %p68
      %p70 = scmp.ne.s32.totalorder %s58, %s59
      %p71 = scmp.eq.s32.totalorder %s28, 1
      %p72 = por %p70, %p71
      %p74 = scmp.ne.s32.totalorder %s59, %s73
      %p75 = scmp.eq.s32.totalorder %s28, 0
      %p76 = por %p74, %p75
      %s78 = sadd.s32 %s77, 1
      %p81 = scmp.eq.s32.totalorder %s22, 1
      %p82 = scmp.ne.s32.totalorder %s77, %s79
      %p83 = scmp.eq.s32.totalorder %s22, 0
      %p84 = por %p82, %p83
      %p85 = scmp.ne.s32.totalorder %s77, %s79
      %p86 = scmp.eq.s32.totalorder %s27, 1
      %p87 = por %p85, %p86
      %p88 = scmp.ne.s32.totalorder %s79, %s80
      %p89 = scmp.eq.s32.totalorder %s27, 0
      %p90 = por %p88, %p89
      %p91 = scmp.ne.s32.totalorder %s79, %s80
      %p92 = scmp.eq.s32.totalorder %s28, 1
      %p93 = por %p91, %p92
      %p95 = scmp.ne.s32.totalorder %s80, %s94
      %p96 = scmp.eq.s32.totalorder %s28, 0
      %p97 = por %p95, %p96
      %s99 = sadd.s32 %s98, 1
      %p102 = scmp.eq.s32.totalorder %s22, 1
      %p103 = scmp.ne.s32.totalorder %s98, %s100
      %p104 = scmp.eq.s32.totalorder %s22, 0
      %p105 = por %p103, %p104
      %p106 = scmp.ne.s32.totalorder %s98, %s100
      %p107 = scmp.eq.s32.totalorder %s27, 1
      %p108 = por %p106, %p107
      %p109 = scmp.ne.s32.totalorder %s100, %s101
      %p110 = scmp.eq.s32.totalorder %s27, 0
      %p111 = por %p109, %p110
      %p112 = scmp.ne.s32.totalorder %s100, %s101
      %p113 = scmp.eq.s32.totalorder %s28, 1
      %p114 = por %p112, %p113
      %p116 = scmp.ne.s32.totalorder %s101, %s115
      %p117 = scmp.eq.s32.totalorder %s28, 0
      %p118 = por %p116, %p117
      %s120 = sadd.s32 %s119, 1
      %p123 = scmp.eq.s32.totalorder %s22, 1
      %p124 = scmp.ne.s32.totalorder %s119, %s121
      %p125 = scmp.eq.s32.totalorder %s22, 0
      %p126 = por %p124, %p125
      %p127 = scmp.ne.s32.totalorder %s119, %s121
      %p128 = scmp.eq.s32.totalorder %s27, 1
      %p129 = por %p127, %p128
      %p130 = scmp.ne.s32.totalorder %s121, %s122
      %p131 = scmp.eq.s32.totalorder %s27, 0
      %p132 = por %p130, %p131
      %p133 = scmp.ne.s32.totalorder %s121, %s122
      %p134 = scmp.eq.s32.totalorder %s28, 1
      %p135 = por %p133, %p134
      %p137 = scmp.ne.s32.totalorder %s122, %s136
      %p138 = scmp.eq.s32.totalorder %s28, 0
      %p139 = por %p137, %p138
      %s141 = sadd.s32 %s140, 1
      %p144 = scmp.eq.s32.totalorder %s22, 1
      %p145 = scmp.ne.s32.totalorder %s140, %s142
      %p146 = scmp.eq.s32.totalorder %s22, 0
      %p147 = por %p145, %p146
      %p148 = scmp.ne.s32.totalorder %s140, %s142
      %p149 = scmp.eq.s32.totalorder %s27, 1
      %p150 = por %p148, %p149
      %p151 = scmp.ne.s32.totalorder %s142, %s143
      %p152 = scmp.eq.s32.totalorder %s27, 0
      %p153 = por %p151, %p152
      %p154 = scmp.ne.s32.totalorder %s142, %s143
      %p155 = scmp.eq.s32.totalorder %s28, 1
      %p156 = por %p154, %p155
      %p158 = scmp.ne.s32.totalorder %s143, %s157
      %p159 = scmp.eq.s32.totalorder %s28, 0
      %p160 = por %p158, %p159
      %s162 = sadd.s32 %s161, 1
      %p165 = scmp.eq.s32.totalorder %s22, 1
      %p166 = scmp.ne.s32.totalorder %s161, %s163
      %p167 = scmp.eq.s32.totalorder %s22, 0
      %p168 = por %p166, %p167
      %p169 = scmp.ne.s32.totalorder %s161, %s163
      %p170 = scmp.eq.s32.totalorder %s27, 1
      %p171 = por %p169, %p170
      %p172 = scmp.ne.s32.totalorder %s163, %s164
      %p173 = scmp.eq.s32.totalorder %s27, 0
      %p174 = por %p172, %p173
      %p175 = scmp.ne.s32.totalorder %s163, %s164
      %p176 = scmp.eq.s32.totalorder %s28, 1
      %p177 = por %p175, %p176
      %p179 = scmp.ne.s32.totalorder %s164, %s178
      %p180 = scmp.eq.s32.totalorder %s28, 0
      %p181 = por %p179, %p180
      %s183 = sadd.s32 %s182, 1
      %p186 = scmp.eq.s32.totalorder %s22, 1
      %p187 = scmp.ne.s32.totalorder %s182, %s184
      %p188 = scmp.eq.s32.totalorder %s22, 0
      %p189 = por %p187, %p188
      %p190 = scmp.ne.s32.totalorder %s182, %s184
      %p191 = scmp.eq.s32.totalorder %s27, 1
      %p192 = por %p190, %p191
      %p193 = scmp.ne.s32.totalorder %s184, %s185
      %p194 = scmp.eq.s32.totalorder %s27, 0
      %p195 = por %p193, %p194
      %p196 = scmp.ne.s32.totalorder %s184, %s185
      %p197 = scmp.eq.s32.totalorder %s28, 1
      %p198 = por %p196, %p197
      %p200 = scmp.ne.s32.totalorder %s185, %s199
      %p201 = scmp.eq.s32.totalorder %s28, 0
      %p202 = por %p200, %p201
      %s204 = sadd.s32 %s203, 1
      %p207 = scmp.eq.s32.totalorder %s22, 1
      %p208 = scmp.ne.s32.totalorder %s203, %s205
      %p209 = scmp.eq.s32.totalorder %s22, 0
      %p210 = por %p208, %p209
      %p211 = scmp.ne.s32.totalorder %s203, %s205
      %p212 = scmp.eq.s32.totalorder %s27, 1
      %p213 = por %p211, %p212
      %p214 = scmp.ne.s32.totalorder %s205, %s206
      %p215 = scmp.eq.s32.totalorder %s27, 0
      %p216 = por %p214, %p215
      %p217 = scmp.ne.s32.totalorder %s205, %s206
      %p218 = scmp.eq.s32.totalorder %s28, 1
      %p219 = por %p217, %p218
      %p221 = scmp.ne.s32.totalorder %s206, %s220
      %p222 = scmp.eq.s32.totalorder %s28, 0
      %p223 = por %p221, %p222
      %s225 = sadd.s32 %s224, 1
      %p228 = scmp.eq.s32.totalorder %s22, 1
      %p229 = scmp.ne.s32.totalorder %s224, %s226
      %p230 = scmp.eq.s32.totalorder %s22, 0
      %p231 = por %p229, %p230
      %p232 = scmp.ne.s32.totalorder %s224, %s226
      %p233 = scmp.eq.s32.totalorder %s27, 1
      %p234 = por %p232, %p233
      %p235 = scmp.ne.s32.totalorder %s226, %s227
      %p236 = scmp.eq.s32.totalorder %s27, 0
      %p237 = por %p235, %p236
      %p238 = scmp.ne.s32.totalorder %s226, %s227
      %p239 = scmp.eq.s32.totalorder %s28, 1
      %p240 = por %p238, %p239
      %p242 = scmp.ne.s32.totalorder %s227, %s241
      %p243 = scmp.eq.s32.totalorder %s28, 0
      %p244 = por %p242, %p243
      %s245 = ssub.s32 %s22, %s29
      %p246 = scmp.eq.s32.totalorder %s245, 0
      %s248 = sadd.s32 %s247, 1
      %s249 = scalar_select %p246, %s247, %s248
      %p252 = pneg %p246
      %p253 = scmp.eq.s32.totalorder %s22, 1
      %p254 = por %p252, %p253
      %p255 = scmp.ne.s32.totalorder %s247, %s250
      %p256 = scmp.eq.s32.totalorder %s22, 0
      %p257 = por %p255, %p256
      %p258 = scmp.ne.s32.totalorder %s247, %s250
      %p259 = scmp.eq.s32.totalorder %s27, 1
      %p260 = por %p258, %p259
      %p261 = scmp.ne.s32.totalorder %s250, %s251
      %p262 = scmp.eq.s32.totalorder %s27, 0
      %p263 = por %p261, %p262
      %p264 = scmp.ne.s32.totalorder %s250, %s251
      %p265 = scmp.eq.s32.totalorder %s28, 1
      %p266 = por %p264, %p265
      %p268 = scmp.ne.s32.totalorder %s251, %s267
      %p269 = scmp.eq.s32.totalorder %s28, 0
      %p270 = por %p268, %p269
      %p271 = scmp.le.s32.totalorder 1, %s22
      %p272 = scmp.lt.s32.totalorder %s22, 3
      %p273 = pnand %p271, %p272
      %p274 = pneg %p273
      // Predicated region
      $region9: #{tpu_custom_call.1} parent=5 // pred_check
        _
      $region10: #{tpu_custom_call.1} parent=5 // pred_check_branch
        %276 = sbr.rel (%p273) target = $region12
      $region11: #{tpu_custom_call.1} parent=5 // pred_region
        %s277 = ssub.s32 %s22, 1
        // Predicated region
        $region13: #{tpu_custom_call.1} parent=11 // pred_check
          %p278 = pneg %p69
        $region14: #{tpu_custom_call.1} parent=11 // pred_check_branch
          %280 = sbr.rel (%p278) target = $region16
        $region15: #{tpu_custom_call.1} parent=11 // pred_region
          _
        $region16: #{tpu_custom_call.1} parent=11 // pred_fallthru
          _
        // Predicated region
        $region17: #{tpu_custom_call.1} parent=11 // pred_check
          %p281 = pneg %p90
        $region18: #{tpu_custom_call.1} parent=11 // pred_check_branch
          %283 = sbr.rel (%p281) target = $region20
        $region19: #{tpu_custom_call.1} parent=11 // pred_region
          _
        $region20: #{tpu_custom_call.1} parent=11 // pred_fallthru
          _
        // Predicated region
        $region21: #{tpu_custom_call.1} parent=11 // pred_check
          %p284 = pneg %p111
        $region22: #{tpu_custom_call.1} parent=11 // pred_check_branch
          %286 = sbr.rel (%p284) target = $region24
        $region23: #{tpu_custom_call.1} parent=11 // pred_region
          _
        $region24: #{tpu_custom_call.1} parent=11 // pred_fallthru
          _
        // Predicated region
        $region25: #{tpu_custom_call.1} parent=11 // pred_check
          %p287 = pneg %p132
        $region26: #{tpu_custom_call.1} parent=11 // pred_check_branch
          %289 = sbr.rel (%p287) target = $region28
        $region27: #{tpu_custom_call.1} parent=11 // pred_region
          _
        $region28: #{tpu_custom_call.1} parent=11 // pred_fallthru
          _
        // Predicated region
        $region29: #{tpu_custom_call.1} parent=11 // pred_check
          %p290 = pneg %p153
        $region30: #{tpu_custom_call.1} parent=11 // pred_check_branch
          %292 = sbr.rel (%p290) target = $region32
        $region31: #{tpu_custom_call.1} parent=11 // pred_region
          _
        $region32: #{tpu_custom_call.1} parent=11 // pred_fallthru
          _
        // Predicated region
        $region33: #{tpu_custom_call.1} parent=11 // pred_check
          %p293 = pneg %p174
        $region34: #{tpu_custom_call.1} parent=11 // pred_check_branch
          %295 = sbr.rel (%p293) target = $region36
        $region35: #{tpu_custom_call.1} parent=11 // pred_region
          _
        $region36: #{tpu_custom_call.1} parent=11 // pred_fallthru
          _
        // Predicated region
        $region37: #{tpu_custom_call.1} parent=11 // pred_check
          %p296 = pneg %p195
        $region38: #{tpu_custom_call.1} parent=11 // pred_check_branch
          %298 = sbr.rel (%p296) target = $region40
        $region39: #{tpu_custom_call.1} parent=11 // pred_region
          _
        $region40: #{tpu_custom_call.1} parent=11 // pred_fallthru
          _
        // Predicated region
        $region41: #{tpu_custom_call.1} parent=11 // pred_check
          %p299 = pneg %p216
        $region42: #{tpu_custom_call.1} parent=11 // pred_check_branch
          %301 = sbr.rel (%p299) target = $region44
        $region43: #{tpu_custom_call.1} parent=11 // pred_region
          _
        $region44: #{tpu_custom_call.1} parent=11 // pred_fallthru
          _
        // Predicated region
        $region45: #{tpu_custom_call.1} parent=11 // pred_check
          %p302 = pneg %p237
        $region46: #{tpu_custom_call.1} parent=11 // pred_check_branch
          %304 = sbr.rel (%p302) target = $region48
        $region47: #{tpu_custom_call.1} parent=11 // pred_region
          _
        $region48: #{tpu_custom_call.1} parent=11 // pred_fallthru
          _
      $region12: #{tpu_custom_call.1} parent=5 // pred_fallthru
        _
      %p305 = scmp.lt.s32.totalorder %s22, 2
      // Predicated region
      $region49: #{tpu_custom_call.1} parent=5 // pred_check
        %p306 = pneg %p305
      $region50: #{tpu_custom_call.1} parent=5 // pred_check_branch
        %308 = sbr.rel (%p306) target = $region52
      $region51: #{tpu_custom_call.1} parent=5 // pred_region
        // Predicated region
        $region53: #{tpu_custom_call.1} parent=51 // pred_check
          %p309 = pneg %p42
        $region54: #{tpu_custom_call.1} parent=51 // pred_check_branch
          %311 = sbr.rel (%p309) target = $region56
        $region55: #{tpu_custom_call.1} parent=51 // pred_region
          %s312 = sand.u32 %s32, 1
          %s313 = scalar_lea.sflag [#allocation3], %s312
          %s314 = sand.u32 %s32, 1
          %s315 = smul.addr %s314, 256
          %s316 = scalar_lea.vmem [#allocation2], %s315
          %s318 = ssub.s32 4096, 4096
          %319 = vsyncadd %s313, %s318
          %s320 = smul.addr %s22, 32
          %s321 = smul.addr %s320, 128
          %s322 = scalar_lea.hbm %s0, %s321
          %s323 = sshll.u32 %s316, 4
          %s324 = int_to_ptr.vmem [resolvable:$true] %s323
          %329 = dma.hbm_to_vmem [thread:$0]  %s322, 4096, %s324, %s313, 256, 256, 16
        $region56: #{tpu_custom_call.1} parent=51 // pred_fallthru
          _
      $region52: #{tpu_custom_call.1} parent=5 // pred_fallthru
        _
      %p330 = scmp.le.s32.totalorder 1, %s22
      %p331 = scmp.lt.s32.totalorder %s22, 3
      %p332 = pnand %p330, %p331
      %p333 = pneg %p332
      // Predicated region
      $region57: #{tpu_custom_call.1} parent=5 // pred_check
        _
      $region58: #{tpu_custom_call.1} parent=5 // pred_check_branch
        %335 = sbr.rel (%p332) target = $region60
      $region59: #{tpu_custom_call.1} parent=5 // pred_region
        %s336 = ssub.s32 %s22, 1
        %s337 = sand.u32 %s35, 1
        %s338 = scalar_lea.sflag [#allocation3], %s337
        %s339 = sand.u32 %s35, 1
        %s340 = smul.addr %s339, 256
        %s341 = scalar_lea.vmem [#allocation2], %s340
        // Predicated region
        $region61: #{tpu_custom_call.1} parent=59 // pred_check
          %p342 = pneg %p48
        $region62: #{tpu_custom_call.1} parent=59 // pred_check_branch
          %344 = sbr.rel (%p342) target = $region64
        $region63: #{tpu_custom_call.1} parent=59 // pred_region
          %345 = dma.done %s338, 4096
        $region64: #{tpu_custom_call.1} parent=59 // pred_fallthru
          _
        %s346 = sand.u32 %s35, 1
        %s347 = scalar_lea.sflag [#allocation3], %s346
        %s348 = sand.u32 %s35, 1
        %s349 = smul.addr %s348, 256
        %s350 = scalar_lea.vmem [#allocation2], %s349
        %p351 = pneg %p48
        %p352 = pneg %p45
        %p353 = pneg %p69
        %p354 = pneg %p66
        %p355 = pneg %p90
        %p356 = pneg %p87
        %p357 = pneg %p111
        %p358 = pneg %p108
        %p359 = pneg %p132
        %p360 = pneg %p129
        %p361 = pneg %p153
        %p362 = pneg %p150
        %p363 = pneg %p174
        %p364 = pneg %p171
        %p365 = pneg %p195
        %p366 = pneg %p192
        %p367 = pneg %p216
        %p368 = pneg %p213
        %p369 = pneg %p237
        %p370 = pneg %p234
        %p371 = pneg %p263
        %p372 = pneg %p260
        %s373 = sand.u32 %s250, 1
        %s374 = scalar_lea.sflag [#allocation4], %s373
        %s375 = sand.u32 %s250, 1
        %s376 = smul.addr %s375, 256
        %s377 = scalar_lea.vmem [#allocation5], %s376
        %v378 = vld [vmem:[%s341] sm:$0xff]
        %v379 = vld [vmem:[%s341 + $0x8] sm:$0xff]
        %v380 = vld [vmem:[%s341 + $0x10] sm:$0xff]
        %v381 = vld [vmem:[%s341 + $0x18] sm:$0xff]
        %v382 = vld [vmem:[%s341 + $0x20] sm:$0xff]
        %v383 = vld [vmem:[%s341 + $0x28] sm:$0xff]
        %v384 = vld [vmem:[%s341 + $0x30] sm:$0xff]
        %v385 = vld [vmem:[%s341 + $0x38] sm:$0xff]
        %v386 = vld [vmem:[%s341 + $0x40] sm:$0xff]
        %v387 = vld [vmem:[%s341 + $0x48] sm:$0xff]
        %v388 = vld [vmem:[%s341 + $0x50] sm:$0xff]
        %v389 = vld [vmem:[%s341 + $0x58] sm:$0xff]
        %v390 = vld [vmem:[%s341 + $0x60] sm:$0xff]
        %v391 = vld [vmem:[%s341 + $0x68] sm:$0xff]
        %v392 = vld [vmem:[%s341 + $0x70] sm:$0xff]
        %v393 = vld [vmem:[%s341 + $0x78] sm:$0xff]
        %v394 = vld [vmem:[%s341 + $0x80] sm:$0xff]
        %v395 = vld [vmem:[%s341 + $0x88] sm:$0xff]
        %v396 = vld [vmem:[%s341 + $0x90] sm:$0xff]
        %v397 = vld [vmem:[%s341 + $0x98] sm:$0xff]
        %v398 = vld [vmem:[%s341 + $0xa0] sm:$0xff]
        %v399 = vld [vmem:[%s341 + $0xa8] sm:$0xff]
        %v400 = vld [vmem:[%s341 + $0xb0] sm:$0xff]
        %v401 = vld [vmem:[%s341 + $0xb8] sm:$0xff]
        %v402 = vld [vmem:[%s341 + $0xc0] sm:$0xff]
        %v403 = vld [vmem:[%s341 + $0xc8] sm:$0xff]
        %v404 = vld [vmem:[%s341 + $0xd0] sm:$0xff]
        %v405 = vld [vmem:[%s341 + $0xd8] sm:$0xff]
        %v406 = vld [vmem:[%s341 + $0xe0] sm:$0xff]
        %v407 = vld [vmem:[%s341 + $0xe8] sm:$0xff]
        %v408 = vld [vmem:[%s341 + $0xf0] sm:$0xff]
        %v409 = vld [vmem:[%s341 + $0xf8] sm:$0xff]
        %v410 = vadd.f32 %v378, %v379
        %411 = vadd.xlane.f32.xlu0 %v410
        %v412 = vpop.xlane.xlu0 %411
        %v413 = vadd.f32 %v380, %v381
        %414 = vadd.xlane.f32.xlu0 %v413
        %v415 = vpop.xlane.xlu0 %414
        %v416 = vadd.f32 %v382, %v383
        %417 = vadd.xlane.f32.xlu0 %v416
        %v418 = vpop.xlane.xlu0 %417
        %v419 = vadd.f32 %v384, %v385
        %420 = vadd.xlane.f32.xlu0 %v419
        %v421 = vpop.xlane.xlu0 %420
        %v422 = vadd.f32 %v386, %v387
        %423 = vadd.xlane.f32.xlu0 %v422
        %v424 = vpop.xlane.xlu0 %423
        %v425 = vadd.f32 %v388, %v389
        %426 = vadd.xlane.f32.xlu0 %v425
        %v427 = vpop.xlane.xlu0 %426
        %v428 = vadd.f32 %v390, %v391
        %429 = vadd.xlane.f32.xlu0 %v428
        %v430 = vpop.xlane.xlu0 %429
        %v431 = vadd.f32 %v392, %v393
        %432 = vadd.xlane.f32.xlu0 %v431
        %v433 = vpop.xlane.xlu0 %432
        %v434 = vadd.f32 %v394, %v395
        %435 = vadd.xlane.f32.xlu0 %v434
        %v436 = vpop.xlane.xlu0 %435
        %v437 = vadd.f32 %v396, %v397
        %438 = vadd.xlane.f32.xlu0 %v437
        %v439 = vpop.xlane.xlu0 %438
        %v440 = vadd.f32 %v398, %v399
        %441 = vadd.xlane.f32.xlu0 %v440
        %v442 = vpop.xlane.xlu0 %441
        %v443 = vadd.f32 %v400, %v401
        %444 = vadd.xlane.f32.xlu0 %v443
        %v445 = vpop.xlane.xlu0 %444
        %v446 = vadd.f32 %v402, %v403
        %447 = vadd.xlane.f32.xlu0 %v446
        %v448 = vpop.xlane.xlu0 %447
        %v449 = vadd.f32 %v404, %v405
        %450 = vadd.xlane.f32.xlu0 %v449
        %v451 = vpop.xlane.xlu0 %450
        %v452 = vadd.f32 %v406, %v407
        %453 = vadd.xlane.f32.xlu0 %v452
        %v454 = vpop.xlane.xlu0 %453
        %v455 = vadd.f32 %v408, %v409
        %456 = vadd.xlane.f32.xlu0 %v455
        %v457 = vpop.xlane.xlu0 %456
        %v458 = vmul.f32 %v412, 0.00390625
        %v459 = vmul.f32 %v415, 0.00390625
        %v460 = vmul.f32 %v418, 0.00390625
        %v461 = vmul.f32 %v421, 0.00390625
        %v462 = vmul.f32 %v424, 0.00390625
        %v463 = vmul.f32 %v427, 0.00390625
        %v464 = vmul.f32 %v430, 0.00390625
        %v465 = vmul.f32 %v433, 0.00390625
        %v466 = vmul.f32 %v436, 0.00390625
        %v467 = vmul.f32 %v439, 0.00390625
        %v468 = vmul.f32 %v442, 0.00390625
        %v469 = vmul.f32 %v445, 0.00390625
        %v470 = vmul.f32 %v448, 0.00390625
        %v471 = vmul.f32 %v451, 0.00390625
        %v472 = vmul.f32 %v454, 0.00390625
        %v473 = vmul.f32 %v457, 0.00390625
        %v474 = vld [vmem:[%s1] sm:$0xff]
        %v475 = vld [vmem:[%s2] sm:$0x1]
        %v476 = vld [vmem:[%s3] sm:$0x1]
        %v477 = vld [vmem:[%s4] sm:$0xff]
        %v478 = vld [vmem:[%s4 + $0x8] sm:$0xff]
        %v479 = vld [vmem:[%s5] sm:$0xf]
        %v480 = vld [vmem:[%s5 + $0x4] sm:$0xf]
        %v481 = vld [vmem:[%s5 + $0x8] sm:$0xf]
        %v482 = vld [vmem:[%s6] sm:$0xf]
        %v483 = vld [vmem:[%s7] sm:$0xf]
        %v484 = vld [vmem:[%s8] sm:$0xff]
        %v485 = vld [vmem:[%s8 + $0x8] sm:$0xff]
        %v486 = vld [vmem:[%s9] sm:$0xff]
        %v487 = vld [vmem:[%s9 + $0x8] sm:$0xff]
        %v488 = vld [vmem:[%s9 + $0x10] sm:$0xff]
        %v505 = vlaneseq
        %v506 = vand.u32 %v505, 127
        %v507 = vlaneseq
        %v508 = vshrl.u32 %v507, 7
        %v509 = vsub.s32 %v506, %v508
        %v510 = vrot.slane %v458, %v509
        %v511 = vadd.s32 %v506, 4294967288
        %v512 = vlaneseq
        %v513 = vshrl.u32 %v512, 7
        %v514 = vsub.s32 %v511, %v513
        %v515 = vrot.slane %v459, %v514
        %vm516 = vcmask 130112
        %v517 = vsel %vm516, %v515, %v510
        %v518 = vlaneseq
        %v519 = vshrl.u32 %v518, 7
        %v520 = vsub.s32 %v506, %v519
        %v521 = vrot.slane %v460, %v520
        %v522 = vlaneseq
        %v523 = vshrl.u32 %v522, 7
        %v524 = vsub.s32 %v511, %v523
        %v525 = vrot.slane %v461, %v524
        %v526 = vsel %vm516, %v525, %v521
        %v527 = vlaneseq
        %v528 = vshrl.u32 %v527, 7
        %v529 = vsub.s32 %v506, %v528
        %v530 = vrot.slane %v462, %v529
        %v531 = vlaneseq
        %v532 = vshrl.u32 %v531, 7
        %v533 = vsub.s32 %v511, %v532
        %v534 = vrot.slane %v463, %v533
        %v535 = vsel %vm516, %v534, %v530
        %v536 = vlaneseq
        %v537 = vshrl.u32 %v536, 7
        %v538 = vsub.s32 %v506, %v537
        %v539 = vrot.slane %v464, %v538
        %v540 = vlaneseq
        %v541 = vshrl.u32 %v540, 7
        %v542 = vsub.s32 %v511, %v541
        %v543 = vrot.slane %v465, %v542
        %v544 = vsel %vm516, %v543, %v539
        %v545 = vlaneseq
        %v546 = vshrl.u32 %v545, 7
        %v547 = vsub.s32 %v506, %v546
        %v548 = vrot.slane %v466, %v547
        %v549 = vlaneseq
        %v550 = vshrl.u32 %v549, 7
        %v551 = vsub.s32 %v511, %v550
        %v552 = vrot.slane %v467, %v551
        %v553 = vsel %vm516, %v552, %v548
        %v554 = vlaneseq
        %v555 = vshrl.u32 %v554, 7
        %v556 = vsub.s32 %v506, %v555
        %v557 = vrot.slane %v468, %v556
        %v558 = vlaneseq
        %v559 = vshrl.u32 %v558, 7
        %v560 = vsub.s32 %v511, %v559
        %v561 = vrot.slane %v469, %v560
        %v562 = vsel %vm516, %v561, %v557
        %v563 = vlaneseq
        %v564 = vshrl.u32 %v563, 7
        %v565 = vsub.s32 %v506, %v564
        %v566 = vrot.slane %v470, %v565
        %v567 = vlaneseq
        %v568 = vshrl.u32 %v567, 7
        %v569 = vsub.s32 %v511, %v568
        %v570 = vrot.slane %v471, %v569
        %v571 = vsel %vm516, %v570, %v566
        %v572 = vlaneseq
        %v573 = vshrl.u32 %v572, 7
        %v574 = vsub.s32 %v506, %v573
        %v575 = vrot.slane %v472, %v574
        %v576 = vlaneseq
        %v577 = vshrl.u32 %v576, 7
        %v578 = vsub.s32 %v511, %v577
        %v579 = vrot.slane %v473, %v578
        %v580 = vsel %vm516, %v579, %v575
        %vm581 = vcmask 1041409
        %v582 = vsel %vm581, %v526, %v517
        %vm583 = vcmask 1042434
        %v584 = vsel %vm583, %v535, %v582
        %vm585 = vcmask 1043459
        %v586 = vsel %vm585, %v544, %v584
        %vm587 = vcmask 1044484
        %v588 = vsel %vm587, %v553, %v586
        %vm589 = vcmask 1045509
        %v590 = vsel %vm589, %v562, %v588
        %vm591 = vcmask 1046534
        %v592 = vsel %vm591, %v571, %v590
        %vm593 = vcmask 1047559
        %v594 = vsel %vm593, %v580, %v592
        %596 = vxpose.xlu0.b32.start [1/16] %v594, 128
        %597 = vxpose.xlu0.b32.cont [2/16] 0.0, 128
        %598 = vxpose.xlu0.b32.cont [3/16] 0.0, 128
        %599 = vxpose.xlu0.b32.cont [4/16] 0.0, 128
        %600 = vxpose.xlu0.b32.cont [5/16] 0.0, 128
        %601 = vxpose.xlu0.b32.cont [6/16] 0.0, 128
        %602 = vxpose.xlu0.b32.cont [7/16] 0.0, 128
        %603 = vxpose.xlu0.b32.cont [8/16] 0.0, 128
        %604 = vxpose.xlu0.b32.cont [9/16] 0.0, 128
        %605 = vxpose.xlu0.b32.cont [10/16] 0.0, 128
        %606 = vxpose.xlu0.b32.cont [11/16] 0.0, 128
        %607 = vxpose.xlu0.b32.cont [12/16] 0.0, 128
        %608 = vxpose.xlu0.b32.cont [13/16] 0.0, 128
        %609 = vxpose.xlu0.b32.cont [14/16] 0.0, 128
        %610 = vxpose.xlu0.b32.cont [15/16] 0.0, 128
        %611 = vxpose.xlu0.b32.end [16/16] 0.0, 128
        %v612 = vpop.trf.xlu0
        %v613 = vpop.trf.xlu0
        %v614 = vpop.trf.xlu0
        %v615 = vpop.trf.xlu0
        %v616 = vpop.trf.xlu0
        %v617 = vpop.trf.xlu0
        %v618 = vpop.trf.xlu0
        %v619 = vpop.trf.xlu0
        %v620 = vpop.trf.xlu0
        %v621 = vpop.trf.xlu0
        %v622 = vpop.trf.xlu0
        %v623 = vpop.trf.xlu0
        %v624 = vpop.trf.xlu0
        %v625 = vpop.trf.xlu0
        %v626 = vpop.trf.xlu0
        %v627 = vpop.trf.xlu0
        %vm628 = vcmask 64512
        %v630 = vsel %vm628, %v612, 0
        %v633 = vsel %vm628, %v613, 0
        %635 = vmatprep.subr.mxu0 0.0
        %v636 = vand.u32 %v474, 4294901760
        %637 = vmatpush1.msra.mxu0 %v636
        %638 = vmatprep.subr.mxu0 0.0
        %639 = vmatpush1.msra.mxu0 0.0
        %640 = vmatprep.subr.mxu0 0.0
        %641 = vmatpush1.msra.mxu0 0.0
        %642 = vmatprep.subr.mxu0 0.0
        %643 = vmatpush1.msra.mxu0 0.0
        %644 = vmatprep.subr.mxu0 0.0
        %645 = vmatpush1.msra.mxu0 0.0
        %646 = vmatprep.subr.mxu0 0.0
        %647 = vmatpush1.msra.mxu0 0.0
        %648 = vmatprep.subr.mxu0 0.0
        %649 = vmatpush1.msra.mxu0 0.0
        %650 = vmatprep.subr.mxu0 0.0
        %651 = vmatpush1.msra.mxu0 0.0
        %652 = vmatprep.subr.mxu0 0.0
        %653 = vmatpush1.msra.mxu0 0.0
        %654 = vmatprep.subr.mxu0 0.0
        %655 = vmatpush1.msra.mxu0 0.0
        %656 = vmatprep.subr.mxu0 0.0
        %657 = vmatpush1.msra.mxu0 0.0
        %658 = vmatprep.subr.mxu0 0.0
        %659 = vmatpush1.msra.mxu0 0.0
        %660 = vmatprep.subr.mxu0 0.0
        %661 = vmatpush1.msra.mxu0 0.0
        %662 = vmatprep.subr.mxu0 0.0
        %663 = vmatpush1.msra.mxu0 0.0
        %664 = vmatprep.subr.mxu0 0.0
        %665 = vmatpush1.msra.mxu0 0.0
        %666 = vmatprep.subr.mxu0 0.0
        %667 = vmatpush1.msra.mxu0 0.0
        %668 = vmatprep.subr.mxu0 0.0
        %669 = vmatpush1.msra.mxu0 0.0
        %670 = vmatprep.subr.mxu0 0.0
        %671 = vmatpush1.msra.mxu0 0.0
        %672 = vmatprep.subr.mxu0 0.0
        %673 = vmatpush1.msra.mxu0 0.0
        %674 = vmatprep.subr.mxu0 0.0
        %675 = vmatpush1.msra.mxu0 0.0
        %676 = vmatprep.subr.mxu0 0.0
        %677 = vmatpush1.msra.mxu0 0.0
        %678 = vmatprep.subr.mxu0 0.0
        %679 = vmatpush1.msra.mxu0 0.0
        %680 = vmatprep.subr.mxu0 0.0
        %681 = vmatpush1.msra.mxu0 0.0
        %682 = vmatprep.subr.mxu0 0.0
        %683 = vmatpush1.msra.mxu0 0.0
        %684 = vmatprep.subr.mxu0 0.0
        %685 = vmatpush1.msra.mxu0 0.0
        %686 = vmatprep.subr.mxu0 0.0
        %687 = vmatpush1.msra.mxu0 0.0
        %688 = vmatprep.subr.mxu0 0.0
        %689 = vmatpush1.msra.mxu0 0.0
        %690 = vmatprep.subr.mxu0 0.0
        %691 = vmatpush1.msra.mxu0 0.0
        %692 = vmatprep.subr.mxu0 0.0
        %693 = vmatpush1.msra.mxu0 0.0
        %694 = vmatprep.subr.mxu0 0.0
        %695 = vmatpush1.msra.mxu0 0.0
        %696 = vmatprep.subr.mxu0 0.0
        %697 = vmatpush1.msra.mxu0 0.0
        %698 = vmatprep.subr.mxu0 0.0
        %699 = vmatpush1.msra.mxu0 0.0
        %700 = vmatprep.mubr.f32.mxu0 0.0
        %v701 = vand.u32 %v630, 4294901760
        %v702 = vsub.f32 %v630, %v701
        %v703 = vand.u32 %v702, 4294901760
        %v704 = vsub.f32 %v702, %v703
        %v705 = vand.u32 %v704, 4294901760
        %706 = vmatmul.mubr.f32.gmra.mrb[0].mxu0 %v705
        %v707 = vpop.f32.mrb[0].mxu0
        %v708 = vadd.f32 0.0, %v707
        %v709 = vpop.f32.mrb[0].mxu0
        %710 = vmatprep.mubr.f32.mxu0 0.0
        %v711 = vand.u32 %v633, 4294901760
        %v712 = vsub.f32 %v633, %v711
        %v713 = vand.u32 %v712, 4294901760
        %v714 = vsub.f32 %v712, %v713
        %v715 = vand.u32 %v714, 4294901760
        %716 = vmatmul.mubr.f32.gmra.mrb[0].mxu0 %v715
        %v717 = vpop.f32.mrb[0].mxu0
        %v718 = vadd.f32 0.0, %v717
        %v719 = vpop.f32.mrb[0].mxu0
        %720 = vdwg.mxu0
        %721 = vmatprep.subr.mxu0 0.0
        %v722 = vand.u32 %v474, 4294901760
        %v723 = vsub.f32 %v474, %v722
        %v724 = vand.u32 %v723, 4294901760
        %v725 = vsub.f32 %v723, %v724
        %v726 = vand.u32 %v725, 4294901760
        %727 = vmatpush1.msra.mxu0 %v726
        %728 = vmatprep.subr.mxu0 0.0
        %729 = vmatpush1.msra.mxu0 0.0
        %730 = vmatprep.subr.mxu0 0.0
        %731 = vmatpush1.msra.mxu0 0.0
        %732 = vmatprep.subr.mxu0 0.0
        %733 = vmatpush1.msra.mxu0 0.0
        %734 = vmatprep.subr.mxu0 0.0
        %735 = vmatpush1.msra.mxu0 0.0
        %736 = vmatprep.subr.mxu0 0.0
        %737 = vmatpush1.msra.mxu0 0.0
        %738 = vmatprep.subr.mxu0 0.0
        %739 = vmatpush1.msra.mxu0 0.0
        %740 = vmatprep.subr.mxu0 0.0
        %741 = vmatpush1.msra.mxu0 0.0
        %742 = vmatprep.subr.mxu0 0.0
        %743 = vmatpush1.msra.mxu0 0.0
        %744 = vmatprep.subr.mxu0 0.0
        %745 = vmatpush1.msra.mxu0 0.0
        %746 = vmatprep.subr.mxu0 0.0
        %747 = vmatpush1.msra.mxu0 0.0
        %748 = vmatprep.subr.mxu0 0.0
        %749 = vmatpush1.msra.mxu0 0.0
        %750 = vmatprep.subr.mxu0 0.0
        %751 = vmatpush1.msra.mxu0 0.0
        %752 = vmatprep.subr.mxu0 0.0
        %753 = vmatpush1.msra.mxu0 0.0
        %754 = vmatprep.subr.mxu0 0.0
        %755 = vmatpush1.msra.mxu0 0.0
        %756 = vmatprep.subr.mxu0 0.0
        %757 = vmatpush1.msra.mxu0 0.0
        %758 = vmatprep.subr.mxu0 0.0
        %759 = vmatpush1.msra.mxu0 0.0
        %760 = vmatprep.subr.mxu0 0.0
        %761 = vmatpush1.msra.mxu0 0.0
        %762 = vmatprep.subr.mxu0 0.0
        %763 = vmatpush1.msra.mxu0 0.0
        %764 = vmatprep.subr.mxu0 0.0
        %765 = vmatpush1.msra.mxu0 0.0
        %766 = vmatprep.subr.mxu0 0.0
        %767 = vmatpush1.msra.mxu0 0.0
        %768 = vmatprep.subr.mxu0 0.0
        %769 = vmatpush1.msra.mxu0 0.0
        %770 = vmatprep.subr.mxu0 0.0
        %771 = vmatpush1.msra.mxu0 0.0
        %772 = vmatprep.subr.mxu0 0.0
        %773 = vmatpush1.msra.mxu0 0.0
        %774 = vmatprep.subr.mxu0 0.0
        %775 = vmatpush1.msra.mxu0 0.0
        %776 = vmatprep.subr.mxu0 0.0
        %777 = vmatpush1.msra.mxu0 0.0
        %778 = vmatprep.subr.mxu0 0.0
        %779 = vmatpush1.msra.mxu0 0.0
        %780 = vmatprep.subr.mxu0 0.0
        %781 = vmatpush1.msra.mxu0 0.0
        %782 = vmatprep.subr.mxu0 0.0
        %783 = vmatpush1.msra.mxu0 0.0
        %784 = vmatprep.subr.mxu0 0.0
        %785 = vmatpush1.msra.mxu0 0.0
        %786 = vmatprep.subr.mxu0 0.0
        %787 = vmatpush1.msra.mxu0 0.0
        %788 = vmatprep.subr.mxu0 0.0
        %789 = vmatpush1.msra.mxu0 0.0
        %790 = vmatprep.mubr.f32.mxu0 0.0
        %v791 = vand.u32 %v630, 4294901760
        %792 = vmatmul.mubr.f32.gmra.mrb[0].mxu0 %v791
        %v793 = vpop.f32.mrb[0].mxu0
        %v794 = vadd.f32 %v708, %v793
        %v795 = vpop.f32.mrb[0].mxu0
        %796 = vmatprep.mubr.f32.mxu0 0.0
        %v797 = vand.u32 %v633, 4294901760
        %798 = vmatmul.mubr.f32.gmra.mrb[0].mxu0 %v797
        %v799 = vpop.f32.mrb[0].mxu0
        %v800 = vadd.f32 %v718, %v799
        %v801 = vpop.f32.mrb[0].mxu0
        %802 = vdwg.mxu0
        %803 = vmatprep.subr.mxu0 0.0
        %v804 = vand.u32 %v474, 4294901760
        %v805 = vsub.f32 %v474, %v804
        %806 = vmatpush1.msra.mxu0 %v805
        %807 = vmatprep.subr.mxu0 0.0
        %808 = vmatpush1.msra.mxu0 0.0
        %809 = vmatprep.subr.mxu0 0.0
        %810 = vmatpush1.msra.mxu0 0.0
        %811 = vmatprep.subr.mxu0 0.0
        %812 = vmatpush1.msra.mxu0 0.0
        %813 = vmatprep.subr.mxu0 0.0
        %814 = vmatpush1.msra.mxu0 0.0
        %815 = vmatprep.subr.mxu0 0.0
        %816 = vmatpush1.msra.mxu0 0.0
        %817 = vmatprep.subr.mxu0 0.0
        %818 = vmatpush1.msra.mxu0 0.0
        %819 = vmatprep.subr.mxu0 0.0
        %820 = vmatpush1.msra.mxu0 0.0
        %821 = vmatprep.subr.mxu0 0.0
        %822 = vmatpush1.msra.mxu0 0.0
        %823 = vmatprep.subr.mxu0 0.0
        %824 = vmatpush1.msra.mxu0 0.0
        %825 = vmatprep.subr.mxu0 0.0
        %826 = vmatpush1.msra.mxu0 0.0
        %827 = vmatprep.subr.mxu0 0.0
        %828 = vmatpush1.msra.mxu0 0.0
        %829 = vmatprep.subr.mxu0 0.0
        %830 = vmatpush1.msra.mxu0 0.0
        %831 = vmatprep.subr.mxu0 0.0
        %832 = vmatpush1.msra.mxu0 0.0
        %833 = vmatprep.subr.mxu0 0.0
        %834 = vmatpush1.msra.mxu0 0.0
        %835 = vmatprep.subr.mxu0 0.0
        %836 = vmatpush1.msra.mxu0 0.0
        %837 = vmatprep.subr.mxu0 0.0
        %838 = vmatpush1.msra.mxu0 0.0
        %839 = vmatprep.subr.mxu0 0.0
        %840 = vmatpush1.msra.mxu0 0.0
        %841 = vmatprep.subr.mxu0 0.0
        %842 = vmatpush1.msra.mxu0 0.0
        %843 = vmatprep.subr.mxu0 0.0
        %844 = vmatpush1.msra.mxu0 0.0
        %845 = vmatprep.subr.mxu0 0.0
        %846 = vmatpush1.msra.mxu0 0.0
        %847 = vmatprep.subr.mxu0 0.0
        %848 = vmatpush1.msra.mxu0 0.0
        %849 = vmatprep.subr.mxu0 0.0
        %850 = vmatpush1.msra.mxu0 0.0
        %851 = vmatprep.subr.mxu0 0.0
        %852 = vmatpush1.msra.mxu0 0.0
        %853 = vmatprep.subr.mxu0 0.0
        %854 = vmatpush1.msra.mxu0 0.0
        %855 = vmatprep.subr.mxu0 0.0
        %856 = vmatpush1.msra.mxu0 0.0
        %857 = vmatprep.subr.mxu0 0.0
        %858 = vmatpush1.msra.mxu0 0.0
        %859 = vmatprep.subr.mxu0 0.0
        %860 = vmatpush1.msra.mxu0 0.0
        %861 = vmatprep.subr.mxu0 0.0
        %862 = vmatpush1.msra.mxu0 0.0
        %863 = vmatprep.subr.mxu0 0.0
        %864 = vmatpush1.msra.mxu0 0.0
        %865 = vmatprep.subr.mxu0 0.0
        %866 = vmatpush1.msra.mxu0 0.0
        %867 = vmatprep.subr.mxu0 0.0
        %868 = vmatpush1.msra.mxu0 0.0
        %869 = vmatprep.mubr.f32.mxu0 0.0
        %v870 = vand.u32 %v630, 4294901760
        %v871 = vsub.f32 %v630, %v870
        %872 = vmatmul.mubr.f32.gmra.mrb[0].mxu0 %v871
        %v873 = vpop.f32.mrb[0].mxu0
        %v874 = vadd.f32 %v794, %v873
        %v875 = vpop.f32.mrb[0].mxu0
        %876 = vmatprep.mubr.f32.mxu0 0.0
        %v877 = vand.u32 %v633, 4294901760
        %v878 = vsub.f32 %v633, %v877
        %879 = vmatmul.mubr.f32.gmra.mrb[0].mxu0 %v878
        %v880 = vpop.f32.mrb[0].mxu0
        %v881 = vadd.f32 %v800, %v880
        %v882 = vpop.f32.mrb[0].mxu0
        %883 = vdwg.mxu0
        %884 = vmatprep.subr.mxu0 0.0
        %v885 = vand.u32 %v474, 4294901760
        %886 = vmatpush1.msra.mxu0 %v885
        %887 = vmatprep.subr.mxu0 0.0
        %888 = vmatpush1.msra.mxu0 0.0
        %889 = vmatprep.subr.mxu0 0.0
        %890 = vmatpush1.msra.mxu0 0.0
        %891 = vmatprep.subr.mxu0 0.0
        %892 = vmatpush1.msra.mxu0 0.0
        %893 = vmatprep.subr.mxu0 0.0
        %894 = vmatpush1.msra.mxu0 0.0
        %895 = vmatprep.subr.mxu0 0.0
        %896 = vmatpush1.msra.mxu0 0.0
        %897 = vmatprep.subr.mxu0 0.0
        %898 = vmatpush1.msra.mxu0 0.0
        %899 = vmatprep.subr.mxu0 0.0
        %900 = vmatpush1.msra.mxu0 0.0
        %901 = vmatprep.subr.mxu0 0.0
        %902 = vmatpush1.msra.mxu0 0.0
        %903 = vmatprep.subr.mxu0 0.0
        %904 = vmatpush1.msra.mxu0 0.0
        %905 = vmatprep.subr.mxu0 0.0
        %906 = vmatpush1.msra.mxu0 0.0
        %907 = vmatprep.subr.mxu0 0.0
        %908 = vmatpush1.msra.mxu0 0.0
        %909 = vmatprep.subr.mxu0 0.0
        %910 = vmatpush1.msra.mxu0 0.0
        %911 = vmatprep.subr.mxu0 0.0
        %912 = vmatpush1.msra.mxu0 0.0
        %913 = vmatprep.subr.mxu0 0.0
        %914 = vmatpush1.msra.mxu0 0.0
        %915 = vmatprep.subr.mxu0 0.0
        %916 = vmatpush1.msra.mxu0 0.0
        %917 = vmatprep.subr.mxu0 0.0
        %918 = vmatpush1.msra.mxu0 0.0
        %919 = vmatprep.subr.mxu0 0.0
        %920 = vmatpush1.msra.mxu0 0.0
        %921 = vmatprep.subr.mxu0 0.0
        %922 = vmatpush1.msra.mxu0 0.0
        %923 = vmatprep.subr.mxu0 0.0
        %924 = vmatpush1.msra.mxu0 0.0
        %925 = vmatprep.subr.mxu0 0.0
        %926 = vmatpush1.msra.mxu0 0.0
        %927 = vmatprep.subr.mxu0 0.0
        %928 = vmatpush1.msra.mxu0 0.0
        %929 = vmatprep.subr.mxu0 0.0
        %930 = vmatpush1.msra.mxu0 0.0
        %931 = vmatprep.subr.mxu0 0.0
        %932 = vmatpush1.msra.mxu0 0.0
        %933 = vmatprep.subr.mxu0 0.0
        %934 = vmatpush1.msra.mxu0 0.0
        %935 = vmatprep.subr.mxu0 0.0
        %936 = vmatpush1.msra.mxu0 0.0
        %937 = vmatprep.subr.mxu0 0.0
        %938 = vmatpush1.msra.mxu0 0.0
        %939 = vmatprep.subr.mxu0 0.0
        %940 = vmatpush1.msra.mxu0 0.0
        %941 = vmatprep.subr.mxu0 0.0
        %942 = vmatpush1.msra.mxu0 0.0
        %943 = vmatprep.subr.mxu0 0.0
        %944 = vmatpush1.msra.mxu0 0.0
        %945 = vmatprep.subr.mxu0 0.0
        %946 = vmatpush1.msra.mxu0 0.0
        %947 = vmatprep.subr.mxu0 0.0
        %948 = vmatpush1.msra.mxu0 0.0
        %949 = vmatprep.mubr.f32.mxu0 0.0
        %v950 = vand.u32 %v630, 4294901760
        %v951 = vsub.f32 %v630, %v950
        %v952 = vand.u32 %v951, 4294901760
        %953 = vmatmul.mubr.f32.gmra.mrb[0].mxu0 %v952
        %v954 = vpop.f32.mrb[0].mxu0
        %v955 = vadd.f32 %v874, %v954
        %v956 = vpop.f32.mrb[0].mxu0
        %957 = vmatprep.mubr.f32.mxu0 0.0
        %v958 = vand.u32 %v633, 4294901760
        %v959 = vsub.f32 %v633, %v958
        %v960 = vand.u32 %v959, 4294901760
        %961 = vmatmul.mubr.f32.gmra.mrb[0].mxu0 %v960
        %v962 = vpop.f32.mrb[0].mxu0
        %v963 = vadd.f32 %v881, %v962
        %v964 = vpop.f32.mrb[0].mxu0
        %965 = vdwg.mxu0
        %966 = vmatprep.subr.mxu0 0.0
        %v967 = vand.u32 %v474, 4294901760
        %v968 = vsub.f32 %v474, %v967
        %v969 = vand.u32 %v968, 4294901760
        %970 = vmatpush1.msra.mxu0 %v969
        %971 = vmatprep.subr.mxu0 0.0
        %972 = vmatpush1.msra.mxu0 0.0
        %973 = vmatprep.subr.mxu0 0.0
        %974 = vmatpush1.msra.mxu0 0.0
        %975 = vmatprep.subr.mxu0 0.0
        %976 = vmatpush1.msra.mxu0 0.0
        %977 = vmatprep.subr.mxu0 0.0
        %978 = vmatpush1.msra.mxu0 0.0
        %979 = vmatprep.subr.mxu0 0.0
        %980 = vmatpush1.msra.mxu0 0.0
        %981 = vmatprep.subr.mxu0 0.0
        %982 = vmatpush1.msra.mxu0 0.0
        %983 = vmatprep.subr.mxu0 0.0
        %984 = vmatpush1.msra.mxu0 0.0
        %985 = vmatprep.subr.mxu0 0.0
        %986 = vmatpush1.msra.mxu0 0.0
        %987 = vmatprep.subr.mxu0 0.0
        %988 = vmatpush1.msra.mxu0 0.0
        %989 = vmatprep.subr.mxu0 0.0
        %990 = vmatpush1.msra.mxu0 0.0
        %991 = vmatprep.subr.mxu0 0.0
        %992 = vmatpush1.msra.mxu0 0.0
        %993 = vmatprep.subr.mxu0 0.0
        %994 = vmatpush1.msra.mxu0 0.0
        %995 = vmatprep.subr.mxu0 0.0
        %996 = vmatpush1.msra.mxu0 0.0
        %997 = vmatprep.subr.mxu0 0.0
        %998 = vmatpush1.msra.mxu0 0.0
        %999 = vmatprep.subr.mxu0 0.0
        %1000 = vmatpush1.msra.mxu0 0.0
        %1001 = vmatprep.subr.mxu0 0.0
        %1002 = vmatpush1.msra.mxu0 0.0
        %1003 = vmatprep.subr.mxu0 0.0
        %1004 = vmatpush1.msra.mxu0 0.0
        %1005 = vmatprep.subr.mxu0 0.0
        %1006 = vmatpush1.msra.mxu0 0.0
        %1007 = vmatprep.subr.mxu0 0.0
        %1008 = vmatpush1.msra.mxu0 0.0
        %1009 = vmatprep.subr.mxu0 0.0
        %1010 = vmatpush1.msra.mxu0 0.0
        %1011 = vmatprep.subr.mxu0 0.0
        %1012 = vmatpush1.msra.mxu0 0.0
        %1013 = vmatprep.subr.mxu0 0.0
        %1014 = vmatpush1.msra.mxu0 0.0
        %1015 = vmatprep.subr.mxu0 0.0
        %1016 = vmatpush1.msra.mxu0 0.0
        %1017 = vmatprep.subr.mxu0 0.0
        %1018 = vmatpush1.msra.mxu0 0.0
        %1019 = vmatprep.subr.mxu0 0.0
        %1020 = vmatpush1.msra.mxu0 0.0
        %1021 = vmatprep.subr.mxu0 0.0
        %1022 = vmatpush1.msra.mxu0 0.0
        %1023 = vmatprep.subr.mxu0 0.0
        %1024 = vmatpush1.msra.mxu0 0.0
        %1025 = vmatprep.subr.mxu0 0.0
        %1026 = vmatpush1.msra.mxu0 0.0
        %1027 = vmatprep.subr.mxu0 0.0
        %1028 = vmatpush1.msra.mxu0 0.0
        %1029 = vmatprep.subr.mxu0 0.0
        %1030 = vmatpush1.msra.mxu0 0.0
        %1031 = vmatprep.subr.mxu0 0.0
        %1032 = vmatpush1.msra.mxu0 0.0
        %1033 = vmatprep.mubr.f32.mxu0 0.0
        %v1034 = vand.u32 %v630, 4294901760
        %1035 = vmatmul.mubr.f32.gmra.mrb[0].mxu0 %v1034
        %v1036 = vpop.f32.mrb[0].mxu0
        %v1037 = vadd.f32 %v955, %v1036
        %v1038 = vpop.f32.mrb[0].mxu0
        %1039 = vmatprep.mubr.f32.mxu0 0.0
        %v1040 = vand.u32 %v633, 4294901760
        %1041 = vmatmul.mubr.f32.gmra.mrb[0].mxu0 %v1040
        %v1042 = vpop.f32.mrb[0].mxu0
        %v1043 = vadd.f32 %v963, %v1042
        %v1044 = vpop.f32.mrb[0].mxu0
        %1045 = vdwg.mxu0
        %1046 = vmatprep.subr.mxu0 0.0
        %v1047 = vand.u32 %v474, 4294901760
        %1048 = vmatpush1.msra.mxu0 %v1047
        %1049 = vmatprep.subr.mxu0 0.0
        %1050 = vmatpush1.msra.mxu0 0.0
        %1051 = vmatprep.subr.mxu0 0.0
        %1052 = vmatpush1.msra.mxu0 0.0
        %1053 = vmatprep.subr.mxu0 0.0
        %1054 = vmatpush1.msra.mxu0 0.0
        %1055 = vmatprep.subr.mxu0 0.0
        %1056 = vmatpush1.msra.mxu0 0.0
        %1057 = vmatprep.subr.mxu0 0.0
        %1058 = vmatpush1.msra.mxu0 0.0
        %1059 = vmatprep.subr.mxu0 0.0
        %1060 = vmatpush1.msra.mxu0 0.0
        %1061 = vmatprep.subr.mxu0 0.0
        %1062 = vmatpush1.msra.mxu0 0.0
        %1063 = vmatprep.subr.mxu0 0.0
        %1064 = vmatpush1.msra.mxu0 0.0
        %1065 = vmatprep.subr.mxu0 0.0
        %1066 = vmatpush1.msra.mxu0 0.0
        %1067 = vmatprep.subr.mxu0 0.0
        %1068 = vmatpush1.msra.mxu0 0.0
        %1069 = vmatprep.subr.mxu0 0.0
        %1070 = vmatpush1.msra.mxu0 0.0
        %1071 = vmatprep.subr.mxu0 0.0
        %1072 = vmatpush1.msra.mxu0 0.0
        %1073 = vmatprep.subr.mxu0 0.0
        %1074 = vmatpush1.msra.mxu0 0.0
        %1075 = vmatprep.subr.mxu0 0.0
        %1076 = vmatpush1.msra.mxu0 0.0
        %1077 = vmatprep.subr.mxu0 0.0
        %1078 = vmatpush1.msra.mxu0 0.0
        %1079 = vmatprep.subr.mxu0 0.0
        %1080 = vmatpush1.msra.mxu0 0.0
        %1081 = vmatprep.subr.mxu0 0.0
        %1082 = vmatpush1.msra.mxu0 0.0
        %1083 = vmatprep.subr.mxu0 0.0
        %1084 = vmatpush1.msra.mxu0 0.0
        %1085 = vmatprep.subr.mxu0 0.0
        %1086 = vmatpush1.msra.mxu0 0.0
        %1087 = vmatprep.subr.mxu0 0.0
        %1088 = vmatpush1.msra.mxu0 0.0
        %1089 = vmatprep.subr.mxu0 0.0
        %1090 = vmatpush1.msra.mxu0 0.0
        %1091 = vmatprep.subr.mxu0 0.0
        %1092 = vmatpush1.msra.mxu0 0.0
        %1093 = vmatprep.subr.mxu0 0.0
        %1094 = vmatpush1.msra.mxu0 0.0
        %1095 = vmatprep.subr.mxu0 0.0
        %1096 = vmatpush1.msra.mxu0 0.0
        %1097 = vmatprep.subr.mxu0 0.0
        %1098 = vmatpush1.msra.mxu0 0.0
        %1099 = vmatprep.subr.mxu0 0.0
        %1100 = vmatpush1.msra.mxu0 0.0
        %1101 = vmatprep.subr.mxu0 0.0
        %1102 = vmatpush1.msra.mxu0 0.0
        %1103 = vmatprep.subr.mxu0 0.0
        %1104 = vmatpush1.msra.mxu0 0.0
        %1105 = vmatprep.subr.mxu0 0.0
        %1106 = vmatpush1.msra.mxu0 0.0
        %1107 = vmatprep.subr.mxu0 0.0
        %1108 = vmatpush1.msra.mxu0 0.0
        %1109 = vmatprep.subr.mxu0 0.0
        %1110 = vmatpush1.msra.mxu0 0.0
        %1111 = vmatprep.mubr.f32.mxu0 0.0
        %v1112 = vand.u32 %v630, 4294901760
        %1113 = vmatmul.mubr.f32.gmra.mrb[0].mxu0 %v1112
        %v1114 = vpop.f32.mrb[0].mxu0
        %v1115 = vadd.f32 %v1037, %v1114
        %v1116 = vpop.f32.mrb[0].mxu0
        %1117 = vmatprep.mubr.f32.mxu0 0.0
        %v1118 = vand.u32 %v633, 4294901760
        %1119 = vmatmul.mubr.f32.gmra.mrb[0].mxu0 %v1118
        %v1120 = vpop.f32.mrb[0].mxu0
        %v1121 = vadd.f32 %v1043, %v1120
        %v1122 = vpop.f32.mrb[0].mxu0
        %1123 = vdwg.mxu0
        %v1125 = vlaneseq
        %v1126 = vshrl.u32 %v1125, 7
        %v1127 = vsub.s32 0, %v1126
        %v1128 = vrot.slane %v475, %v1127
        %v1130 = vmul.f32 %v1115, %v1128
        %v1131 = vmul.f32 %v1121, %v1128
        %v1133 = vlaneseq
        %v1134 = vshrl.u32 %v1133, 7
        %v1135 = vsub.s32 0, %v1134
        %v1136 = vrot.slane %v476, %v1135
        %v1138 = vadd.f32 %v1130, %v1136
        %v1139 = vadd.f32 %v1131, %v1136
        %v1140 = vmax.f32 %v1138, 0.0
        %v1141 = vmax.f32 %v1139, 0.0
        %vm1142 = vcmask 130048
        %v1144 = vsel %vm1142, %v1140, 0
        %v1147 = vsel %vm1142, %v1141, 0
        %1149 = vmatprep.subr.mxu0 0.0
        %v1150 = vand.u32 %v477, 4294901760
        %1151 = vmatpush1.msra.mxu0 %v1150
        %1152 = vmatprep.subr.mxu0 0.0
        %v1153 = vand.u32 %v478, 4294901760
        %1154 = vmatpush1.msra.mxu0 %v1153
        %1155 = vmatprep.subr.mxu0 0.0
        %1156 = vmatpush1.msra.mxu0 0.0
        %1157 = vmatprep.subr.mxu0 0.0
        %1158 = vmatpush1.msra.mxu0 0.0
        %1159 = vmatprep.subr.mxu0 0.0
        %1160 = vmatpush1.msra.mxu0 0.0
        %1161 = vmatprep.subr.mxu0 0.0
        %1162 = vmatpush1.msra.mxu0 0.0
        %1163 = vmatprep.subr.mxu0 0.0
        %1164 = vmatpush1.msra.mxu0 0.0
        %1165 = vmatprep.subr.mxu0 0.0
        %1166 = vmatpush1.msra.mxu0 0.0
        %1167 = vmatprep.subr.mxu0 0.0
        %1168 = vmatpush1.msra.mxu0 0.0
        %1169 = vmatprep.subr.mxu0 0.0
        %1170 = vmatpush1.msra.mxu0 0.0
        %1171 = vmatprep.subr.mxu0 0.0
        %1172 = vmatpush1.msra.mxu0 0.0
        %1173 = vmatprep.subr.mxu0 0.0
        %1174 = vmatpush1.msra.mxu0 0.0
        %1175 = vmatprep.subr.mxu0 0.0
        %1176 = vmatpush1.msra.mxu0 0.0
        %1177 = vmatprep.subr.mxu0 0.0
        %1178 = vmatpush1.msra.mxu0 0.0
        %1179 = vmatprep.subr.mxu0 0.0
        %1180 = vmatpush1.msra.mxu0 0.0
        %1181 = vmatprep.subr.mxu0 0.0
        %1182 = vmatpush1.msra.mxu0 0.0
        %1183 = vmatprep.subr.mxu0 0.0
        %1184 = vmatpush1.msra.mxu0 0.0
        %1185 = vmatprep.subr.mxu0 0.0
        %1186 = vmatpush1.msra.mxu0 0.0
        %1187 = vmatprep.subr.mxu0 0.0
        %1188 = vmatpush1.msra.mxu0 0.0
        %1189 = vmatprep.subr.mxu0 0.0
        %1190 = vmatpush1.msra.mxu0 0.0
        %1191 = vmatprep.subr.mxu0 0.0
        %1192 = vmatpush1.msra.mxu0 0.0
        %1193 = vmatprep.subr.mxu0 0.0
        %1194 = vmatpush1.msra.mxu0 0.0
        %1195 = vmatprep.subr.mxu0 0.0
        %1196 = vmatpush1.msra.mxu0 0.0
        %1197 = vmatprep.subr.mxu0 0.0
        %1198 = vmatpush1.msra.mxu0 0.0
        %1199 = vmatprep.subr.mxu0 0.0
        %1200 = vmatpush1.msra.mxu0 0.0
        %1201 = vmatprep.subr.mxu0 0.0
        %1202 = vmatpush1.msra.mxu0 0.0
        %1203 = vmatprep.subr.mxu0 0.0
        %1204 = vmatpush1.msra.mxu0 0.0
        %1205 = vmatprep.subr.mxu0 0.0
        %1206 = vmatpush1.msra.mxu0 0.0
        %1207 = vmatprep.subr.mxu0 0.0
        %1208 = vmatpush1.msra.mxu0 0.0
        %1209 = vmatprep.subr.mxu0 0.0
        %1210 = vmatpush1.msra.mxu0 0.0
        %1211 = vmatprep.subr.mxu0 0.0
        %1212 = vmatpush1.msra.mxu0 0.0
        %1213 = vmatprep.subr.mxu0 0.0
        %1214 = vmatpush1.msra.mxu0 0.0
        %1215 = vmatprep.mubr.f32.mxu0 0.0
        %v1216 = vand.u32 %v1144, 4294901760
        %v1217 = vsub.f32 %v1144, %v1216
        %v1218 = vand.u32 %v1217, 4294901760
        %v1219 = vsub.f32 %v1217, %v1218
        %v1220 = vand.u32 %v1219, 4294901760
        %1221 = vmatmul.mubr.f32.gmra.mrb[0].mxu0 %v1220
        %v1222 = vpop.f32.mrb[0].mxu0
        %v1223 = vadd.f32 0.0, %v1222
        %v1224 = vpop.f32.mrb[0].mxu0
        %1225 = vmatprep.mubr.f32.mxu0 0.0
        %v1226 = vand.u32 %v1147, 4294901760
        %v1227 = vsub.f32 %v1147, %v1226
        %v1228 = vand.u32 %v1227, 4294901760
        %v1229 = vsub.f32 %v1227, %v1228
        %v1230 = vand.u32 %v1229, 4294901760
        %1231 = vmatmul.mubr.f32.gmra.mrb[0].mxu0 %v1230
        %v1232 = vpop.f32.mrb[0].mxu0
        %v1233 = vadd.f32 0.0, %v1232
        %v1234 = vpop.f32.mrb[0].mxu0
        %1235 = vdwg.mxu0
        %1236 = vmatprep.subr.mxu0 0.0
        %v1237 = vand.u32 %v477, 4294901760
        %v1238 = vsub.f32 %v477, %v1237
        %v1239 = vand.u32 %v1238, 4294901760
        %v1240 = vsub.f32 %v1238, %v1239
        %v1241 = vand.u32 %v1240, 4294901760
        %1242 = vmatpush1.msra.mxu0 %v1241
        %1243 = vmatprep.subr.mxu0 0.0
        %v1244 = vand.u32 %v478, 4294901760
        %v1245 = vsub.f32 %v478, %v1244
        %v1246 = vand.u32 %v1245, 4294901760
        %v1247 = vsub.f32 %v1245, %v1246
        %v1248 = vand.u32 %v1247, 4294901760
        %1249 = vmatpush1.msra.mxu0 %v1248
        %1250 = vmatprep.subr.mxu0 0.0
        %1251 = vmatpush1.msra.mxu0 0.0
        %1252 = vmatprep.subr.mxu0 0.0
        %1253 = vmatpush1.msra.mxu0 0.0
        %1254 = vmatprep.subr.mxu0 0.0
        %1255 = vmatpush1.msra.mxu0 0.0
        %1256 = vmatprep.subr.mxu0 0.0
        %1257 = vmatpush1.msra.mxu0 0.0
        %1258 = vmatprep.subr.mxu0 0.0
        %1259 = vmatpush1.msra.mxu0 0.0
        %1260 = vmatprep.subr.mxu0 0.0
        %1261 = vmatpush1.msra.mxu0 0.0
        %1262 = vmatprep.subr.mxu0 0.0
        %1263 = vmatpush1.msra.mxu0 0.0
        %1264 = vmatprep.subr.mxu0 0.0
        %1265 = vmatpush1.msra.mxu0 0.0
        %1266 = vmatprep.subr.mxu0 0.0
        %1267 = vmatpush1.msra.mxu0 0.0
        %1268 = vmatprep.subr.mxu0 0.0
        %1269 = vmatpush1.msra.mxu0 0.0
        %1270 = vmatprep.subr.mxu0 0.0
        %1271 = vmatpush1.msra.mxu0 0.0
        %1272 = vmatprep.subr.mxu0 0.0
        %1273 = vmatpush1.msra.mxu0 0.0
        %1274 = vmatprep.subr.mxu0 0.0
        %1275 = vmatpush1.msra.mxu0 0.0
        %1276 = vmatprep.subr.mxu0 0.0
        %1277 = vmatpush1.msra.mxu0 0.0
        %1278 = vmatprep.subr.mxu0 0.0
        %1279 = vmatpush1.msra.mxu0 0.0
        %1280 = vmatprep.subr.mxu0 0.0
        %1281 = vmatpush1.msra.mxu0 0.0
        %1282 = vmatprep.subr.mxu0 0.0
        %1283 = vmatpush1.msra.mxu0 0.0
        %1284 = vmatprep.subr.mxu0 0.0
        %1285 = vmatpush1.msra.mxu0 0.0
        %1286 = vmatprep.subr.mxu0 0.0
        %1287 = vmatpush1.msra.mxu0 0.0
        %1288 = vmatprep.subr.mxu0 0.0
        %1289 = vmatpush1.msra.mxu0 0.0
        %1290 = vmatprep.subr.mxu0 0.0
        %1291 = vmatpush1.msra.mxu0 0.0
        %1292 = vmatprep.subr.mxu0 0.0
        %1293 = vmatpush1.msra.mxu0 0.0
        %1294 = vmatprep.subr.mxu0 0.0
        %1295 = vmatpush1.msra.mxu0 0.0
        %1296 = vmatprep.subr.mxu0 0.0
        %1297 = vmatpush1.msra.mxu0 0.0
        %1298 = vmatprep.subr.mxu0 0.0
        %1299 = vmatpush1.msra.mxu0 0.0
        %1300 = vmatprep.subr.mxu0 0.0
        %1301 = vmatpush1.msra.mxu0 0.0
        %1302 = vmatprep.subr.mxu0 0.0
        %1303 = vmatpush1.msra.mxu0 0.0
        %1304 = vmatprep.subr.mxu0 0.0
        %1305 = vmatpush1.msra.mxu0 0.0
        %1306 = vmatprep.subr.mxu0 0.0
        %1307 = vmatpush1.msra.mxu0 0.0
        %1308 = vmatprep.subr.mxu0 0.0
        %1309 = vmatpush1.msra.mxu0 0.0
        %1310 = vmatprep.mubr.f32.mxu0 0.0
        %v1311 = vand.u32 %v1144, 4294901760
        %1312 = vmatmul.mubr.f32.gmra.mrb[0].mxu0 %v1311
        %v1313 = vpop.f32.mrb[0].mxu0
        %v1314 = vadd.f32 %v1223, %v1313
        %v1315 = vpop.f32.mrb[0].mxu0
        %1316 = vmatprep.mubr.f32.mxu0 0.0
        %v1317 = vand.u32 %v1147, 4294901760
        %1318 = vmatmul.mubr.f32.gmra.mrb[0].mxu0 %v1317
        %v1319 = vpop.f32.mrb[0].mxu0
        %v1320 = vadd.f32 %v1233, %v1319
        %v1321 = vpop.f32.mrb[0].mxu0
        %1322 = vdwg.mxu0
        %1323 = vmatprep.subr.mxu0 0.0
        %v1324 = vand.u32 %v477, 4294901760
        %v1325 = vsub.f32 %v477, %v1324
        %1326 = vmatpush1.msra.mxu0 %v1325
        %1327 = vmatprep.subr.mxu0 0.0
        %v1328 = vand.u32 %v478, 4294901760
        %v1329 = vsub.f32 %v478, %v1328
        %1330 = vmatpush1.msra.mxu0 %v1329
        %1331 = vmatprep.subr.mxu0 0.0
        %1332 = vmatpush1.msra.mxu0 0.0
        %1333 = vmatprep.subr.mxu0 0.0
        %1334 = vmatpush1.msra.mxu0 0.0
        %1335 = vmatprep.subr.mxu0 0.0
        %1336 = vmatpush1.msra.mxu0 0.0
        %1337 = vmatprep.subr.mxu0 0.0
        %1338 = vmatpush1.msra.mxu0 0.0
        %1339 = vmatprep.subr.mxu0 0.0
        %1340 = vmatpush1.msra.mxu0 0.0
        %1341 = vmatprep.subr.mxu0 0.0
        %1342 = vmatpush1.msra.mxu0 0.0
        %1343 = vmatprep.subr.mxu0 0.0
        %1344 = vmatpush1.msra.mxu0 0.0
        %1345 = vmatprep.subr.mxu0 0.0
        %1346 = vmatpush1.msra.mxu0 0.0
        %1347 = vmatprep.subr.mxu0 0.0
        %1348 = vmatpush1.msra.mxu0 0.0
        %1349 = vmatprep.subr.mxu0 0.0
        %1350 = vmatpush1.msra.mxu0 0.0
        %1351 = vmatprep.subr.mxu0 0.0
        %1352 = vmatpush1.msra.mxu0 0.0
        %1353 = vmatprep.subr.mxu0 0.0
        %1354 = vmatpush1.msra.mxu0 0.0
        %1355 = vmatprep.subr.mxu0 0.0
        %1356 = vmatpush1.msra.mxu0 0.0
        %1357 = vmatprep.subr.mxu0 0.0
        %1358 = vmatpush1.msra.mxu0 0.0
        %1359 = vmatprep.subr.mxu0 0.0
        %1360 = vmatpush1.msra.mxu0 0.0
        %1361 = vmatprep.subr.mxu0 0.0
        %1362 = vmatpush1.msra.mxu0 0.0
        %1363 = vmatprep.subr.mxu0 0.0
        %1364 = vmatpush1.msra.mxu0 0.0
        %1365 = vmatprep.subr.mxu0 0.0
        %1366 = vmatpush1.msra.mxu0 0.0
        %1367 = vmatprep.subr.mxu0 0.0
        %1368 = vmatpush1.msra.mxu0 0.0
        %1369 = vmatprep.subr.mxu0 0.0
        %1370 = vmatpush1.msra.mxu0 0.0
        %1371 = vmatprep.subr.mxu0 0.0
        %1372 = vmatpush1.msra.mxu0 0.0
        %1373 = vmatprep.subr.mxu0 0.0
        %1374 = vmatpush1.msra.mxu0 0.0
        %1375 = vmatprep.subr.mxu0 0.0
        %1376 = vmatpush1.msra.mxu0 0.0
        %1377 = vmatprep.subr.mxu0 0.0
        %1378 = vmatpush1.msra.mxu0 0.0
        %1379 = vmatprep.subr.mxu0 0.0
        %1380 = vmatpush1.msra.mxu0 0.0
        %1381 = vmatprep.subr.mxu0 0.0
        %1382 = vmatpush1.msra.mxu0 0.0
        %1383 = vmatprep.subr.mxu0 0.0
        %1384 = vmatpush1.msra.mxu0 0.0
        %1385 = vmatprep.subr.mxu0 0.0
        %1386 = vmatpush1.msra.mxu0 0.0
        %1387 = vmatprep.subr.mxu0 0.0
        %1388 = vmatpush1.msra.mxu0 0.0
        %1389 = vmatprep.subr.mxu0 0.0
        %1390 = vmatpush1.msra.mxu0 0.0
        %1391 = vmatprep.mubr.f32.mxu0 0.0
        %v1392 = vand.u32 %v1144, 4294901760
        %v1393 = vsub.f32 %v1144, %v1392
        %1394 = vmatmul.mubr.f32.gmra.mrb[0].mxu0 %v1393
        %v1395 = vpop.f32.mrb[0].mxu0
        %v1396 = vadd.f32 %v1314, %v1395
        %v1397 = vpop.f32.mrb[0].mxu0
        %1398 = vmatprep.mubr.f32.mxu0 0.0
        %v1399 = vand.u32 %v1147, 4294901760
        %v1400 = vsub.f32 %v1147, %v1399
        %1401 = vmatmul.mubr.f32.gmra.mrb[0].mxu0 %v1400
        %v1402 = vpop.f32.mrb[0].mxu0
        %v1403 = vadd.f32 %v1320, %v1402
        %v1404 = vpop.f32.mrb[0].mxu0
        %1405 = vdwg.mxu0
        %1406 = vmatprep.subr.mxu0 0.0
        %v1407 = vand.u32 %v477, 4294901760
        %1408 = vmatpush1.msra.mxu0 %v1407
        %1409 = vmatprep.subr.mxu0 0.0
        %v1410 = vand.u32 %v478, 4294901760
        %1411 = vmatpush1.msra.mxu0 %v1410
        %1412 = vmatprep.subr.mxu0 0.0
        %1413 = vmatpush1.msra.mxu0 0.0
        %1414 = vmatprep.subr.mxu0 0.0
        %1415 = vmatpush1.msra.mxu0 0.0
        %1416 = vmatprep.subr.mxu0 0.0
        %1417 = vmatpush1.msra.mxu0 0.0
        %1418 = vmatprep.subr.mxu0 0.0
        %1419 = vmatpush1.msra.mxu0 0.0
        %1420 = vmatprep.subr.mxu0 0.0
        %1421 = vmatpush1.msra.mxu0 0.0
        %1422 = vmatprep.subr.mxu0 0.0
        %1423 = vmatpush1.msra.mxu0 0.0
        %1424 = vmatprep.subr.mxu0 0.0
        %1425 = vmatpush1.msra.mxu0 0.0
        %1426 = vmatprep.subr.mxu0 0.0
        %1427 = vmatpush1.msra.mxu0 0.0
        %1428 = vmatprep.subr.mxu0 0.0
        %1429 = vmatpush1.msra.mxu0 0.0
        %1430 = vmatprep.subr.mxu0 0.0
        %1431 = vmatpush1.msra.mxu0 0.0
        %1432 = vmatprep.subr.mxu0 0.0
        %1433 = vmatpush1.msra.mxu0 0.0
        %1434 = vmatprep.subr.mxu0 0.0
        %1435 = vmatpush1.msra.mxu0 0.0
        %1436 = vmatprep.subr.mxu0 0.0
        %1437 = vmatpush1.msra.mxu0 0.0
        %1438 = vmatprep.subr.mxu0 0.0
        %1439 = vmatpush1.msra.mxu0 0.0
        %1440 = vmatprep.subr.mxu0 0.0
        %1441 = vmatpush1.msra.mxu0 0.0
        %1442 = vmatprep.subr.mxu0 0.0
        %1443 = vmatpush1.msra.mxu0 0.0
        %1444 = vmatprep.subr.mxu0 0.0
        %1445 = vmatpush1.msra.mxu0 0.0
        %1446 = vmatprep.subr.mxu0 0.0
        %1447 = vmatpush1.msra.mxu0 0.0
        %1448 = vmatprep.subr.mxu0 0.0
        %1449 = vmatpush1.msra.mxu0 0.0
        %1450 = vmatprep.subr.mxu0 0.0
        %1451 = vmatpush1.msra.mxu0 0.0
        %1452 = vmatprep.subr.mxu0 0.0
        %1453 = vmatpush1.msra.mxu0 0.0
        %1454 = vmatprep.subr.mxu0 0.0
        %1455 = vmatpush1.msra.mxu0 0.0
        %1456 = vmatprep.subr.mxu0 0.0
        %1457 = vmatpush1.msra.mxu0 0.0
        %1458 = vmatprep.subr.mxu0 0.0
        %1459 = vmatpush1.msra.mxu0 0.0
        %1460 = vmatprep.subr.mxu0 0.0
        %1461 = vmatpush1.msra.mxu0 0.0
        %1462 = vmatprep.subr.mxu0 0.0
        %1463 = vmatpush1.msra.mxu0 0.0
        %1464 = vmatprep.subr.mxu0 0.0
        %1465 = vmatpush1.msra.mxu0 0.0
        %1466 = vmatprep.subr.mxu0 0.0
        %1467 = vmatpush1.msra.mxu0 0.0
        %1468 = vmatprep.subr.mxu0 0.0
        %1469 = vmatpush1.msra.mxu0 0.0
        %1470 = vmatprep.subr.mxu0 0.0
        %1471 = vmatpush1.msra.mxu0 0.0
        %1472 = vmatprep.mubr.f32.mxu0 0.0
        %v1473 = vand.u32 %v1144, 4294901760
        %v1474 = vsub.f32 %v1144, %v1473
        %v1475 = vand.u32 %v1474, 4294901760
        %1476 = vmatmul.mubr.f32.gmra.mrb[0].mxu0 %v1475
        %v1477 = vpop.f32.mrb[0].mxu0
        %v1478 = vadd.f32 %v1396, %v1477
        %v1479 = vpop.f32.mrb[0].mxu0
        %1480 = vmatprep.mubr.f32.mxu0 0.0
        %v1481 = vand.u32 %v1147, 4294901760
        %v1482 = vsub.f32 %v1147, %v1481
        %v1483 = vand.u32 %v1482, 4294901760
        %1484 = vmatmul.mubr.f32.gmra.mrb[0].mxu0 %v1483
        %v1485 = vpop.f32.mrb[0].mxu0
        %v1486 = vadd.f32 %v1403, %v1485
        %v1487 = vpop.f32.mrb[0].mxu0
        %1488 = vdwg.mxu0
        %1489 = vmatprep.subr.mxu0 0.0
        %v1490 = vand.u32 %v477, 4294901760
        %v1491 = vsub.f32 %v477, %v1490
        %v1492 = vand.u32 %v1491, 4294901760
        %1493 = vmatpush1.msra.mxu0 %v1492
        %1494 = vmatprep.subr.mxu0 0.0
        %v1495 = vand.u32 %v478, 4294901760
        %v1496 = vsub.f32 %v478, %v1495
        %v1497 = vand.u32 %v1496, 4294901760
        %1498 = vmatpush1.msra.mxu0 %v1497
        %1499 = vmatprep.subr.mxu0 0.0
        %1500 = vmatpush1.msra.mxu0 0.0
        %1501 = vmatprep.subr.mxu0 0.0
        %1502 = vmatpush1.msra.mxu0 0.0
        %1503 = vmatprep.subr.mxu0 0.0
        %1504 = vmatpush1.msra.mxu0 0.0
        %1505 = vmatprep.subr.mxu0 0.0
        %1506 = vmatpush1.msra.mxu0 0.0
        %1507 = vmatprep.subr.mxu0 0.0
        %1508 = vmatpush1.msra.mxu0 0.0
        %1509 = vmatprep.subr.mxu0 0.0
        %1510 = vmatpush1.msra.mxu0 0.0
        %1511 = vmatprep.subr.mxu0 0.0
        %1512 = vmatpush1.msra.mxu0 0.0
        %1513 = vmatprep.subr.mxu0 0.0
        %1514 = vmatpush1.msra.mxu0 0.0
        %1515 = vmatprep.subr.mxu0 0.0
        %1516 = vmatpush1.msra.mxu0 0.0
        %1517 = vmatprep.subr.mxu0 0.0
        %1518 = vmatpush1.msra.mxu0 0.0
        %1519 = vmatprep.subr.mxu0 0.0
        %1520 = vmatpush1.msra.mxu0 0.0
        %1521 = vmatprep.subr.mxu0 0.0
        %1522 = vmatpush1.msra.mxu0 0.0
        %1523 = vmatprep.subr.mxu0 0.0
        %1524 = vmatpush1.msra.mxu0 0.0
        %1525 = vmatprep.subr.mxu0 0.0
        %1526 = vmatpush1.msra.mxu0 0.0
        %1527 = vmatprep.subr.mxu0 0.0
        %1528 = vmatpush1.msra.mxu0 0.0
        %1529 = vmatprep.subr.mxu0 0.0
        %1530 = vmatpush1.msra.mxu0 0.0
        %1531 = vmatprep.subr.mxu0 0.0
        %1532 = vmatpush1.msra.mxu0 0.0
        %1533 = vmatprep.subr.mxu0 0.0
        %1534 = vmatpush1.msra.mxu0 0.0
        %1535 = vmatprep.subr.mxu0 0.0
        %1536 = vmatpush1.msra.mxu0 0.0
        %1537 = vmatprep.subr.mxu0 0.0
        %1538 = vmatpush1.msra.mxu0 0.0
        %1539 = vmatprep.subr.mxu0 0.0
        %1540 = vmatpush1.msra.mxu0 0.0
        %1541 = vmatprep.subr.mxu0 0.0
        %1542 = vmatpush1.msra.mxu0 0.0
        %1543 = vmatprep.subr.mxu0 0.0
        %1544 = vmatpush1.msra.mxu0 0.0
        %1545 = vmatprep.subr.mxu0 0.0
        %1546 = vmatpush1.msra.mxu0 0.0
        %1547 = vmatprep.subr.mxu0 0.0
        %1548 = vmatpush1.msra.mxu0 0.0
        %1549 = vmatprep.subr.mxu0 0.0
        %1550 = vmatpush1.msra.mxu0 0.0
        %1551 = vmatprep.subr.mxu0 0.0
        %1552 = vmatpush1.msra.mxu0 0.0
        %1553 = vmatprep.subr.mxu0 0.0
        %1554 = vmatpush1.msra.mxu0 0.0
        %1555 = vmatprep.subr.mxu0 0.0
        %1556 = vmatpush1.msra.mxu0 0.0
        %1557 = vmatprep.subr.mxu0 0.0
        %1558 = vmatpush1.msra.mxu0 0.0
        %1559 = vmatprep.mubr.f32.mxu0 0.0
        %v1560 = vand.u32 %v1144, 4294901760
        %1561 = vmatmul.mubr.f32.gmra.mrb[0].mxu0 %v1560
        %v1562 = vpop.f32.mrb[0].mxu0
        %v1563 = vadd.f32 %v1478, %v1562
        %v1564 = vpop.f32.mrb[0].mxu0
        %1565 = vmatprep.mubr.f32.mxu0 0.0
        %v1566 = vand.u32 %v1147, 4294901760
        %1567 = vmatmul.mubr.f32.gmra.mrb[0].mxu0 %v1566
        %v1568 = vpop.f32.mrb[0].mxu0
        %v1569 = vadd.f32 %v1486, %v1568
        %v1570 = vpop.f32.mrb[0].mxu0
        %1571 = vdwg.mxu0
        %1572 = vmatprep.subr.mxu0 0.0
        %v1573 = vand.u32 %v477, 4294901760
        %1574 = vmatpush1.msra.mxu0 %v1573
        %1575 = vmatprep.subr.mxu0 0.0
        %v1576 = vand.u32 %v478, 4294901760
        %1577 = vmatpush1.msra.mxu0 %v1576
        %1578 = vmatprep.subr.mxu0 0.0
        %1579 = vmatpush1.msra.mxu0 0.0
        %1580 = vmatprep.subr.mxu0 0.0
        %1581 = vmatpush1.msra.mxu0 0.0
        %1582 = vmatprep.subr.mxu0 0.0
        %1583 = vmatpush1.msra.mxu0 0.0
        %1584 = vmatprep.subr.mxu0 0.0
        %1585 = vmatpush1.msra.mxu0 0.0
        %1586 = vmatprep.subr.mxu0 0.0
        %1587 = vmatpush1.msra.mxu0 0.0
        %1588 = vmatprep.subr.mxu0 0.0
        %1589 = vmatpush1.msra.mxu0 0.0
        %1590 = vmatprep.subr.mxu0 0.0
        %1591 = vmatpush1.msra.mxu0 0.0
        %1592 = vmatprep.subr.mxu0 0.0
        %1593 = vmatpush1.msra.mxu0 0.0
        %1594 = vmatprep.subr.mxu0 0.0
        %1595 = vmatpush1.msra.mxu0 0.0
        %1596 = vmatprep.subr.mxu0 0.0
        %1597 = vmatpush1.msra.mxu0 0.0
        %1598 = vmatprep.subr.mxu0 0.0
        %1599 = vmatpush1.msra.mxu0 0.0
        %1600 = vmatprep.subr.mxu0 0.0
        %1601 = vmatpush1.msra.mxu0 0.0
        %1602 = vmatprep.subr.mxu0 0.0
        %1603 = vmatpush1.msra.mxu0 0.0
        %1604 = vmatprep.subr.mxu0 0.0
        %1605 = vmatpush1.msra.mxu0 0.0
        %1606 = vmatprep.subr.mxu0 0.0
        %1607 = vmatpush1.msra.mxu0 0.0
        %1608 = vmatprep.subr.mxu0 0.0
        %1609 = vmatpush1.msra.mxu0 0.0
        %1610 = vmatprep.subr.mxu0 0.0
        %1611 = vmatpush1.msra.mxu0 0.0
        %1612 = vmatprep.subr.mxu0 0.0
        %1613 = vmatpush1.msra.mxu0 0.0
        %1614 = vmatprep.subr.mxu0 0.0
        %1615 = vmatpush1.msra.mxu0 0.0
        %1616 = vmatprep.subr.mxu0 0.0
        %1617 = vmatpush1.msra.mxu0 0.0
        %1618 = vmatprep.subr.mxu0 0.0
        %1619 = vmatpush1.msra.mxu0 0.0
        %1620 = vmatprep.subr.mxu0 0.0
        %1621 = vmatpush1.msra.mxu0 0.0
        %1622 = vmatprep.subr.mxu0 0.0
        %1623 = vmatpush1.msra.mxu0 0.0
        %1624 = vmatprep.subr.mxu0 0.0
        %1625 = vmatpush1.msra.mxu0 0.0
        %1626 = vmatprep.subr.mxu0 0.0
        %1627 = vmatpush1.msra.mxu0 0.0
        %1628 = vmatprep.subr.mxu0 0.0
        %1629 = vmatpush1.msra.mxu0 0.0
        %1630 = vmatprep.subr.mxu0 0.0
        %1631 = vmatpush1.msra.mxu0 0.0
        %1632 = vmatprep.subr.mxu0 0.0
        %1633 = vmatpush1.msra.mxu0 0.0
        %1634 = vmatprep.subr.mxu0 0.0
        %1635 = vmatpush1.msra.mxu0 0.0
        %1636 = vmatprep.subr.mxu0 0.0
        %1637 = vmatpush1.msra.mxu0 0.0
        %1638 = vmatprep.mubr.f32.mxu0 0.0
        %v1639 = vand.u32 %v1144, 4294901760
        %1640 = vmatmul.mubr.f32.gmra.mrb[0].mxu0 %v1639
        %v1641 = vpop.f32.mrb[0].mxu0
        %v1642 = vadd.f32 %v1563, %v1641
        %v1643 = vpop.f32.mrb[0].mxu0
        %1644 = vmatprep.mubr.f32.mxu0 0.0
        %v1645 = vand.u32 %v1147, 4294901760
        %1646 = vmatmul.mubr.f32.gmra.mrb[0].mxu0 %v1645
        %v1647 = vpop.f32.mrb[0].mxu0
        %v1648 = vadd.f32 %v1569, %v1647
        %v1649 = vpop.f32.mrb[0].mxu0
        %1650 = vdwg.mxu0
        %vm1651 = vcmask 23552
        %v1652 = vsel %vm1651, %v1642, -inf
        %1653 = vmax.xlane.f32.xlu0 %v1652
        %v1654 = vpop.xlane.xlu0 %1653
        %v1655 = vsel %vm1651, %v1648, -inf
        %1656 = vmax.xlane.f32.xlu0 %v1655
        %v1657 = vpop.xlane.xlu0 %1656
        %v1658 = vsub.f32 %v1642, %v1654
        %v1659 = vsub.f32 %v1648, %v1657
        %v1660 = vmul.f32 %v1658, 1.442695
        %v1661 = vpow.pop %v1660
        %v1662 = vmul.f32 %v1659, 1.442695
        %v1663 = vpow.pop %v1662
        %v1664 = vsel %vm1651, %v1661, 0.0
        %1665 = vadd.xlane.f32.xlu0 %v1664
        %v1666 = vpop.xlane.xlu0 %1665
        %v1667 = vsel %vm1651, %v1663, 0.0
        %1668 = vadd.xlane.f32.xlu0 %v1667
        %v1669 = vpop.xlane.xlu0 %1668
        %v1670 = vrcp.pop %v1666
        %v1671 = vmul.f32 %v1661, %v1670
        %v1672 = vrcp.pop %v1669
        %v1673 = vmul.f32 %v1663, %v1672
        %1674 = vmatprep.subr.mxu0 0.0
        %v1675 = vand.u32 %v486, 4294901760
        %1676 = vmatpush1.msra.mxu0 %v1675
        %1677 = vmatprep.subr.mxu0 0.0
        %1678 = vmatpush1.msra.mxu0 0.0
        %1679 = vmatprep.subr.mxu0 0.0
        %1680 = vmatpush1.msra.mxu0 0.0
        %1681 = vmatprep.subr.mxu0 0.0
        %1682 = vmatpush1.msra.mxu0 0.0
        %1683 = vmatprep.subr.mxu0 0.0
        %1684 = vmatpush1.msra.mxu0 0.0
        %1685 = vmatprep.subr.mxu0 0.0
        %1686 = vmatpush1.msra.mxu0 0.0
        %1687 = vmatprep.subr.mxu0 0.0
        %1688 = vmatpush1.msra.mxu0 0.0
        %1689 = vmatprep.subr.mxu0 0.0
        %1690 = vmatpush1.msra.mxu0 0.0
        %1691 = vmatprep.subr.mxu0 0.0
        %1692 = vmatpush1.msra.mxu0 0.0
        %1693 = vmatprep.subr.mxu0 0.0
        %1694 = vmatpush1.msra.mxu0 0.0
        %1695 = vmatprep.subr.mxu0 0.0
        %1696 = vmatpush1.msra.mxu0 0.0
        %1697 = vmatprep.subr.mxu0 0.0
        %1698 = vmatpush1.msra.mxu0 0.0
        %1699 = vmatprep.subr.mxu0 0.0
        %1700 = vmatpush1.msra.mxu0 0.0
        %1701 = vmatprep.subr.mxu0 0.0
        %1702 = vmatpush1.msra.mxu0 0.0
        %1703 = vmatprep.subr.mxu0 0.0
        %1704 = vmatpush1.msra.mxu0 0.0
        %1705 = vmatprep.subr.mxu0 0.0
        %1706 = vmatpush1.msra.mxu0 0.0
        %1707 = vmatprep.subr.mxu0 0.0
        %1708 = vmatpush1.msra.mxu0 0.0
        %1709 = vmatprep.subr.mxu0 0.0
        %1710 = vmatpush1.msra.mxu0 0.0
        %1711 = vmatprep.subr.mxu0 0.0
        %1712 = vmatpush1.msra.mxu0 0.0
        %1713 = vmatprep.subr.mxu0 0.0
        %1714 = vmatpush1.msra.mxu0 0.0
        %1715 = vmatprep.subr.mxu0 0.0
        %1716 = vmatpush1.msra.mxu0 0.0
        %1717 = vmatprep.subr.mxu0 0.0
        %1718 = vmatpush1.msra.mxu0 0.0
        %1719 = vmatprep.subr.mxu0 0.0
        %1720 = vmatpush1.msra.mxu0 0.0
        %1721 = vmatprep.subr.mxu0 0.0
        %1722 = vmatpush1.msra.mxu0 0.0
        %1723 = vmatprep.subr.mxu0 0.0
        %1724 = vmatpush1.msra.mxu0 0.0
        %1725 = vmatprep.subr.mxu0 0.0
        %1726 = vmatpush1.msra.mxu0 0.0
        %1727 = vmatprep.subr.mxu0 0.0
        %1728 = vmatpush1.msra.mxu0 0.0
        %1729 = vmatprep.subr.mxu0 0.0
        %1730 = vmatpush1.msra.mxu0 0.0
        %1731 = vmatprep.subr.mxu0 0.0
        %1732 = vmatpush1.msra.mxu0 0.0
        %1733 = vmatprep.subr.mxu0 0.0
        %1734 = vmatpush1.msra.mxu0 0.0
        %1735 = vmatprep.subr.mxu0 0.0
        %1736 = vmatpush1.msra.mxu0 0.0
        %1737 = vmatprep.subr.mxu0 0.0
        %1738 = vmatpush1.msra.mxu0 0.0
        %1739 = vmatprep.mubr.f32.mxu0 0.0
        %v1740 = vand.u32 %v630, 4294901760
        %v1741 = vsub.f32 %v630, %v1740
        %v1742 = vand.u32 %v1741, 4294901760
        %v1743 = vsub.f32 %v1741, %v1742
        %v1744 = vand.u32 %v1743, 4294901760
        %1745 = vmatmul.mubr.f32.gmra.mrb[0].mxu0 %v1744
        %v1746 = vpop.f32.mrb[0].mxu0
        %v1747 = vadd.f32 0.0, %v1746
        %v1748 = vpop.f32.mrb[0].mxu0
        %1749 = vmatprep.mubr.f32.mxu0 0.0
        %v1750 = vand.u32 %v633, 4294901760
        %v1751 = vsub.f32 %v633, %v1750
        %v1752 = vand.u32 %v1751, 4294901760
        %v1753 = vsub.f32 %v1751, %v1752
        %v1754 = vand.u32 %v1753, 4294901760
        %1755 = vmatmul.mubr.f32.gmra.mrb[0].mxu0 %v1754
        %v1756 = vpop.f32.mrb[0].mxu0
        %v1757 = vadd.f32 0.0, %v1756
        %v1758 = vpop.f32.mrb[0].mxu0
        %1759 = vdwg.mxu0
        %1760 = vmatprep.subr.mxu0 0.0
        %v1761 = vand.u32 %v486, 4294901760
        %v1762 = vsub.f32 %v486, %v1761
        %v1763 = vand.u32 %v1762, 4294901760
        %v1764 = vsub.f32 %v1762, %v1763
        %v1765 = vand.u32 %v1764, 4294901760
        %1766 = vmatpush1.msra.mxu0 %v1765
        %1767 = vmatprep.subr.mxu0 0.0
        %1768 = vmatpush1.msra.mxu0 0.0
        %1769 = vmatprep.subr.mxu0 0.0
        %1770 = vmatpush1.msra.mxu0 0.0
        %1771 = vmatprep.subr.mxu0 0.0
        %1772 = vmatpush1.msra.mxu0 0.0
        %1773 = vmatprep.subr.mxu0 0.0
        %1774 = vmatpush1.msra.mxu0 0.0
        %1775 = vmatprep.subr.mxu0 0.0
        %1776 = vmatpush1.msra.mxu0 0.0
        %1777 = vmatprep.subr.mxu0 0.0
        %1778 = vmatpush1.msra.mxu0 0.0
        %1779 = vmatprep.subr.mxu0 0.0
        %1780 = vmatpush1.msra.mxu0 0.0
        %1781 = vmatprep.subr.mxu0 0.0
        %1782 = vmatpush1.msra.mxu0 0.0
        %1783 = vmatprep.subr.mxu0 0.0
        %1784 = vmatpush1.msra.mxu0 0.0
        %1785 = vmatprep.subr.mxu0 0.0
        %1786 = vmatpush1.msra.mxu0 0.0
        %1787 = vmatprep.subr.mxu0 0.0
        %1788 = vmatpush1.msra.mxu0 0.0
        %1789 = vmatprep.subr.mxu0 0.0
        %1790 = vmatpush1.msra.mxu0 0.0
        %1791 = vmatprep.subr.mxu0 0.0
        %1792 = vmatpush1.msra.mxu0 0.0
        %1793 = vmatprep.subr.mxu0 0.0
        %1794 = vmatpush1.msra.mxu0 0.0
        %1795 = vmatprep.subr.mxu0 0.0
        %1796 = vmatpush1.msra.mxu0 0.0
        %1797 = vmatprep.subr.mxu0 0.0
        %1798 = vmatpush1.msra.mxu0 0.0
        %1799 = vmatprep.subr.mxu0 0.0
        %1800 = vmatpush1.msra.mxu0 0.0
        %1801 = vmatprep.subr.mxu0 0.0
        %1802 = vmatpush1.msra.mxu0 0.0
        %1803 = vmatprep.subr.mxu0 0.0
        %1804 = vmatpush1.msra.mxu0 0.0
        %1805 = vmatprep.subr.mxu0 0.0
        %1806 = vmatpush1.msra.mxu0 0.0
        %1807 = vmatprep.subr.mxu0 0.0
        %1808 = vmatpush1.msra.mxu0 0.0
        %1809 = vmatprep.subr.mxu0 0.0
        %1810 = vmatpush1.msra.mxu0 0.0
        %1811 = vmatprep.subr.mxu0 0.0
        %1812 = vmatpush1.msra.mxu0 0.0
        %1813 = vmatprep.subr.mxu0 0.0
        %1814 = vmatpush1.msra.mxu0 0.0
        %1815 = vmatprep.subr.mxu0 0.0
        %1816 = vmatpush1.msra.mxu0 0.0
        %1817 = vmatprep.subr.mxu0 0.0
        %1818 = vmatpush1.msra.mxu0 0.0
        %1819 = vmatprep.subr.mxu0 0.0
        %1820 = vmatpush1.msra.mxu0 0.0
        %1821 = vmatprep.subr.mxu0 0.0
        %1822 = vmatpush1.msra.mxu0 0.0
        %1823 = vmatprep.subr.mxu0 0.0
        %1824 = vmatpush1.msra.mxu0 0.0
        %1825 = vmatprep.subr.mxu0 0.0
        %1826 = vmatpush1.msra.mxu0 0.0
        %1827 = vmatprep.subr.mxu0 0.0
        %1828 = vmatpush1.msra.mxu0 0.0
        %1829 = vmatprep.mubr.f32.mxu0 0.0
        %v1830 = vand.u32 %v630, 4294901760
        %1831 = vmatmul.mubr.f32.gmra.mrb[0].mxu0 %v1830
        %v1832 = vpop.f32.mrb[0].mxu0
        %v1833 = vadd.f32 %v1747, %v1832
        %v1834 = vpop.f32.mrb[0].mxu0
        %1835 = vmatprep.mubr.f32.mxu0 0.0
        %v1836 = vand.u32 %v633, 4294901760
        %1837 = vmatmul.mubr.f32.gmra.mrb[0].mxu0 %v1836
        %v1838 = vpop.f32.mrb[0].mxu0
        %v1839 = vadd.f32 %v1757, %v1838
        %v1840 = vpop.f32.mrb[0].mxu0
        %1841 = vdwg.mxu0
        %1842 = vmatprep.subr.mxu0 0.0
        %v1843 = vand.u32 %v486, 4294901760
        %v1844 = vsub.f32 %v486, %v1843
        %1845 = vmatpush1.msra.mxu0 %v1844
        %1846 = vmatprep.subr.mxu0 0.0
        %1847 = vmatpush1.msra.mxu0 0.0
        %1848 = vmatprep.subr.mxu0 0.0
        %1849 = vmatpush1.msra.mxu0 0.0
        %1850 = vmatprep.subr.mxu0 0.0
        %1851 = vmatpush1.msra.mxu0 0.0
        %1852 = vmatprep.subr.mxu0 0.0
        %1853 = vmatpush1.msra.mxu0 0.0
        %1854 = vmatprep.subr.mxu0 0.0
        %1855 = vmatpush1.msra.mxu0 0.0
        %1856 = vmatprep.subr.mxu0 0.0
        %1857 = vmatpush1.msra.mxu0 0.0
        %1858 = vmatprep.subr.mxu0 0.0
        %1859 = vmatpush1.msra.mxu0 0.0
        %1860 = vmatprep.subr.mxu0 0.0
        %1861 = vmatpush1.msra.mxu0 0.0
        %1862 = vmatprep.subr.mxu0 0.0
        %1863 = vmatpush1.msra.mxu0 0.0
        %1864 = vmatprep.subr.mxu0 0.0
        %1865 = vmatpush1.msra.mxu0 0.0
        %1866 = vmatprep.subr.mxu0 0.0
        %1867 = vmatpush1.msra.mxu0 0.0
        %1868 = vmatprep.subr.mxu0 0.0
        %1869 = vmatpush1.msra.mxu0 0.0
        %1870 = vmatprep.subr.mxu0 0.0
        %1871 = vmatpush1.msra.mxu0 0.0
        %1872 = vmatprep.subr.mxu0 0.0
        %1873 = vmatpush1.msra.mxu0 0.0
        %1874 = vmatprep.subr.mxu0 0.0
        %1875 = vmatpush1.msra.mxu0 0.0
        %1876 = vmatprep.subr.mxu0 0.0
        %1877 = vmatpush1.msra.mxu0 0.0
        %1878 = vmatprep.subr.mxu0 0.0
        %1879 = vmatpush1.msra.mxu0 0.0
        %1880 = vmatprep.subr.mxu0 0.0
        %1881 = vmatpush1.msra.mxu0 0.0
        %1882 = vmatprep.subr.mxu0 0.0
        %1883 = vmatpush1.msra.mxu0 0.0
        %1884 = vmatprep.subr.mxu0 0.0
        %1885 = vmatpush1.msra.mxu0 0.0
        %1886 = vmatprep.subr.mxu0 0.0
        %1887 = vmatpush1.msra.mxu0 0.0
        %1888 = vmatprep.subr.mxu0 0.0
        %1889 = vmatpush1.msra.mxu0 0.0
        %1890 = vmatprep.subr.mxu0 0.0
        %1891 = vmatpush1.msra.mxu0 0.0
        %1892 = vmatprep.subr.mxu0 0.0
        %1893 = vmatpush1.msra.mxu0 0.0
        %1894 = vmatprep.subr.mxu0 0.0
        %1895 = vmatpush1.msra.mxu0 0.0
        %1896 = vmatprep.subr.mxu0 0.0
        %1897 = vmatpush1.msra.mxu0 0.0
        %1898 = vmatprep.subr.mxu0 0.0
        %1899 = vmatpush1.msra.mxu0 0.0
        %1900 = vmatprep.subr.mxu0 0.0
        %1901 = vmatpush1.msra.mxu0 0.0
        %1902 = vmatprep.subr.mxu0 0.0
        %1903 = vmatpush1.msra.mxu0 0.0
        %1904 = vmatprep.subr.mxu0 0.0
        %1905 = vmatpush1.msra.mxu0 0.0
        %1906 = vmatprep.subr.mxu0 0.0
        %1907 = vmatpush1.msra.mxu0 0.0
        %1908 = vmatprep.mubr.f32.mxu0 0.0
        %v1909 = vand.u32 %v630, 4294901760
        %v1910 = vsub.f32 %v630, %v1909
        %1911 = vmatmul.mubr.f32.gmra.mrb[0].mxu0 %v1910
        %v1912 = vpop.f32.mrb[0].mxu0
        %v1913 = vadd.f32 %v1833, %v1912
        %v1914 = vpop.f32.mrb[0].mxu0
        %1915 = vmatprep.mubr.f32.mxu0 0.0
        %v1916 = vand.u32 %v633, 4294901760
        %v1917 = vsub.f32 %v633, %v1916
        %1918 = vmatmul.mubr.f32.gmra.mrb[0].mxu0 %v1917
        %v1919 = vpop.f32.mrb[0].mxu0
        %v1920 = vadd.f32 %v1839, %v1919
        %v1921 = vpop.f32.mrb[0].mxu0
        %1922 = vdwg.mxu0
        %1923 = vmatprep.subr.mxu0 0.0
        %v1924 = vand.u32 %v486, 4294901760
        %1925 = vmatpush1.msra.mxu0 %v1924
        %1926 = vmatprep.subr.mxu0 0.0
        %1927 = vmatpush1.msra.mxu0 0.0
        %1928 = vmatprep.subr.mxu0 0.0
        %1929 = vmatpush1.msra.mxu0 0.0
        %1930 = vmatprep.subr.mxu0 0.0
        %1931 = vmatpush1.msra.mxu0 0.0
        %1932 = vmatprep.subr.mxu0 0.0
        %1933 = vmatpush1.msra.mxu0 0.0
        %1934 = vmatprep.subr.mxu0 0.0
        %1935 = vmatpush1.msra.mxu0 0.0
        %1936 = vmatprep.subr.mxu0 0.0
        %1937 = vmatpush1.msra.mxu0 0.0
        %1938 = vmatprep.subr.mxu0 0.0
        %1939 = vmatpush1.msra.mxu0 0.0
        %1940 = vmatprep.subr.mxu0 0.0
        %1941 = vmatpush1.msra.mxu0 0.0
        %1942 = vmatprep.subr.mxu0 0.0
        %1943 = vmatpush1.msra.mxu0 0.0
        %1944 = vmatprep.subr.mxu0 0.0
        %1945 = vmatpush1.msra.mxu0 0.0
        %1946 = vmatprep.subr.mxu0 0.0
        %1947 = vmatpush1.msra.mxu0 0.0
        %1948 = vmatprep.subr.mxu0 0.0
        %1949 = vmatpush1.msra.mxu0 0.0
        %1950 = vmatprep.subr.mxu0 0.0
        %1951 = vmatpush1.msra.mxu0 0.0
        %1952 = vmatprep.subr.mxu0 0.0
        %1953 = vmatpush1.msra.mxu0 0.0
        %1954 = vmatprep.subr.mxu0 0.0
        %1955 = vmatpush1.msra.mxu0 0.0
        %1956 = vmatprep.subr.mxu0 0.0
        %1957 = vmatpush1.msra.mxu0 0.0
        %1958 = vmatprep.subr.mxu0 0.0
        %1959 = vmatpush1.msra.mxu0 0.0
        %1960 = vmatprep.subr.mxu0 0.0
        %1961 = vmatpush1.msra.mxu0 0.0
        %1962 = vmatprep.subr.mxu0 0.0
        %1963 = vmatpush1.msra.mxu0 0.0
        %1964 = vmatprep.subr.mxu0 0.0
        %1965 = vmatpush1.msra.mxu0 0.0
        %1966 = vmatprep.subr.mxu0 0.0
        %1967 = vmatpush1.msra.mxu0 0.0
        %1968 = vmatprep.subr.mxu0 0.0
        %1969 = vmatpush1.msra.mxu0 0.0
        %1970 = vmatprep.subr.mxu0 0.0
        %1971 = vmatpush1.msra.mxu0 0.0
        %1972 = vmatprep.subr.mxu0 0.0
        %1973 = vmatpush1.msra.mxu0 0.0
        %1974 = vmatprep.subr.mxu0 0.0
        %1975 = vmatpush1.msra.mxu0 0.0
        %1976 = vmatprep.subr.mxu0 0.0
        %1977 = vmatpush1.msra.mxu0 0.0
        %1978 = vmatprep.subr.mxu0 0.0
        %1979 = vmatpush1.msra.mxu0 0.0
        %1980 = vmatprep.subr.mxu0 0.0
        %1981 = vmatpush1.msra.mxu0 0.0
        %1982 = vmatprep.subr.mxu0 0.0
        %1983 = vmatpush1.msra.mxu0 0.0
        %1984 = vmatprep.subr.mxu0 0.0
        %1985 = vmatpush1.msra.mxu0 0.0
        %1986 = vmatprep.subr.mxu0 0.0
        %1987 = vmatpush1.msra.mxu0 0.0
        %1988 = vmatprep.mubr.f32.mxu0 0.0
        %v1989 = vand.u32 %v630, 4294901760
        %v1990 = vsub.f32 %v630, %v1989
        %v1991 = vand.u32 %v1990, 4294901760
        %1992 = vmatmul.mubr.f32.gmra.mrb[0].mxu0 %v1991
        %v1993 = vpop.f32.mrb[0].mxu0
        %v1994 = vadd.f32 %v1913, %v1993
        %v1995 = vpop.f32.mrb[0].mxu0
        %1996 = vmatprep.mubr.f32.mxu0 0.0
        %v1997 = vand.u32 %v633, 4294901760
        %v1998 = vsub.f32 %v633, %v1997
        %v1999 = vand.u32 %v1998, 4294901760
        %2000 = vmatmul.mubr.f32.gmra.mrb[0].mxu0 %v1999
        %v2001 = vpop.f32.mrb[0].mxu0
        %v2002 = vadd.f32 %v1920, %v2001
        %v2003 = vpop.f32.mrb[0].mxu0
        %2004 = vdwg.mxu0
        %2005 = vmatprep.subr.mxu0 0.0
        %v2006 = vand.u32 %v486, 4294901760
        %v2007 = vsub.f32 %v486, %v2006
        %v2008 = vand.u32 %v2007, 4294901760
        %2009 = vmatpush1.msra.mxu0 %v2008
        %2010 = vmatprep.subr.mxu0 0.0
        %2011 = vmatpush1.msra.mxu0 0.0
        %2012 = vmatprep.subr.mxu0 0.0
        %2013 = vmatpush1.msra.mxu0 0.0
        %2014 = vmatprep.subr.mxu0 0.0
        %2015 = vmatpush1.msra.mxu0 0.0
        %2016 = vmatprep.subr.mxu0 0.0
        %2017 = vmatpush1.msra.mxu0 0.0
        %2018 = vmatprep.subr.mxu0 0.0
        %2019 = vmatpush1.msra.mxu0 0.0
        %2020 = vmatprep.subr.mxu0 0.0
        %2021 = vmatpush1.msra.mxu0 0.0
        %2022 = vmatprep.subr.mxu0 0.0
        %2023 = vmatpush1.msra.mxu0 0.0
        %2024 = vmatprep.subr.mxu0 0.0
        %2025 = vmatpush1.msra.mxu0 0.0
        %2026 = vmatprep.subr.mxu0 0.0
        %2027 = vmatpush1.msra.mxu0 0.0
        %2028 = vmatprep.subr.mxu0 0.0
        %2029 = vmatpush1.msra.mxu0 0.0
        %2030 = vmatprep.subr.mxu0 0.0
        %2031 = vmatpush1.msra.mxu0 0.0
        %2032 = vmatprep.subr.mxu0 0.0
        %2033 = vmatpush1.msra.mxu0 0.0
        %2034 = vmatprep.subr.mxu0 0.0
        %2035 = vmatpush1.msra.mxu0 0.0
        %2036 = vmatprep.subr.mxu0 0.0
        %2037 = vmatpush1.msra.mxu0 0.0
        %2038 = vmatprep.subr.mxu0 0.0
        %2039 = vmatpush1.msra.mxu0 0.0
        %2040 = vmatprep.subr.mxu0 0.0
        %2041 = vmatpush1.msra.mxu0 0.0
        %2042 = vmatprep.subr.mxu0 0.0
        %2043 = vmatpush1.msra.mxu0 0.0
        %2044 = vmatprep.subr.mxu0 0.0
        %2045 = vmatpush1.msra.mxu0 0.0
        %2046 = vmatprep.subr.mxu0 0.0
        %2047 = vmatpush1.msra.mxu0 0.0
        %2048 = vmatprep.subr.mxu0 0.0
        %2049 = vmatpush1.msra.mxu0 0.0
        %2050 = vmatprep.subr.mxu0 0.0
        %2051 = vmatpush1.msra.mxu0 0.0
        %2052 = vmatprep.subr.mxu0 0.0
        %2053 = vmatpush1.msra.mxu0 0.0
        %2054 = vmatprep.subr.mxu0 0.0
        %2055 = vmatpush1.msra.mxu0 0.0
        %2056 = vmatprep.subr.mxu0 0.0
        %2057 = vmatpush1.msra.mxu0 0.0
        %2058 = vmatprep.subr.mxu0 0.0
        %2059 = vmatpush1.msra.mxu0 0.0
        %2060 = vmatprep.subr.mxu0 0.0
        %2061 = vmatpush1.msra.mxu0 0.0
        %2062 = vmatprep.subr.mxu0 0.0
        %2063 = vmatpush1.msra.mxu0 0.0
        %2064 = vmatprep.subr.mxu0 0.0
        %2065 = vmatpush1.msra.mxu0 0.0
        %2066 = vmatprep.subr.mxu0 0.0
        %2067 = vmatpush1.msra.mxu0 0.0
        %2068 = vmatprep.subr.mxu0 0.0
        %2069 = vmatpush1.msra.mxu0 0.0
        %2070 = vmatprep.subr.mxu0 0.0
        %2071 = vmatpush1.msra.mxu0 0.0
        %2072 = vmatprep.mubr.f32.mxu0 0.0
        %v2073 = vand.u32 %v630, 4294901760
        %2074 = vmatmul.mubr.f32.gmra.mrb[0].mxu0 %v2073
        %v2075 = vpop.f32.mrb[0].mxu0
        %v2076 = vadd.f32 %v1994, %v2075
        %v2077 = vpop.f32.mrb[0].mxu0
        %2078 = vmatprep.mubr.f32.mxu0 0.0
        %v2079 = vand.u32 %v633, 4294901760
        %2080 = vmatmul.mubr.f32.gmra.mrb[0].mxu0 %v2079
        %v2081 = vpop.f32.mrb[0].mxu0
        %v2082 = vadd.f32 %v2002, %v2081
        %v2083 = vpop.f32.mrb[0].mxu0
        %2084 = vdwg.mxu0
        %2085 = vmatprep.subr.mxu0 0.0
        %v2086 = vand.u32 %v486, 4294901760
        %2087 = vmatpush1.msra.mxu0 %v2086
        %2088 = vmatprep.subr.mxu0 0.0
        %2089 = vmatpush1.msra.mxu0 0.0
        %2090 = vmatprep.subr.mxu0 0.0
        %2091 = vmatpush1.msra.mxu0 0.0
        %2092 = vmatprep.subr.mxu0 0.0
        %2093 = vmatpush1.msra.mxu0 0.0
        %2094 = vmatprep.subr.mxu0 0.0
        %2095 = vmatpush1.msra.mxu0 0.0
        %2096 = vmatprep.subr.mxu0 0.0
        %2097 = vmatpush1.msra.mxu0 0.0
        %2098 = vmatprep.subr.mxu0 0.0
        %2099 = vmatpush1.msra.mxu0 0.0
        %2100 = vmatprep.subr.mxu0 0.0
        %2101 = vmatpush1.msra.mxu0 0.0
        %2102 = vmatprep.subr.mxu0 0.0
        %2103 = vmatpush1.msra.mxu0 0.0
        %2104 = vmatprep.subr.mxu0 0.0
        %2105 = vmatpush1.msra.mxu0 0.0
        %2106 = vmatprep.subr.mxu0 0.0
        %2107 = vmatpush1.msra.mxu0 0.0
        %2108 = vmatprep.subr.mxu0 0.0
        %2109 = vmatpush1.msra.mxu0 0.0
        %2110 = vmatprep.subr.mxu0 0.0
        %2111 = vmatpush1.msra.mxu0 0.0
        %2112 = vmatprep.subr.mxu0 0.0
        %2113 = vmatpush1.msra.mxu0 0.0
        %2114 = vmatprep.subr.mxu0 0.0
        %2115 = vmatpush1.msra.mxu0 0.0
        %2116 = vmatprep.subr.mxu0 0.0
        %2117 = vmatpush1.msra.mxu0 0.0
        %2118 = vmatprep.subr.mxu0 0.0
        %2119 = vmatpush1.msra.mxu0 0.0
        %2120 = vmatprep.subr.mxu0 0.0
        %2121 = vmatpush1.msra.mxu0 0.0
        %2122 = vmatprep.subr.mxu0 0.0
        %2123 = vmatpush1.msra.mxu0 0.0
        %2124 = vmatprep.subr.mxu0 0.0
        %2125 = vmatpush1.msra.mxu0 0.0
        %2126 = vmatprep.subr.mxu0 0.0
        %2127 = vmatpush1.msra.mxu0 0.0
        %2128 = vmatprep.subr.mxu0 0.0
        %2129 = vmatpush1.msra.mxu0 0.0
        %2130 = vmatprep.subr.mxu0 0.0
        %2131 = vmatpush1.msra.mxu0 0.0
        %2132 = vmatprep.subr.mxu0 0.0
        %2133 = vmatpush1.msra.mxu0 0.0
        %2134 = vmatprep.subr.mxu0 0.0
        %2135 = vmatpush1.msra.mxu0 0.0
        %2136 = vmatprep.subr.mxu0 0.0
        %2137 = vmatpush1.msra.mxu0 0.0
        %2138 = vmatprep.subr.mxu0 0.0
        %2139 = vmatpush1.msra.mxu0 0.0
        %2140 = vmatprep.subr.mxu0 0.0
        %2141 = vmatpush1.msra.mxu0 0.0
        %2142 = vmatprep.subr.mxu0 0.0
        %2143 = vmatpush1.msra.mxu0 0.0
        %2144 = vmatprep.subr.mxu0 0.0
        %2145 = vmatpush1.msra.mxu0 0.0
        %2146 = vmatprep.subr.mxu0 0.0
        %2147 = vmatpush1.msra.mxu0 0.0
        %2148 = vmatprep.subr.mxu0 0.0
        %2149 = vmatpush1.msra.mxu0 0.0
        %2150 = vmatprep.mubr.f32.mxu0 0.0
        %v2151 = vand.u32 %v630, 4294901760
        %2152 = vmatmul.mubr.f32.gmra.mrb[0].mxu0 %v2151
        %v2153 = vpop.f32.mrb[0].mxu0
        %v2154 = vadd.f32 %v2076, %v2153
        %v2155 = vpop.f32.mrb[0].mxu0
        %2156 = vmatprep.mubr.f32.mxu0 0.0
        %v2157 = vand.u32 %v633, 4294901760
        %2158 = vmatmul.mubr.f32.gmra.mrb[0].mxu0 %v2157
        %v2159 = vpop.f32.mrb[0].mxu0
        %v2160 = vadd.f32 %v2082, %v2159
        %v2161 = vpop.f32.mrb[0].mxu0
        %2162 = vdwg.mxu0
        %2163 = vmatprep.subr.mxu0 0.0
        %v2164 = vand.u32 %v487, 4294901760
        %2165 = vmatpush1.msra.mxu0 %v2164
        %2166 = vmatprep.subr.mxu0 0.0
        %2167 = vmatpush1.msra.mxu0 0.0
        %2168 = vmatprep.subr.mxu0 0.0
        %2169 = vmatpush1.msra.mxu0 0.0
        %2170 = vmatprep.subr.mxu0 0.0
        %2171 = vmatpush1.msra.mxu0 0.0
        %2172 = vmatprep.subr.mxu0 0.0
        %2173 = vmatpush1.msra.mxu0 0.0
        %2174 = vmatprep.subr.mxu0 0.0
        %2175 = vmatpush1.msra.mxu0 0.0
        %2176 = vmatprep.subr.mxu0 0.0
        %2177 = vmatpush1.msra.mxu0 0.0
        %2178 = vmatprep.subr.mxu0 0.0
        %2179 = vmatpush1.msra.mxu0 0.0
        %2180 = vmatprep.subr.mxu0 0.0
        %2181 = vmatpush1.msra.mxu0 0.0
        %2182 = vmatprep.subr.mxu0 0.0
        %2183 = vmatpush1.msra.mxu0 0.0
        %2184 = vmatprep.subr.mxu0 0.0
        %2185 = vmatpush1.msra.mxu0 0.0
        %2186 = vmatprep.subr.mxu0 0.0
        %2187 = vmatpush1.msra.mxu0 0.0
        %2188 = vmatprep.subr.mxu0 0.0
        %2189 = vmatpush1.msra.mxu0 0.0
        %2190 = vmatprep.subr.mxu0 0.0
        %2191 = vmatpush1.msra.mxu0 0.0
        %2192 = vmatprep.subr.mxu0 0.0
        %2193 = vmatpush1.msra.mxu0 0.0
        %2194 = vmatprep.subr.mxu0 0.0
        %2195 = vmatpush1.msra.mxu0 0.0
        %2196 = vmatprep.subr.mxu0 0.0
        %2197 = vmatpush1.msra.mxu0 0.0
        %2198 = vmatprep.subr.mxu0 0.0
        %2199 = vmatpush1.msra.mxu0 0.0
        %2200 = vmatprep.subr.mxu0 0.0
        %2201 = vmatpush1.msra.mxu0 0.0
        %2202 = vmatprep.subr.mxu0 0.0
        %2203 = vmatpush1.msra.mxu0 0.0
        %2204 = vmatprep.subr.mxu0 0.0
        %2205 = vmatpush1.msra.mxu0 0.0
        %2206 = vmatprep.subr.mxu0 0.0
        %2207 = vmatpush1.msra.mxu0 0.0
        %2208 = vmatprep.subr.mxu0 0.0
        %2209 = vmatpush1.msra.mxu0 0.0
        %2210 = vmatprep.subr.mxu0 0.0
        %2211 = vmatpush1.msra.mxu0 0.0
        %2212 = vmatprep.subr.mxu0 0.0
        %2213 = vmatpush1.msra.mxu0 0.0
        %2214 = vmatprep.subr.mxu0 0.0
        %2215 = vmatpush1.msra.mxu0 0.0
        %2216 = vmatprep.subr.mxu0 0.0
        %2217 = vmatpush1.msra.mxu0 0.0
        %2218 = vmatprep.subr.mxu0 0.0
        %2219 = vmatpush1.msra.mxu0 0.0
        %2220 = vmatprep.subr.mxu0 0.0
        %2221 = vmatpush1.msra.mxu0 0.0
        %2222 = vmatprep.subr.mxu0 0.0
        %2223 = vmatpush1.msra.mxu0 0.0
        %2224 = vmatprep.subr.mxu0 0.0
        %2225 = vmatpush1.msra.mxu0 0.0
        %2226 = vmatprep.subr.mxu0 0.0
        %2227 = vmatpush1.msra.mxu0 0.0
        %2228 = vmatprep.mubr.f32.mxu0 0.0
        %v2229 = vand.u32 %v630, 4294901760
        %v2230 = vsub.f32 %v630, %v2229
        %v2231 = vand.u32 %v2230, 4294901760
        %v2232 = vsub.f32 %v2230, %v2231
        %v2233 = vand.u32 %v2232, 4294901760
        %2234 = vmatmul.mubr.f32.gmra.mrb[0].mxu0 %v2233
        %v2235 = vpop.f32.mrb[0].mxu0
        %v2236 = vadd.f32 0.0, %v2235
        %v2237 = vpop.f32.mrb[0].mxu0
        %2238 = vmatprep.mubr.f32.mxu0 0.0
        %v2239 = vand.u32 %v633, 4294901760
        %v2240 = vsub.f32 %v633, %v2239
        %v2241 = vand.u32 %v2240, 4294901760
        %v2242 = vsub.f32 %v2240, %v2241
        %v2243 = vand.u32 %v2242, 4294901760
        %2244 = vmatmul.mubr.f32.gmra.mrb[0].mxu0 %v2243
        %v2245 = vpop.f32.mrb[0].mxu0
        %v2246 = vadd.f32 0.0, %v2245
        %v2247 = vpop.f32.mrb[0].mxu0
        %2248 = vdwg.mxu0
        %2249 = vmatprep.subr.mxu0 0.0
        %v2250 = vand.u32 %v487, 4294901760
        %v2251 = vsub.f32 %v487, %v2250
        %v2252 = vand.u32 %v2251, 4294901760
        %v2253 = vsub.f32 %v2251, %v2252
        %v2254 = vand.u32 %v2253, 4294901760
        %2255 = vmatpush1.msra.mxu0 %v2254
        %2256 = vmatprep.subr.mxu0 0.0
        %2257 = vmatpush1.msra.mxu0 0.0
        %2258 = vmatprep.subr.mxu0 0.0
        %2259 = vmatpush1.msra.mxu0 0.0
        %2260 = vmatprep.subr.mxu0 0.0
        %2261 = vmatpush1.msra.mxu0 0.0
        %2262 = vmatprep.subr.mxu0 0.0
        %2263 = vmatpush1.msra.mxu0 0.0
        %2264 = vmatprep.subr.mxu0 0.0
        %2265 = vmatpush1.msra.mxu0 0.0
        %2266 = vmatprep.subr.mxu0 0.0
        %2267 = vmatpush1.msra.mxu0 0.0
        %2268 = vmatprep.subr.mxu0 0.0
        %2269 = vmatpush1.msra.mxu0 0.0
        %2270 = vmatprep.subr.mxu0 0.0
        %2271 = vmatpush1.msra.mxu0 0.0
        %2272 = vmatprep.subr.mxu0 0.0
        %2273 = vmatpush1.msra.mxu0 0.0
        %2274 = vmatprep.subr.mxu0 0.0
        %2275 = vmatpush1.msra.mxu0 0.0
        %2276 = vmatprep.subr.mxu0 0.0
        %2277 = vmatpush1.msra.mxu0 0.0
        %2278 = vmatprep.subr.mxu0 0.0
        %2279 = vmatpush1.msra.mxu0 0.0
        %2280 = vmatprep.subr.mxu0 0.0
        %2281 = vmatpush1.msra.mxu0 0.0
        %2282 = vmatprep.subr.mxu0 0.0
        %2283 = vmatpush1.msra.mxu0 0.0
        %2284 = vmatprep.subr.mxu0 0.0
        %2285 = vmatpush1.msra.mxu0 0.0
        %2286 = vmatprep.subr.mxu0 0.0
        %2287 = vmatpush1.msra.mxu0 0.0
        %2288 = vmatprep.subr.mxu0 0.0
        %2289 = vmatpush1.msra.mxu0 0.0
        %2290 = vmatprep.subr.mxu0 0.0
        %2291 = vmatpush1.msra.mxu0 0.0
        %2292 = vmatprep.subr.mxu0 0.0
        %2293 = vmatpush1.msra.mxu0 0.0
        %2294 = vmatprep.subr.mxu0 0.0
        %2295 = vmatpush1.msra.mxu0 0.0
        %2296 = vmatprep.subr.mxu0 0.0
        %2297 = vmatpush1.msra.mxu0 0.0
        %2298 = vmatprep.subr.mxu0 0.0
        %2299 = vmatpush1.msra.mxu0 0.0
        %2300 = vmatprep.subr.mxu0 0.0
        %2301 = vmatpush1.msra.mxu0 0.0
        %2302 = vmatprep.subr.mxu0 0.0
        %2303 = vmatpush1.msra.mxu0 0.0
        %2304 = vmatprep.subr.mxu0 0.0
        %2305 = vmatpush1.msra.mxu0 0.0
        %2306 = vmatprep.subr.mxu0 0.0
        %2307 = vmatpush1.msra.mxu0 0.0
        %2308 = vmatprep.subr.mxu0 0.0
        %2309 = vmatpush1.msra.mxu0 0.0
        %2310 = vmatprep.subr.mxu0 0.0
        %2311 = vmatpush1.msra.mxu0 0.0
        %2312 = vmatprep.subr.mxu0 0.0
        %2313 = vmatpush1.msra.mxu0 0.0
        %2314 = vmatprep.subr.mxu0 0.0
        %2315 = vmatpush1.msra.mxu0 0.0
        %2316 = vmatprep.subr.mxu0 0.0
        %2317 = vmatpush1.msra.mxu0 0.0
        %2318 = vmatprep.mubr.f32.mxu0 0.0
        %v2319 = vand.u32 %v630, 4294901760
        %2320 = vmatmul.mubr.f32.gmra.mrb[0].mxu0 %v2319
        %v2321 = vpop.f32.mrb[0].mxu0
        %v2322 = vadd.f32 %v2236, %v2321
        %v2323 = vpop.f32.mrb[0].mxu0
        %2324 = vmatprep.mubr.f32.mxu0 0.0
        %v2325 = vand.u32 %v633, 4294901760
        %2326 = vmatmul.mubr.f32.gmra.mrb[0].mxu0 %v2325
        %v2327 = vpop.f32.mrb[0].mxu0
        %v2328 = vadd.f32 %v2246, %v2327
        %v2329 = vpop.f32.mrb[0].mxu0
        %2330 = vdwg.mxu0
        %2331 = vmatprep.subr.mxu0 0.0
        %v2332 = vand.u32 %v487, 4294901760
        %v2333 = vsub.f32 %v487, %v2332
        %2334 = vmatpush1.msra.mxu0 %v2333
        %2335 = vmatprep.subr.mxu0 0.0
        %2336 = vmatpush1.msra.mxu0 0.0
        %2337 = vmatprep.subr.mxu0 0.0
        %2338 = vmatpush1.msra.mxu0 0.0
        %2339 = vmatprep.subr.mxu0 0.0
        %2340 = vmatpush1.msra.mxu0 0.0
        %2341 = vmatprep.subr.mxu0 0.0
        %2342 = vmatpush1.msra.mxu0 0.0
        %2343 = vmatprep.subr.mxu0 0.0
        %2344 = vmatpush1.msra.mxu0 0.0
        %2345 = vmatprep.subr.mxu0 0.0
        %2346 = vmatpush1.msra.mxu0 0.0
        %2347 = vmatprep.subr.mxu0 0.0
        %2348 = vmatpush1.msra.mxu0 0.0
        %2349 = vmatprep.subr.mxu0 0.0
        %2350 = vmatpush1.msra.mxu0 0.0
        %2351 = vmatprep.subr.mxu0 0.0
        %2352 = vmatpush1.msra.mxu0 0.0
        %2353 = vmatprep.subr.mxu0 0.0
        %2354 = vmatpush1.msra.mxu0 0.0
        %2355 = vmatprep.subr.mxu0 0.0
        %2356 = vmatpush1.msra.mxu0 0.0
        %2357 = vmatprep.subr.mxu0 0.0
        %2358 = vmatpush1.msra.mxu0 0.0
        %2359 = vmatprep.subr.mxu0 0.0
        %2360 = vmatpush1.msra.mxu0 0.0
        %2361 = vmatprep.subr.mxu0 0.0
        %2362 = vmatpush1.msra.mxu0 0.0
        %2363 = vmatprep.subr.mxu0 0.0
        %2364 = vmatpush1.msra.mxu0 0.0
        %2365 = vmatprep.subr.mxu0 0.0
        %2366 = vmatpush1.msra.mxu0 0.0
        %2367 = vmatprep.subr.mxu0 0.0
        %2368 = vmatpush1.msra.mxu0 0.0
        %2369 = vmatprep.subr.mxu0 0.0
        %2370 = vmatpush1.msra.mxu0 0.0
        %2371 = vmatprep.subr.mxu0 0.0
        %2372 = vmatpush1.msra.mxu0 0.0
        %2373 = vmatprep.subr.mxu0 0.0
        %2374 = vmatpush1.msra.mxu0 0.0
        %2375 = vmatprep.subr.mxu0 0.0
        %2376 = vmatpush1.msra.mxu0 0.0
        %2377 = vmatprep.subr.mxu0 0.0
        %2378 = vmatpush1.msra.mxu0 0.0
        %2379 = vmatprep.subr.mxu0 0.0
        %2380 = vmatpush1.msra.mxu0 0.0
        %2381 = vmatprep.subr.mxu0 0.0
        %2382 = vmatpush1.msra.mxu0 0.0
        %2383 = vmatprep.subr.mxu0 0.0
        %2384 = vmatpush1.msra.mxu0 0.0
        %2385 = vmatprep.subr.mxu0 0.0
        %2386 = vmatpush1.msra.mxu0 0.0
        %2387 = vmatprep.subr.mxu0 0.0
        %2388 = vmatpush1.msra.mxu0 0.0
        %2389 = vmatprep.subr.mxu0 0.0
        %2390 = vmatpush1.msra.mxu0 0.0
        %2391 = vmatprep.subr.mxu0 0.0
        %2392 = vmatpush1.msra.mxu0 0.0
        %2393 = vmatprep.subr.mxu0 0.0
        %2394 = vmatpush1.msra.mxu0 0.0
        %2395 = vmatprep.subr.mxu0 0.0
        %2396 = vmatpush1.msra.mxu0 0.0
        %2397 = vmatprep.mubr.f32.mxu0 0.0
        %v2398 = vand.u32 %v630, 4294901760
        %v2399 = vsub.f32 %v630, %v2398
        %2400 = vmatmul.mubr.f32.gmra.mrb[0].mxu0 %v2399
        %v2401 = vpop.f32.mrb[0].mxu0
        %v2402 = vadd.f32 %v2322, %v2401
        %v2403 = vpop.f32.mrb[0].mxu0
        %2404 = vmatprep.mubr.f32.mxu0 0.0
        %v2405 = vand.u32 %v633, 4294901760
        %v2406 = vsub.f32 %v633, %v2405
        %2407 = vmatmul.mubr.f32.gmra.mrb[0].mxu0 %v2406
        %v2408 = vpop.f32.mrb[0].mxu0
        %v2409 = vadd.f32 %v2328, %v2408
        %v2410 = vpop.f32.mrb[0].mxu0
        %2411 = vdwg.mxu0
        %2412 = vmatprep.subr.mxu0 0.0
        %v2413 = vand.u32 %v487, 4294901760
        %2414 = vmatpush1.msra.mxu0 %v2413
        %2415 = vmatprep.subr.mxu0 0.0
        %2416 = vmatpush1.msra.mxu0 0.0
        %2417 = vmatprep.subr.mxu0 0.0
        %2418 = vmatpush1.msra.mxu0 0.0
        %2419 = vmatprep.subr.mxu0 0.0
        %2420 = vmatpush1.msra.mxu0 0.0
        %2421 = vmatprep.subr.mxu0 0.0
        %2422 = vmatpush1.msra.mxu0 0.0
        %2423 = vmatprep.subr.mxu0 0.0
        %2424 = vmatpush1.msra.mxu0 0.0
        %2425 = vmatprep.subr.mxu0 0.0
        %2426 = vmatpush1.msra.mxu0 0.0
        %2427 = vmatprep.subr.mxu0 0.0
        %2428 = vmatpush1.msra.mxu0 0.0
        %2429 = vmatprep.subr.mxu0 0.0
        %2430 = vmatpush1.msra.mxu0 0.0
        %2431 = vmatprep.subr.mxu0 0.0
        %2432 = vmatpush1.msra.mxu0 0.0
        %2433 = vmatprep.subr.mxu0 0.0
        %2434 = vmatpush1.msra.mxu0 0.0
        %2435 = vmatprep.subr.mxu0 0.0
        %2436 = vmatpush1.msra.mxu0 0.0
        %2437 = vmatprep.subr.mxu0 0.0
        %2438 = vmatpush1.msra.mxu0 0.0
        %2439 = vmatprep.subr.mxu0 0.0
        %2440 = vmatpush1.msra.mxu0 0.0
        %2441 = vmatprep.subr.mxu0 0.0
        %2442 = vmatpush1.msra.mxu0 0.0
        %2443 = vmatprep.subr.mxu0 0.0
        %2444 = vmatpush1.msra.mxu0 0.0
        %2445 = vmatprep.subr.mxu0 0.0
        %2446 = vmatpush1.msra.mxu0 0.0
        %2447 = vmatprep.subr.mxu0 0.0
        %2448 = vmatpush1.msra.mxu0 0.0
        %2449 = vmatprep.subr.mxu0 0.0
        %2450 = vmatpush1.msra.mxu0 0.0
        %2451 = vmatprep.subr.mxu0 0.0
        %2452 = vmatpush1.msra.mxu0 0.0
        %2453 = vmatprep.subr.mxu0 0.0
        %2454 = vmatpush1.msra.mxu0 0.0
        %2455 = vmatprep.subr.mxu0 0.0
        %2456 = vmatpush1.msra.mxu0 0.0
        %2457 = vmatprep.subr.mxu0 0.0
        %2458 = vmatpush1.msra.mxu0 0.0
        %2459 = vmatprep.subr.mxu0 0.0
        %2460 = vmatpush1.msra.mxu0 0.0
        %2461 = vmatprep.subr.mxu0 0.0
        %2462 = vmatpush1.msra.mxu0 0.0
        %2463 = vmatprep.subr.mxu0 0.0
        %2464 = vmatpush1.msra.mxu0 0.0
        %2465 = vmatprep.subr.mxu0 0.0
        %2466 = vmatpush1.msra.mxu0 0.0
        %2467 = vmatprep.subr.mxu0 0.0
        %2468 = vmatpush1.msra.mxu0 0.0
        %2469 = vmatprep.subr.mxu0 0.0
        %2470 = vmatpush1.msra.mxu0 0.0
        %2471 = vmatprep.subr.mxu0 0.0
        %2472 = vmatpush1.msra.mxu0 0.0
        %2473 = vmatprep.subr.mxu0 0.0
        %2474 = vmatpush1.msra.mxu0 0.0
        %2475 = vmatprep.subr.mxu0 0.0
        %2476 = vmatpush1.msra.mxu0 0.0
        %2477 = vmatprep.mubr.f32.mxu0 0.0
        %v2478 = vand.u32 %v630, 4294901760
        %v2479 = vsub.f32 %v630, %v2478
        %v2480 = vand.u32 %v2479, 4294901760
        %2481 = vmatmul.mubr.f32.gmra.mrb[0].mxu0 %v2480
        %v2482 = vpop.f32.mrb[0].mxu0
        %v2483 = vadd.f32 %v2402, %v2482
        %v2484 = vpop.f32.mrb[0].mxu0
        %2485 = vmatprep.mubr.f32.mxu0 0.0
        %v2486 = vand.u32 %v633, 4294901760
        %v2487 = vsub.f32 %v633, %v2486
        %v2488 = vand.u32 %v2487, 4294901760
        %2489 = vmatmul.mubr.f32.gmra.mrb[0].mxu0 %v2488
        %v2490 = vpop.f32.mrb[0].mxu0
        %v2491 = vadd.f32 %v2409, %v2490
        %v2492 = vpop.f32.mrb[0].mxu0
        %2493 = vdwg.mxu0
        %2494 = vmatprep.subr.mxu0 0.0
        %v2495 = vand.u32 %v487, 4294901760
        %v2496 = vsub.f32 %v487, %v2495
        %v2497 = vand.u32 %v2496, 4294901760
        %2498 = vmatpush1.msra.mxu0 %v2497
        %2499 = vmatprep.subr.mxu0 0.0
        %2500 = vmatpush1.msra.mxu0 0.0
        %2501 = vmatprep.subr.mxu0 0.0
        %2502 = vmatpush1.msra.mxu0 0.0
        %2503 = vmatprep.subr.mxu0 0.0
        %2504 = vmatpush1.msra.mxu0 0.0
        %2505 = vmatprep.subr.mxu0 0.0
        %2506 = vmatpush1.msra.mxu0 0.0
        %2507 = vmatprep.subr.mxu0 0.0
        %2508 = vmatpush1.msra.mxu0 0.0
        %2509 = vmatprep.subr.mxu0 0.0
        %2510 = vmatpush1.msra.mxu0 0.0
        %2511 = vmatprep.subr.mxu0 0.0
        %2512 = vmatpush1.msra.mxu0 0.0
        %2513 = vmatprep.subr.mxu0 0.0
        %2514 = vmatpush1.msra.mxu0 0.0
        %2515 = vmatprep.subr.mxu0 0.0
        %2516 = vmatpush1.msra.mxu0 0.0
        %2517 = vmatprep.subr.mxu0 0.0
        %2518 = vmatpush1.msra.mxu0 0.0
        %2519 = vmatprep.subr.mxu0 0.0
        %2520 = vmatpush1.msra.mxu0 0.0
        %2521 = vmatprep.subr.mxu0 0.0
        %2522 = vmatpush1.msra.mxu0 0.0
        %2523 = vmatprep.subr.mxu0 0.0
        %2524 = vmatpush1.msra.mxu0 0.0
        %2525 = vmatprep.subr.mxu0 0.0
        %2526 = vmatpush1.msra.mxu0 0.0
        %2527 = vmatprep.subr.mxu0 0.0
        %2528 = vmatpush1.msra.mxu0 0.0
        %2529 = vmatprep.subr.mxu0 0.0
        %2530 = vmatpush1.msra.mxu0 0.0
        %2531 = vmatprep.subr.mxu0 0.0
        %2532 = vmatpush1.msra.mxu0 0.0
        %2533 = vmatprep.subr.mxu0 0.0
        %2534 = vmatpush1.msra.mxu0 0.0
        %2535 = vmatprep.subr.mxu0 0.0
        %2536 = vmatpush1.msra.mxu0 0.0
        %2537 = vmatprep.subr.mxu0 0.0
        %2538 = vmatpush1.msra.mxu0 0.0
        %2539 = vmatprep.subr.mxu0 0.0
        %2540 = vmatpush1.msra.mxu0 0.0
        %2541 = vmatprep.subr.mxu0 0.0
        %2542 = vmatpush1.msra.mxu0 0.0
        %2543 = vmatprep.subr.mxu0 0.0
        %2544 = vmatpush1.msra.mxu0 0.0
        %2545 = vmatprep.subr.mxu0 0.0
        %2546 = vmatpush1.msra.mxu0 0.0
        %2547 = vmatprep.subr.mxu0 0.0
        %2548 = vmatpush1.msra.mxu0 0.0
        %2549 = vmatprep.subr.mxu0 0.0
        %2550 = vmatpush1.msra.mxu0 0.0
        %2551 = vmatprep.subr.mxu0 0.0
        %2552 = vmatpush1.msra.mxu0 0.0
        %2553 = vmatprep.subr.mxu0 0.0
        %2554 = vmatpush1.msra.mxu0 0.0
        %2555 = vmatprep.subr.mxu0 0.0
        %2556 = vmatpush1.msra.mxu0 0.0
        %2557 = vmatprep.subr.mxu0 0.0
        %2558 = vmatpush1.msra.mxu0 0.0
        %2559 = vmatprep.subr.mxu0 0.0
        %2560 = vmatpush1.msra.mxu0 0.0
        %2561 = vmatprep.mubr.f32.mxu0 0.0
        %v2562 = vand.u32 %v630, 4294901760
        %2563 = vmatmul.mubr.f32.gmra.mrb[0].mxu0 %v2562
        %v2564 = vpop.f32.mrb[0].mxu0
        %v2565 = vadd.f32 %v2483, %v2564
        %v2566 = vpop.f32.mrb[0].mxu0
        %2567 = vmatprep.mubr.f32.mxu0 0.0
        %v2568 = vand.u32 %v633, 4294901760
        %2569 = vmatmul.mubr.f32.gmra.mrb[0].mxu0 %v2568
        %v2570 = vpop.f32.mrb[0].mxu0
        %v2571 = vadd.f32 %v2491, %v2570
        %v2572 = vpop.f32.mrb[0].mxu0
        %2573 = vdwg.mxu0
        %2574 = vmatprep.subr.mxu0 0.0
        %v2575 = vand.u32 %v487, 4294901760
        %2576 = vmatpush1.msra.mxu0 %v2575
        %2577 = vmatprep.subr.mxu0 0.0
        %2578 = vmatpush1.msra.mxu0 0.0
        %2579 = vmatprep.subr.mxu0 0.0
        %2580 = vmatpush1.msra.mxu0 0.0
        %2581 = vmatprep.subr.mxu0 0.0
        %2582 = vmatpush1.msra.mxu0 0.0
        %2583 = vmatprep.subr.mxu0 0.0
        %2584 = vmatpush1.msra.mxu0 0.0
        %2585 = vmatprep.subr.mxu0 0.0
        %2586 = vmatpush1.msra.mxu0 0.0
        %2587 = vmatprep.subr.mxu0 0.0
        %2588 = vmatpush1.msra.mxu0 0.0
        %2589 = vmatprep.subr.mxu0 0.0
        %2590 = vmatpush1.msra.mxu0 0.0
        %2591 = vmatprep.subr.mxu0 0.0
        %2592 = vmatpush1.msra.mxu0 0.0
        %2593 = vmatprep.subr.mxu0 0.0
        %2594 = vmatpush1.msra.mxu0 0.0
        %2595 = vmatprep.subr.mxu0 0.0
        %2596 = vmatpush1.msra.mxu0 0.0
        %2597 = vmatprep.subr.mxu0 0.0
        %2598 = vmatpush1.msra.mxu0 0.0
        %2599 = vmatprep.subr.mxu0 0.0
        %2600 = vmatpush1.msra.mxu0 0.0
        %2601 = vmatprep.subr.mxu0 0.0
        %2602 = vmatpush1.msra.mxu0 0.0
        %2603 = vmatprep.subr.mxu0 0.0
        %2604 = vmatpush1.msra.mxu0 0.0
        %2605 = vmatprep.subr.mxu0 0.0
        %2606 = vmatpush1.msra.mxu0 0.0
        %2607 = vmatprep.subr.mxu0 0.0
        %2608 = vmatpush1.msra.mxu0 0.0
        %2609 = vmatprep.subr.mxu0 0.0
        %2610 = vmatpush1.msra.mxu0 0.0
        %2611 = vmatprep.subr.mxu0 0.0
        %2612 = vmatpush1.msra.mxu0 0.0
        %2613 = vmatprep.subr.mxu0 0.0
        %2614 = vmatpush1.msra.mxu0 0.0
        %2615 = vmatprep.subr.mxu0 0.0
        %2616 = vmatpush1.msra.mxu0 0.0
        %2617 = vmatprep.subr.mxu0 0.0
        %2618 = vmatpush1.msra.mxu0 0.0
        %2619 = vmatprep.subr.mxu0 0.0
        %2620 = vmatpush1.msra.mxu0 0.0
        %2621 = vmatprep.subr.mxu0 0.0
        %2622 = vmatpush1.msra.mxu0 0.0
        %2623 = vmatprep.subr.mxu0 0.0
        %2624 = vmatpush1.msra.mxu0 0.0
        %2625 = vmatprep.subr.mxu0 0.0
        %2626 = vmatpush1.msra.mxu0 0.0
        %2627 = vmatprep.subr.mxu0 0.0
        %2628 = vmatpush1.msra.mxu0 0.0
        %2629 = vmatprep.subr.mxu0 0.0
        %2630 = vmatpush1.msra.mxu0 0.0
        %2631 = vmatprep.subr.mxu0 0.0
        %2632 = vmatpush1.msra.mxu0 0.0
        %2633 = vmatprep.subr.mxu0 0.0
        %2634 = vmatpush1.msra.mxu0 0.0
        %2635 = vmatprep.subr.mxu0 0.0
        %2636 = vmatpush1.msra.mxu0 0.0
        %2637 = vmatprep.subr.mxu0 0.0
        %2638 = vmatpush1.msra.mxu0 0.0
        %2639 = vmatprep.mubr.f32.mxu0 0.0
        %v2640 = vand.u32 %v630, 4294901760
        %2641 = vmatmul.mubr.f32.gmra.mrb[0].mxu0 %v2640
        %v2642 = vpop.f32.mrb[0].mxu0
        %v2643 = vadd.f32 %v2565, %v2642
        %v2644 = vpop.f32.mrb[0].mxu0
        %2645 = vmatprep.mubr.f32.mxu0 0.0
        %v2646 = vand.u32 %v633, 4294901760
        %2647 = vmatmul.mubr.f32.gmra.mrb[0].mxu0 %v2646
        %v2648 = vpop.f32.mrb[0].mxu0
        %v2649 = vadd.f32 %v2571, %v2648
        %v2650 = vpop.f32.mrb[0].mxu0
        %2651 = vdwg.mxu0
        %v2653 = vsel %vm1142, %v480, 0
        %2655 = vmatprep.subr.mxu0 0.0
        %v2656 = vand.u32 %v2643, 4294901760
        %2657 = vmatpush1.msra.mxu0 %v2656
        %2658 = vmatprep.subr.mxu0 0.0
        %v2659 = vand.u32 %v2649, 4294901760
        %2660 = vmatpush1.msra.mxu0 %v2659
        %2661 = vmatprep.subr.mxu0 0.0
        %2662 = vmatpush1.msra.mxu0 0.0
        %2663 = vmatprep.subr.mxu0 0.0
        %2664 = vmatpush1.msra.mxu0 0.0
        %2665 = vmatprep.subr.mxu0 0.0
        %2666 = vmatpush1.msra.mxu0 0.0
        %2667 = vmatprep.subr.mxu0 0.0
        %2668 = vmatpush1.msra.mxu0 0.0
        %2669 = vmatprep.subr.mxu0 0.0
        %2670 = vmatpush1.msra.mxu0 0.0
        %2671 = vmatprep.subr.mxu0 0.0
        %2672 = vmatpush1.msra.mxu0 0.0
        %2673 = vmatprep.subr.mxu0 0.0
        %2674 = vmatpush1.msra.mxu0 0.0
        %2675 = vmatprep.subr.mxu0 0.0
        %2676 = vmatpush1.msra.mxu0 0.0
        %2677 = vmatprep.subr.mxu0 0.0
        %2678 = vmatpush1.msra.mxu0 0.0
        %2679 = vmatprep.subr.mxu0 0.0
        %2680 = vmatpush1.msra.mxu0 0.0
        %2681 = vmatprep.subr.mxu0 0.0
        %2682 = vmatpush1.msra.mxu0 0.0
        %2683 = vmatprep.subr.mxu0 0.0
        %2684 = vmatpush1.msra.mxu0 0.0
        %2685 = vmatprep.subr.mxu0 0.0
        %2686 = vmatpush1.msra.mxu0 0.0
        %2687 = vmatprep.subr.mxu0 0.0
        %2688 = vmatpush1.msra.mxu0 0.0
        %2689 = vmatprep.subr.mxu0 0.0
        %2690 = vmatpush1.msra.mxu0 0.0
        %2691 = vmatprep.subr.mxu0 0.0
        %2692 = vmatpush1.msra.mxu0 0.0
        %2693 = vmatprep.subr.mxu0 0.0
        %2694 = vmatpush1.msra.mxu0 0.0
        %2695 = vmatprep.subr.mxu0 0.0
        %2696 = vmatpush1.msra.mxu0 0.0
        %2697 = vmatprep.subr.mxu0 0.0
        %2698 = vmatpush1.msra.mxu0 0.0
        %2699 = vmatprep.subr.mxu0 0.0
        %2700 = vmatpush1.msra.mxu0 0.0
        %2701 = vmatprep.subr.mxu0 0.0
        %2702 = vmatpush1.msra.mxu0 0.0
        %2703 = vmatprep.subr.mxu0 0.0
        %2704 = vmatpush1.msra.mxu0 0.0
        %2705 = vmatprep.subr.mxu0 0.0
        %2706 = vmatpush1.msra.mxu0 0.0
        %2707 = vmatprep.subr.mxu0 0.0
        %2708 = vmatpush1.msra.mxu0 0.0
        %2709 = vmatprep.subr.mxu0 0.0
        %2710 = vmatpush1.msra.mxu0 0.0
        %2711 = vmatprep.subr.mxu0 0.0
        %2712 = vmatpush1.msra.mxu0 0.0
        %2713 = vmatprep.subr.mxu0 0.0
        %2714 = vmatpush1.msra.mxu0 0.0
        %2715 = vmatprep.subr.mxu0 0.0
        %2716 = vmatpush1.msra.mxu0 0.0
        %2717 = vmatprep.subr.mxu0 0.0
        %2718 = vmatpush1.msra.mxu0 0.0
        %2719 = vmatprep.subr.mxu0 0.0
        %2720 = vmatpush1.msra.mxu0 0.0
        %2721 = vmatprep.mubr.f32.mxu0 0.0
        %v2722 = vand.u32 %v2653, 4294901760
        %v2723 = vsub.f32 %v2653, %v2722
        %v2724 = vand.u32 %v2723, 4294901760
        %v2725 = vsub.f32 %v2723, %v2724
        %v2726 = vand.u32 %v2725, 4294901760
        %2727 = vmatmul.mubr.f32.gmra.mrb[0].mxu0 %v2726
        %v2728 = vpop.f32.mrb[0].mxu0
        %v2729 = vadd.f32 0.0, %v2728
        %v2730 = vpop.f32.mrb[0].mxu0
        %2731 = vdwg.mxu0
        %2732 = vmatprep.subr.mxu0 0.0
        %v2733 = vand.u32 %v2643, 4294901760
        %v2734 = vsub.f32 %v2643, %v2733
        %v2735 = vand.u32 %v2734, 4294901760
        %v2736 = vsub.f32 %v2734, %v2735
        %v2737 = vand.u32 %v2736, 4294901760
        %2738 = vmatpush1.msra.mxu0 %v2737
        %2739 = vmatprep.subr.mxu0 0.0
        %v2740 = vand.u32 %v2649, 4294901760
        %v2741 = vsub.f32 %v2649, %v2740
        %v2742 = vand.u32 %v2741, 4294901760
        %v2743 = vsub.f32 %v2741, %v2742
        %v2744 = vand.u32 %v2743, 4294901760
        %2745 = vmatpush1.msra.mxu0 %v2744
        %2746 = vmatprep.subr.mxu0 0.0
        %2747 = vmatpush1.msra.mxu0 0.0
        %2748 = vmatprep.subr.mxu0 0.0
        %2749 = vmatpush1.msra.mxu0 0.0
        %2750 = vmatprep.subr.mxu0 0.0
        %2751 = vmatpush1.msra.mxu0 0.0
        %2752 = vmatprep.subr.mxu0 0.0
        %2753 = vmatpush1.msra.mxu0 0.0
        %2754 = vmatprep.subr.mxu0 0.0
        %2755 = vmatpush1.msra.mxu0 0.0
        %2756 = vmatprep.subr.mxu0 0.0
        %2757 = vmatpush1.msra.mxu0 0.0
        %2758 = vmatprep.subr.mxu0 0.0
        %2759 = vmatpush1.msra.mxu0 0.0
        %2760 = vmatprep.subr.mxu0 0.0
        %2761 = vmatpush1.msra.mxu0 0.0
        %2762 = vmatprep.subr.mxu0 0.0
        %2763 = vmatpush1.msra.mxu0 0.0
        %2764 = vmatprep.subr.mxu0 0.0
        %2765 = vmatpush1.msra.mxu0 0.0
        %2766 = vmatprep.subr.mxu0 0.0
        %2767 = vmatpush1.msra.mxu0 0.0
        %2768 = vmatprep.subr.mxu0 0.0
        %2769 = vmatpush1.msra.mxu0 0.0
        %2770 = vmatprep.subr.mxu0 0.0
        %2771 = vmatpush1.msra.mxu0 0.0
        %2772 = vmatprep.subr.mxu0 0.0
        %2773 = vmatpush1.msra.mxu0 0.0
        %2774 = vmatprep.subr.mxu0 0.0
        %2775 = vmatpush1.msra.mxu0 0.0
        %2776 = vmatprep.subr.mxu0 0.0
        %2777 = vmatpush1.msra.mxu0 0.0
        %2778 = vmatprep.subr.mxu0 0.0
        %2779 = vmatpush1.msra.mxu0 0.0
        %2780 = vmatprep.subr.mxu0 0.0
        %2781 = vmatpush1.msra.mxu0 0.0
        %2782 = vmatprep.subr.mxu0 0.0
        %2783 = vmatpush1.msra.mxu0 0.0
        %2784 = vmatprep.subr.mxu0 0.0
        %2785 = vmatpush1.msra.mxu0 0.0
        %2786 = vmatprep.subr.mxu0 0.0
        %2787 = vmatpush1.msra.mxu0 0.0
        %2788 = vmatprep.subr.mxu0 0.0
        %2789 = vmatpush1.msra.mxu0 0.0
        %2790 = vmatprep.subr.mxu0 0.0
        %2791 = vmatpush1.msra.mxu0 0.0
        %2792 = vmatprep.subr.mxu0 0.0
        %2793 = vmatpush1.msra.mxu0 0.0
        %2794 = vmatprep.subr.mxu0 0.0
        %2795 = vmatpush1.msra.mxu0 0.0
        %2796 = vmatprep.subr.mxu0 0.0
        %2797 = vmatpush1.msra.mxu0 0.0
        %2798 = vmatprep.subr.mxu0 0.0
        %2799 = vmatpush1.msra.mxu0 0.0
        %2800 = vmatprep.subr.mxu0 0.0
        %2801 = vmatpush1.msra.mxu0 0.0
        %2802 = vmatprep.subr.mxu0 0.0
        %2803 = vmatpush1.msra.mxu0 0.0
        %2804 = vmatprep.subr.mxu0 0.0
        %2805 = vmatpush1.msra.mxu0 0.0
        %2806 = vmatprep.mubr.f32.mxu0 0.0
        %v2807 = vand.u32 %v2653, 4294901760
        %2808 = vmatmul.mubr.f32.gmra.mrb[0].mxu0 %v2807
        %v2809 = vpop.f32.mrb[0].mxu0
        %v2810 = vadd.f32 %v2729, %v2809
        %v2811 = vpop.f32.mrb[0].mxu0
        %2812 = vdwg.mxu0
        %2813 = vmatprep.subr.mxu0 0.0
        %v2814 = vand.u32 %v2643, 4294901760
        %v2815 = vsub.f32 %v2643, %v2814
        %2816 = vmatpush1.msra.mxu0 %v2815
        %2817 = vmatprep.subr.mxu0 0.0
        %v2818 = vand.u32 %v2649, 4294901760
        %v2819 = vsub.f32 %v2649, %v2818
        %2820 = vmatpush1.msra.mxu0 %v2819
        %2821 = vmatprep.subr.mxu0 0.0
        %2822 = vmatpush1.msra.mxu0 0.0
        %2823 = vmatprep.subr.mxu0 0.0
        %2824 = vmatpush1.msra.mxu0 0.0
        %2825 = vmatprep.subr.mxu0 0.0
        %2826 = vmatpush1.msra.mxu0 0.0
        %2827 = vmatprep.subr.mxu0 0.0
        %2828 = vmatpush1.msra.mxu0 0.0
        %2829 = vmatprep.subr.mxu0 0.0
        %2830 = vmatpush1.msra.mxu0 0.0
        %2831 = vmatprep.subr.mxu0 0.0
        %2832 = vmatpush1.msra.mxu0 0.0
        %2833 = vmatprep.subr.mxu0 0.0
        %2834 = vmatpush1.msra.mxu0 0.0
        %2835 = vmatprep.subr.mxu0 0.0
        %2836 = vmatpush1.msra.mxu0 0.0
        %2837 = vmatprep.subr.mxu0 0.0
        %2838 = vmatpush1.msra.mxu0 0.0
        %2839 = vmatprep.subr.mxu0 0.0
        %2840 = vmatpush1.msra.mxu0 0.0
        %2841 = vmatprep.subr.mxu0 0.0
        %2842 = vmatpush1.msra.mxu0 0.0
        %2843 = vmatprep.subr.mxu0 0.0
        %2844 = vmatpush1.msra.mxu0 0.0
        %2845 = vmatprep.subr.mxu0 0.0
        %2846 = vmatpush1.msra.mxu0 0.0
        %2847 = vmatprep.subr.mxu0 0.0
        %2848 = vmatpush1.msra.mxu0 0.0
        %2849 = vmatprep.subr.mxu0 0.0
        %2850 = vmatpush1.msra.mxu0 0.0
        %2851 = vmatprep.subr.mxu0 0.0
        %2852 = vmatpush1.msra.mxu0 0.0
        %2853 = vmatprep.subr.mxu0 0.0
        %2854 = vmatpush1.msra.mxu0 0.0
        %2855 = vmatprep.subr.mxu0 0.0
        %2856 = vmatpush1.msra.mxu0 0.0
        %2857 = vmatprep.subr.mxu0 0.0
        %2858 = vmatpush1.msra.mxu0 0.0
        %2859 = vmatprep.subr.mxu0 0.0
        %2860 = vmatpush1.msra.mxu0 0.0
        %2861 = vmatprep.subr.mxu0 0.0
        %2862 = vmatpush1.msra.mxu0 0.0
        %2863 = vmatprep.subr.mxu0 0.0
        %2864 = vmatpush1.msra.mxu0 0.0
        %2865 = vmatprep.subr.mxu0 0.0
        %2866 = vmatpush1.msra.mxu0 0.0
        %2867 = vmatprep.subr.mxu0 0.0
        %2868 = vmatpush1.msra.mxu0 0.0
        %2869 = vmatprep.subr.mxu0 0.0
        %2870 = vmatpush1.msra.mxu0 0.0
        %2871 = vmatprep.subr.mxu0 0.0
        %2872 = vmatpush1.msra.mxu0 0.0
        %2873 = vmatprep.subr.mxu0 0.0
        %2874 = vmatpush1.msra.mxu0 0.0
        %2875 = vmatprep.subr.mxu0 0.0
        %2876 = vmatpush1.msra.mxu0 0.0
        %2877 = vmatprep.subr.mxu0 0.0
        %2878 = vmatpush1.msra.mxu0 0.0
        %2879 = vmatprep.subr.mxu0 0.0
        %2880 = vmatpush1.msra.mxu0 0.0
        %2881 = vmatprep.mubr.f32.mxu0 0.0
        %v2882 = vand.u32 %v2653, 4294901760
        %v2883 = vsub.f32 %v2653, %v2882
        %2884 = vmatmul.mubr.f32.gmra.mrb[0].mxu0 %v2883
        %v2885 = vpop.f32.mrb[0].mxu0
        %v2886 = vadd.f32 %v2810, %v2885
        %v2887 = vpop.f32.mrb[0].mxu0
        %2888 = vdwg.mxu0
        %2889 = vmatprep.subr.mxu0 0.0
        %v2890 = vand.u32 %v2643, 4294901760
        %2891 = vmatpush1.msra.mxu0 %v2890
        %2892 = vmatprep.subr.mxu0 0.0
        %v2893 = vand.u32 %v2649, 4294901760
        %2894 = vmatpush1.msra.mxu0 %v2893
        %2895 = vmatprep.subr.mxu0 0.0
        %2896 = vmatpush1.msra.mxu0 0.0
        %2897 = vmatprep.subr.mxu0 0.0
        %2898 = vmatpush1.msra.mxu0 0.0
        %2899 = vmatprep.subr.mxu0 0.0
        %2900 = vmatpush1.msra.mxu0 0.0
        %2901 = vmatprep.subr.mxu0 0.0
        %2902 = vmatpush1.msra.mxu0 0.0
        %2903 = vmatprep.subr.mxu0 0.0
        %2904 = vmatpush1.msra.mxu0 0.0
        %2905 = vmatprep.subr.mxu0 0.0
        %2906 = vmatpush1.msra.mxu0 0.0
        %2907 = vmatprep.subr.mxu0 0.0
        %2908 = vmatpush1.msra.mxu0 0.0
        %2909 = vmatprep.subr.mxu0 0.0
        %2910 = vmatpush1.msra.mxu0 0.0
        %2911 = vmatprep.subr.mxu0 0.0
        %2912 = vmatpush1.msra.mxu0 0.0
        %2913 = vmatprep.subr.mxu0 0.0
        %2914 = vmatpush1.msra.mxu0 0.0
        %2915 = vmatprep.subr.mxu0 0.0
        %2916 = vmatpush1.msra.mxu0 0.0
        %2917 = vmatprep.subr.mxu0 0.0
        %2918 = vmatpush1.msra.mxu0 0.0
        %2919 = vmatprep.subr.mxu0 0.0
        %2920 = vmatpush1.msra.mxu0 0.0
        %2921 = vmatprep.subr.mxu0 0.0
        %2922 = vmatpush1.msra.mxu0 0.0
        %2923 = vmatprep.subr.mxu0 0.0
        %2924 = vmatpush1.msra.mxu0 0.0
        %2925 = vmatprep.subr.mxu0 0.0
        %2926 = vmatpush1.msra.mxu0 0.0
        %2927 = vmatprep.subr.mxu0 0.0
        %2928 = vmatpush1.msra.mxu0 0.0
        %2929 = vmatprep.subr.mxu0 0.0
        %2930 = vmatpush1.msra.mxu0 0.0
        %2931 = vmatprep.subr.mxu0 0.0
        %2932 = vmatpush1.msra.mxu0 0.0
        %2933 = vmatprep.subr.mxu0 0.0
        %2934 = vmatpush1.msra.mxu0 0.0
        %2935 = vmatprep.subr.mxu0 0.0
        %2936 = vmatpush1.msra.mxu0 0.0
        %2937 = vmatprep.subr.mxu0 0.0
        %2938 = vmatpush1.msra.mxu0 0.0
        %2939 = vmatprep.subr.mxu0 0.0
        %2940 = vmatpush1.msra.mxu0 0.0
        %2941 = vmatprep.subr.mxu0 0.0
        %2942 = vmatpush1.msra.mxu0 0.0
        %2943 = vmatprep.subr.mxu0 0.0
        %2944 = vmatpush1.msra.mxu0 0.0
        %2945 = vmatprep.subr.mxu0 0.0
        %2946 = vmatpush1.msra.mxu0 0.0
        %2947 = vmatprep.subr.mxu0 0.0
        %2948 = vmatpush1.msra.mxu0 0.0
        %2949 = vmatprep.subr.mxu0 0.0
        %2950 = vmatpush1.msra.mxu0 0.0
        %2951 = vmatprep.subr.mxu0 0.0
        %2952 = vmatpush1.msra.mxu0 0.0
        %2953 = vmatprep.subr.mxu0 0.0
        %2954 = vmatpush1.msra.mxu0 0.0
        %2955 = vmatprep.mubr.f32.mxu0 0.0
        %v2956 = vand.u32 %v2653, 4294901760
        %v2957 = vsub.f32 %v2653, %v2956
        %v2958 = vand.u32 %v2957, 4294901760
        %2959 = vmatmul.mubr.f32.gmra.mrb[0].mxu0 %v2958
        %v2960 = vpop.f32.mrb[0].mxu0
        %v2961 = vadd.f32 %v2886, %v2960
        %v2962 = vpop.f32.mrb[0].mxu0
        %2963 = vdwg.mxu0
        %2964 = vmatprep.subr.mxu0 0.0
        %v2965 = vand.u32 %v2643, 4294901760
        %v2966 = vsub.f32 %v2643, %v2965
        %v2967 = vand.u32 %v2966, 4294901760
        %2968 = vmatpush1.msra.mxu0 %v2967
        %2969 = vmatprep.subr.mxu0 0.0
        %v2970 = vand.u32 %v2649, 4294901760
        %v2971 = vsub.f32 %v2649, %v2970
        %v2972 = vand.u32 %v2971, 4294901760
        %2973 = vmatpush1.msra.mxu0 %v2972
        %2974 = vmatprep.subr.mxu0 0.0
        %2975 = vmatpush1.msra.mxu0 0.0
        %2976 = vmatprep.subr.mxu0 0.0
        %2977 = vmatpush1.msra.mxu0 0.0
        %2978 = vmatprep.subr.mxu0 0.0
        %2979 = vmatpush1.msra.mxu0 0.0
        %2980 = vmatprep.subr.mxu0 0.0
        %2981 = vmatpush1.msra.mxu0 0.0
        %2982 = vmatprep.subr.mxu0 0.0
        %2983 = vmatpush1.msra.mxu0 0.0
        %2984 = vmatprep.subr.mxu0 0.0
        %2985 = vmatpush1.msra.mxu0 0.0
        %2986 = vmatprep.subr.mxu0 0.0
        %2987 = vmatpush1.msra.mxu0 0.0
        %2988 = vmatprep.subr.mxu0 0.0
        %2989 = vmatpush1.msra.mxu0 0.0
        %2990 = vmatprep.subr.mxu0 0.0
        %2991 = vmatpush1.msra.mxu0 0.0
        %2992 = vmatprep.subr.mxu0 0.0
        %2993 = vmatpush1.msra.mxu0 0.0
        %2994 = vmatprep.subr.mxu0 0.0
        %2995 = vmatpush1.msra.mxu0 0.0
        %2996 = vmatprep.subr.mxu0 0.0
        %2997 = vmatpush1.msra.mxu0 0.0
        %2998 = vmatprep.subr.mxu0 0.0
        %2999 = vmatpush1.msra.mxu0 0.0
        %3000 = vmatprep.subr.mxu0 0.0
        %3001 = vmatpush1.msra.mxu0 0.0
        %3002 = vmatprep.subr.mxu0 0.0
        %3003 = vmatpush1.msra.mxu0 0.0
        %3004 = vmatprep.subr.mxu0 0.0
        %3005 = vmatpush1.msra.mxu0 0.0
        %3006 = vmatprep.subr.mxu0 0.0
        %3007 = vmatpush1.msra.mxu0 0.0
        %3008 = vmatprep.subr.mxu0 0.0
        %3009 = vmatpush1.msra.mxu0 0.0
        %3010 = vmatprep.subr.mxu0 0.0
        %3011 = vmatpush1.msra.mxu0 0.0
        %3012 = vmatprep.subr.mxu0 0.0
        %3013 = vmatpush1.msra.mxu0 0.0
        %3014 = vmatprep.subr.mxu0 0.0
        %3015 = vmatpush1.msra.mxu0 0.0
        %3016 = vmatprep.subr.mxu0 0.0
        %3017 = vmatpush1.msra.mxu0 0.0
        %3018 = vmatprep.subr.mxu0 0.0
        %3019 = vmatpush1.msra.mxu0 0.0
        %3020 = vmatprep.subr.mxu0 0.0
        %3021 = vmatpush1.msra.mxu0 0.0
        %3022 = vmatprep.subr.mxu0 0.0
        %3023 = vmatpush1.msra.mxu0 0.0
        %3024 = vmatprep.subr.mxu0 0.0
        %3025 = vmatpush1.msra.mxu0 0.0
        %3026 = vmatprep.subr.mxu0 0.0
        %3027 = vmatpush1.msra.mxu0 0.0
        %3028 = vmatprep.subr.mxu0 0.0
        %3029 = vmatpush1.msra.mxu0 0.0
        %3030 = vmatprep.subr.mxu0 0.0
        %3031 = vmatpush1.msra.mxu0 0.0
        %3032 = vmatprep.subr.mxu0 0.0
        %3033 = vmatpush1.msra.mxu0 0.0
        %3034 = vmatprep.mubr.f32.mxu0 0.0
        %v3035 = vand.u32 %v2653, 4294901760
        %3036 = vmatmul.mubr.f32.gmra.mrb[0].mxu0 %v3035
        %v3037 = vpop.f32.mrb[0].mxu0
        %v3038 = vadd.f32 %v2961, %v3037
        %v3039 = vpop.f32.mrb[0].mxu0
        %3040 = vdwg.mxu0
        %3041 = vmatprep.subr.mxu0 0.0
        %v3042 = vand.u32 %v2643, 4294901760
        %3043 = vmatpush1.msra.mxu0 %v3042
        %3044 = vmatprep.subr.mxu0 0.0
        %v3045 = vand.u32 %v2649, 4294901760
        %3046 = vmatpush1.msra.mxu0 %v3045
        %3047 = vmatprep.subr.mxu0 0.0
        %3048 = vmatpush1.msra.mxu0 0.0
        %3049 = vmatprep.subr.mxu0 0.0
        %3050 = vmatpush1.msra.mxu0 0.0
        %3051 = vmatprep.subr.mxu0 0.0
        %3052 = vmatpush1.msra.mxu0 0.0
        %3053 = vmatprep.subr.mxu0 0.0
        %3054 = vmatpush1.msra.mxu0 0.0
        %3055 = vmatprep.subr.mxu0 0.0
        %3056 = vmatpush1.msra.mxu0 0.0
        %3057 = vmatprep.subr.mxu0 0.0
        %3058 = vmatpush1.msra.mxu0 0.0
        %3059 = vmatprep.subr.mxu0 0.0
        %3060 = vmatpush1.msra.mxu0 0.0
        %3061 = vmatprep.subr.mxu0 0.0
        %3062 = vmatpush1.msra.mxu0 0.0
        %3063 = vmatprep.subr.mxu0 0.0
        %3064 = vmatpush1.msra.mxu0 0.0
        %3065 = vmatprep.subr.mxu0 0.0
        %3066 = vmatpush1.msra.mxu0 0.0
        %3067 = vmatprep.subr.mxu0 0.0
        %3068 = vmatpush1.msra.mxu0 0.0
        %3069 = vmatprep.subr.mxu0 0.0
        %3070 = vmatpush1.msra.mxu0 0.0
        %3071 = vmatprep.subr.mxu0 0.0
        %3072 = vmatpush1.msra.mxu0 0.0
        %3073 = vmatprep.subr.mxu0 0.0
        %3074 = vmatpush1.msra.mxu0 0.0
        %3075 = vmatprep.subr.mxu0 0.0
        %3076 = vmatpush1.msra.mxu0 0.0
        %3077 = vmatprep.subr.mxu0 0.0
        %3078 = vmatpush1.msra.mxu0 0.0
        %3079 = vmatprep.subr.mxu0 0.0
        %3080 = vmatpush1.msra.mxu0 0.0
        %3081 = vmatprep.subr.mxu0 0.0
        %3082 = vmatpush1.msra.mxu0 0.0
        %3083 = vmatprep.subr.mxu0 0.0
        %3084 = vmatpush1.msra.mxu0 0.0
        %3085 = vmatprep.subr.mxu0 0.0
        %3086 = vmatpush1.msra.mxu0 0.0
        %3087 = vmatprep.subr.mxu0 0.0
        %3088 = vmatpush1.msra.mxu0 0.0
        %3089 = vmatprep.subr.mxu0 0.0
        %3090 = vmatpush1.msra.mxu0 0.0
        %3091 = vmatprep.subr.mxu0 0.0
        %3092 = vmatpush1.msra.mxu0 0.0
        %3093 = vmatprep.subr.mxu0 0.0
        %3094 = vmatpush1.msra.mxu0 0.0
        %3095 = vmatprep.subr.mxu0 0.0
        %3096 = vmatpush1.msra.mxu0 0.0
        %3097 = vmatprep.subr.mxu0 0.0
        %3098 = vmatpush1.msra.mxu0 0.0
        %3099 = vmatprep.subr.mxu0 0.0
        %3100 = vmatpush1.msra.mxu0 0.0
        %3101 = vmatprep.subr.mxu0 0.0
        %3102 = vmatpush1.msra.mxu0 0.0
        %3103 = vmatprep.subr.mxu0 0.0
        %3104 = vmatpush1.msra.mxu0 0.0
        %3105 = vmatprep.subr.mxu0 0.0
        %3106 = vmatpush1.msra.mxu0 0.0
        %3107 = vmatprep.mubr.f32.mxu0 0.0
        %v3108 = vand.u32 %v2653, 4294901760
        %3109 = vmatmul.mubr.f32.gmra.mrb[0].mxu0 %v3108
        %v3110 = vpop.f32.mrb[0].mxu0
        %v3111 = vadd.f32 %v3038, %v3110
        %v3112 = vpop.f32.mrb[0].mxu0
        %3113 = vdwg.mxu0
        %v3115 = vsel %vm1142, %v479, 0
        %3117 = vmatprep.subr.mxu0 0.0
        %v3118 = vand.u32 %v2154, 4294901760
        %3119 = vmatpush1.msra.mxu0 %v3118
        %3120 = vmatprep.subr.mxu0 0.0
        %v3121 = vand.u32 %v2160, 4294901760
        %3122 = vmatpush1.msra.mxu0 %v3121
        %3123 = vmatprep.subr.mxu0 0.0
        %3124 = vmatpush1.msra.mxu0 0.0
        %3125 = vmatprep.subr.mxu0 0.0
        %3126 = vmatpush1.msra.mxu0 0.0
        %3127 = vmatprep.subr.mxu0 0.0
        %3128 = vmatpush1.msra.mxu0 0.0
        %3129 = vmatprep.subr.mxu0 0.0
        %3130 = vmatpush1.msra.mxu0 0.0
        %3131 = vmatprep.subr.mxu0 0.0
        %3132 = vmatpush1.msra.mxu0 0.0
        %3133 = vmatprep.subr.mxu0 0.0
        %3134 = vmatpush1.msra.mxu0 0.0
        %3135 = vmatprep.subr.mxu0 0.0
        %3136 = vmatpush1.msra.mxu0 0.0
        %3137 = vmatprep.subr.mxu0 0.0
        %3138 = vmatpush1.msra.mxu0 0.0
        %3139 = vmatprep.subr.mxu0 0.0
        %3140 = vmatpush1.msra.mxu0 0.0
        %3141 = vmatprep.subr.mxu0 0.0
        %3142 = vmatpush1.msra.mxu0 0.0
        %3143 = vmatprep.subr.mxu0 0.0
        %3144 = vmatpush1.msra.mxu0 0.0
        %3145 = vmatprep.subr.mxu0 0.0
        %3146 = vmatpush1.msra.mxu0 0.0
        %3147 = vmatprep.subr.mxu0 0.0
        %3148 = vmatpush1.msra.mxu0 0.0
        %3149 = vmatprep.subr.mxu0 0.0
        %3150 = vmatpush1.msra.mxu0 0.0
        %3151 = vmatprep.subr.mxu0 0.0
        %3152 = vmatpush1.msra.mxu0 0.0
        %3153 = vmatprep.subr.mxu0 0.0
        %3154 = vmatpush1.msra.mxu0 0.0
        %3155 = vmatprep.subr.mxu0 0.0
        %3156 = vmatpush1.msra.mxu0 0.0
        %3157 = vmatprep.subr.mxu0 0.0
        %3158 = vmatpush1.msra.mxu0 0.0
        %3159 = vmatprep.subr.mxu0 0.0
        %3160 = vmatpush1.msra.mxu0 0.0
        %3161 = vmatprep.subr.mxu0 0.0
        %3162 = vmatpush1.msra.mxu0 0.0
        %3163 = vmatprep.subr.mxu0 0.0
        %3164 = vmatpush1.msra.mxu0 0.0
        %3165 = vmatprep.subr.mxu0 0.0
        %3166 = vmatpush1.msra.mxu0 0.0
        %3167 = vmatprep.subr.mxu0 0.0
        %3168 = vmatpush1.msra.mxu0 0.0
        %3169 = vmatprep.subr.mxu0 0.0
        %3170 = vmatpush1.msra.mxu0 0.0
        %3171 = vmatprep.subr.mxu0 0.0
        %3172 = vmatpush1.msra.mxu0 0.0
        %3173 = vmatprep.subr.mxu0 0.0
        %3174 = vmatpush1.msra.mxu0 0.0
        %3175 = vmatprep.subr.mxu0 0.0
        %3176 = vmatpush1.msra.mxu0 0.0
        %3177 = vmatprep.subr.mxu0 0.0
        %3178 = vmatpush1.msra.mxu0 0.0
        %3179 = vmatprep.subr.mxu0 0.0
        %3180 = vmatpush1.msra.mxu0 0.0
        %3181 = vmatprep.subr.mxu0 0.0
        %3182 = vmatpush1.msra.mxu0 0.0
        %3183 = vmatprep.mubr.f32.mxu0 0.0
        %v3184 = vand.u32 %v3115, 4294901760
        %v3185 = vsub.f32 %v3115, %v3184
        %v3186 = vand.u32 %v3185, 4294901760
        %v3187 = vsub.f32 %v3185, %v3186
        %v3188 = vand.u32 %v3187, 4294901760
        %3189 = vmatmul.mubr.f32.gmra.mrb[0].mxu0 %v3188
        %v3190 = vpop.f32.mrb[0].mxu0
        %v3191 = vadd.f32 %v3111, %v3190
        %v3192 = vpop.f32.mrb[0].mxu0
        %3193 = vdwg.mxu0
        %3194 = vmatprep.subr.mxu0 0.0
        %v3195 = vand.u32 %v2154, 4294901760
        %v3196 = vsub.f32 %v2154, %v3195
        %v3197 = vand.u32 %v3196, 4294901760
        %v3198 = vsub.f32 %v3196, %v3197
        %v3199 = vand.u32 %v3198, 4294901760
        %3200 = vmatpush1.msra.mxu0 %v3199
        %3201 = vmatprep.subr.mxu0 0.0
        %v3202 = vand.u32 %v2160, 4294901760
        %v3203 = vsub.f32 %v2160, %v3202
        %v3204 = vand.u32 %v3203, 4294901760
        %v3205 = vsub.f32 %v3203, %v3204
        %v3206 = vand.u32 %v3205, 4294901760
        %3207 = vmatpush1.msra.mxu0 %v3206
        %3208 = vmatprep.subr.mxu0 0.0
        %3209 = vmatpush1.msra.mxu0 0.0
        %3210 = vmatprep.subr.mxu0 0.0
        %3211 = vmatpush1.msra.mxu0 0.0
        %3212 = vmatprep.subr.mxu0 0.0
        %3213 = vmatpush1.msra.mxu0 0.0
        %3214 = vmatprep.subr.mxu0 0.0
        %3215 = vmatpush1.msra.mxu0 0.0
        %3216 = vmatprep.subr.mxu0 0.0
        %3217 = vmatpush1.msra.mxu0 0.0
        %3218 = vmatprep.subr.mxu0 0.0
        %3219 = vmatpush1.msra.mxu0 0.0
        %3220 = vmatprep.subr.mxu0 0.0
        %3221 = vmatpush1.msra.mxu0 0.0
        %3222 = vmatprep.subr.mxu0 0.0
        %3223 = vmatpush1.msra.mxu0 0.0
        %3224 = vmatprep.subr.mxu0 0.0
        %3225 = vmatpush1.msra.mxu0 0.0
        %3226 = vmatprep.subr.mxu0 0.0
        %3227 = vmatpush1.msra.mxu0 0.0
        %3228 = vmatprep.subr.mxu0 0.0
        %3229 = vmatpush1.msra.mxu0 0.0
        %3230 = vmatprep.subr.mxu0 0.0
        %3231 = vmatpush1.msra.mxu0 0.0
        %3232 = vmatprep.subr.mxu0 0.0
        %3233 = vmatpush1.msra.mxu0 0.0
        %3234 = vmatprep.subr.mxu0 0.0
        %3235 = vmatpush1.msra.mxu0 0.0
        %3236 = vmatprep.subr.mxu0 0.0
        %3237 = vmatpush1.msra.mxu0 0.0
        %3238 = vmatprep.subr.mxu0 0.0
        %3239 = vmatpush1.msra.mxu0 0.0
        %3240 = vmatprep.subr.mxu0 0.0
        %3241 = vmatpush1.msra.mxu0 0.0
        %3242 = vmatprep.subr.mxu0 0.0
        %3243 = vmatpush1.msra.mxu0 0.0
        %3244 = vmatprep.subr.mxu0 0.0
        %3245 = vmatpush1.msra.mxu0 0.0
        %3246 = vmatprep.subr.mxu0 0.0
        %3247 = vmatpush1.msra.mxu0 0.0
        %3248 = vmatprep.subr.mxu0 0.0
        %3249 = vmatpush1.msra.mxu0 0.0
        %3250 = vmatprep.subr.mxu0 0.0
        %3251 = vmatpush1.msra.mxu0 0.0
        %3252 = vmatprep.subr.mxu0 0.0
        %3253 = vmatpush1.msra.mxu0 0.0
        %3254 = vmatprep.subr.mxu0 0.0
        %3255 = vmatpush1.msra.mxu0 0.0
        %3256 = vmatprep.subr.mxu0 0.0
        %3257 = vmatpush1.msra.mxu0 0.0
        %3258 = vmatprep.subr.mxu0 0.0
        %3259 = vmatpush1.msra.mxu0 0.0
        %3260 = vmatprep.subr.mxu0 0.0
        %3261 = vmatpush1.msra.mxu0 0.0
        %3262 = vmatprep.subr.mxu0 0.0
        %3263 = vmatpush1.msra.mxu0 0.0
        %3264 = vmatprep.subr.mxu0 0.0
        %3265 = vmatpush1.msra.mxu0 0.0
        %3266 = vmatprep.subr.mxu0 0.0
        %3267 = vmatpush1.msra.mxu0 0.0
        %3268 = vmatprep.mubr.f32.mxu0 0.0
        %v3269 = vand.u32 %v3115, 4294901760
        %3270 = vmatmul.mubr.f32.gmra.mrb[0].mxu0 %v3269
        %v3271 = vpop.f32.mrb[0].mxu0
        %v3272 = vadd.f32 %v3191, %v3271
        %v3273 = vpop.f32.mrb[0].mxu0
        %3274 = vdwg.mxu0
        %3275 = vmatprep.subr.mxu0 0.0
        %v3276 = vand.u32 %v2154, 4294901760
        %v3277 = vsub.f32 %v2154, %v3276
        %3278 = vmatpush1.msra.mxu0 %v3277
        %3279 = vmatprep.subr.mxu0 0.0
        %v3280 = vand.u32 %v2160, 4294901760
        %v3281 = vsub.f32 %v2160, %v3280
        %3282 = vmatpush1.msra.mxu0 %v3281
        %3283 = vmatprep.subr.mxu0 0.0
        %3284 = vmatpush1.msra.mxu0 0.0
        %3285 = vmatprep.subr.mxu0 0.0
        %3286 = vmatpush1.msra.mxu0 0.0
        %3287 = vmatprep.subr.mxu0 0.0
        %3288 = vmatpush1.msra.mxu0 0.0
        %3289 = vmatprep.subr.mxu0 0.0
        %3290 = vmatpush1.msra.mxu0 0.0
        %3291 = vmatprep.subr.mxu0 0.0
        %3292 = vmatpush1.msra.mxu0 0.0
        %3293 = vmatprep.subr.mxu0 0.0
        %3294 = vmatpush1.msra.mxu0 0.0
        %3295 = vmatprep.subr.mxu0 0.0
        %3296 = vmatpush1.msra.mxu0 0.0
        %3297 = vmatprep.subr.mxu0 0.0
        %3298 = vmatpush1.msra.mxu0 0.0
        %3299 = vmatprep.subr.mxu0 0.0
        %3300 = vmatpush1.msra.mxu0 0.0
        %3301 = vmatprep.subr.mxu0 0.0
        %3302 = vmatpush1.msra.mxu0 0.0
        %3303 = vmatprep.subr.mxu0 0.0
        %3304 = vmatpush1.msra.mxu0 0.0
        %3305 = vmatprep.subr.mxu0 0.0
        %3306 = vmatpush1.msra.mxu0 0.0
        %3307 = vmatprep.subr.mxu0 0.0
        %3308 = vmatpush1.msra.mxu0 0.0
        %3309 = vmatprep.subr.mxu0 0.0
        %3310 = vmatpush1.msra.mxu0 0.0
        %3311 = vmatprep.subr.mxu0 0.0
        %3312 = vmatpush1.msra.mxu0 0.0
        %3313 = vmatprep.subr.mxu0 0.0
        %3314 = vmatpush1.msra.mxu0 0.0
        %3315 = vmatprep.subr.mxu0 0.0
        %3316 = vmatpush1.msra.mxu0 0.0
        %3317 = vmatprep.subr.mxu0 0.0
        %3318 = vmatpush1.msra.mxu0 0.0
        %3319 = vmatprep.subr.mxu0 0.0
        %3320 = vmatpush1.msra.mxu0 0.0
        %3321 = vmatprep.subr.mxu0 0.0
        %3322 = vmatpush1.msra.mxu0 0.0
        %3323 = vmatprep.subr.mxu0 0.0
        %3324 = vmatpush1.msra.mxu0 0.0
        %3325 = vmatprep.subr.mxu0 0.0
        %3326 = vmatpush1.msra.mxu0 0.0
        %3327 = vmatprep.subr.mxu0 0.0
        %3328 = vmatpush1.msra.mxu0 0.0
        %3329 = vmatprep.subr.mxu0 0.0
        %3330 = vmatpush1.msra.mxu0 0.0
        %3331 = vmatprep.subr.mxu0 0.0
        %3332 = vmatpush1.msra.mxu0 0.0
        %3333 = vmatprep.subr.mxu0 0.0
        %3334 = vmatpush1.msra.mxu0 0.0
        %3335 = vmatprep.subr.mxu0 0.0
        %3336 = vmatpush1.msra.mxu0 0.0
        %3337 = vmatprep.subr.mxu0 0.0
        %3338 = vmatpush1.msra.mxu0 0.0
        %3339 = vmatprep.subr.mxu0 0.0
        %3340 = vmatpush1.msra.mxu0 0.0
        %3341 = vmatprep.subr.mxu0 0.0
        %3342 = vmatpush1.msra.mxu0 0.0
        %3343 = vmatprep.mubr.f32.mxu0 0.0
        %v3344 = vand.u32 %v3115, 4294901760
        %v3345 = vsub.f32 %v3115, %v3344
        %3346 = vmatmul.mubr.f32.gmra.mrb[0].mxu0 %v3345
        %v3347 = vpop.f32.mrb[0].mxu0
        %v3348 = vadd.f32 %v3272, %v3347
        %v3349 = vpop.f32.mrb[0].mxu0
        %3350 = vdwg.mxu0
        %3351 = vmatprep.subr.mxu0 0.0
        %v3352 = vand.u32 %v2154, 4294901760
        %3353 = vmatpush1.msra.mxu0 %v3352
        %3354 = vmatprep.subr.mxu0 0.0
        %v3355 = vand.u32 %v2160, 4294901760
        %3356 = vmatpush1.msra.mxu0 %v3355
        %3357 = vmatprep.subr.mxu0 0.0
        %3358 = vmatpush1.msra.mxu0 0.0
        %3359 = vmatprep.subr.mxu0 0.0
        %3360 = vmatpush1.msra.mxu0 0.0
        %3361 = vmatprep.subr.mxu0 0.0
        %3362 = vmatpush1.msra.mxu0 0.0
        %3363 = vmatprep.subr.mxu0 0.0
        %3364 = vmatpush1.msra.mxu0 0.0
        %3365 = vmatprep.subr.mxu0 0.0
        %3366 = vmatpush1.msra.mxu0 0.0
        %3367 = vmatprep.subr.mxu0 0.0
        %3368 = vmatpush1.msra.mxu0 0.0
        %3369 = vmatprep.subr.mxu0 0.0
        %3370 = vmatpush1.msra.mxu0 0.0
        %3371 = vmatprep.subr.mxu0 0.0
        %3372 = vmatpush1.msra.mxu0 0.0
        %3373 = vmatprep.subr.mxu0 0.0
        %3374 = vmatpush1.msra.mxu0 0.0
        %3375 = vmatprep.subr.mxu0 0.0
        %3376 = vmatpush1.msra.mxu0 0.0
        %3377 = vmatprep.subr.mxu0 0.0
        %3378 = vmatpush1.msra.mxu0 0.0
        %3379 = vmatprep.subr.mxu0 0.0
        %3380 = vmatpush1.msra.mxu0 0.0
        %3381 = vmatprep.subr.mxu0 0.0
        %3382 = vmatpush1.msra.mxu0 0.0
        %3383 = vmatprep.subr.mxu0 0.0
        %3384 = vmatpush1.msra.mxu0 0.0
        %3385 = vmatprep.subr.mxu0 0.0
        %3386 = vmatpush1.msra.mxu0 0.0
        %3387 = vmatprep.subr.mxu0 0.0
        %3388 = vmatpush1.msra.mxu0 0.0
        %3389 = vmatprep.subr.mxu0 0.0
        %3390 = vmatpush1.msra.mxu0 0.0
        %3391 = vmatprep.subr.mxu0 0.0
        %3392 = vmatpush1.msra.mxu0 0.0
        %3393 = vmatprep.subr.mxu0 0.0
        %3394 = vmatpush1.msra.mxu0 0.0
        %3395 = vmatprep.subr.mxu0 0.0
        %3396 = vmatpush1.msra.mxu0 0.0
        %3397 = vmatprep.subr.mxu0 0.0
        %3398 = vmatpush1.msra.mxu0 0.0
        %3399 = vmatprep.subr.mxu0 0.0
        %3400 = vmatpush1.msra.mxu0 0.0
        %3401 = vmatprep.subr.mxu0 0.0
        %3402 = vmatpush1.msra.mxu0 0.0
        %3403 = vmatprep.subr.mxu0 0.0
        %3404 = vmatpush1.msra.mxu0 0.0
        %3405 = vmatprep.subr.mxu0 0.0
        %3406 = vmatpush1.msra.mxu0 0.0
        %3407 = vmatprep.subr.mxu0 0.0
        %3408 = vmatpush1.msra.mxu0 0.0
        %3409 = vmatprep.subr.mxu0 0.0
        %3410 = vmatpush1.msra.mxu0 0.0
        %3411 = vmatprep.subr.mxu0 0.0
        %3412 = vmatpush1.msra.mxu0 0.0
        %3413 = vmatprep.subr.mxu0 0.0
        %3414 = vmatpush1.msra.mxu0 0.0
        %3415 = vmatprep.subr.mxu0 0.0
        %3416 = vmatpush1.msra.mxu0 0.0
        %3417 = vmatprep.mubr.f32.mxu0 0.0
        %v3418 = vand.u32 %v3115, 4294901760
        %v3419 = vsub.f32 %v3115, %v3418
        %v3420 = vand.u32 %v3419, 4294901760
        %3421 = vmatmul.mubr.f32.gmra.mrb[0].mxu0 %v3420
        %v3422 = vpop.f32.mrb[0].mxu0
        %v3423 = vadd.f32 %v3348, %v3422
        %v3424 = vpop.f32.mrb[0].mxu0
        %3425 = vdwg.mxu0
        %3426 = vmatprep.subr.mxu0 0.0
        %v3427 = vand.u32 %v2154, 4294901760
        %v3428 = vsub.f32 %v2154, %v3427
        %v3429 = vand.u32 %v3428, 4294901760
        %3430 = vmatpush1.msra.mxu0 %v3429
        %3431 = vmatprep.subr.mxu0 0.0
        %v3432 = vand.u32 %v2160, 4294901760
        %v3433 = vsub.f32 %v2160, %v3432
        %v3434 = vand.u32 %v3433, 4294901760
        %3435 = vmatpush1.msra.mxu0 %v3434
        %3436 = vmatprep.subr.mxu0 0.0
        %3437 = vmatpush1.msra.mxu0 0.0
        %3438 = vmatprep.subr.mxu0 0.0
        %3439 = vmatpush1.msra.mxu0 0.0
        %3440 = vmatprep.subr.mxu0 0.0
        %3441 = vmatpush1.msra.mxu0 0.0
        %3442 = vmatprep.subr.mxu0 0.0
        %3443 = vmatpush1.msra.mxu0 0.0
        %3444 = vmatprep.subr.mxu0 0.0
        %3445 = vmatpush1.msra.mxu0 0.0
        %3446 = vmatprep.subr.mxu0 0.0
        %3447 = vmatpush1.msra.mxu0 0.0
        %3448 = vmatprep.subr.mxu0 0.0
        %3449 = vmatpush1.msra.mxu0 0.0
        %3450 = vmatprep.subr.mxu0 0.0
        %3451 = vmatpush1.msra.mxu0 0.0
        %3452 = vmatprep.subr.mxu0 0.0
        %3453 = vmatpush1.msra.mxu0 0.0
        %3454 = vmatprep.subr.mxu0 0.0
        %3455 = vmatpush1.msra.mxu0 0.0
        %3456 = vmatprep.subr.mxu0 0.0
        %3457 = vmatpush1.msra.mxu0 0.0
        %3458 = vmatprep.subr.mxu0 0.0
        %3459 = vmatpush1.msra.mxu0 0.0
        %3460 = vmatprep.subr.mxu0 0.0
        %3461 = vmatpush1.msra.mxu0 0.0
        %3462 = vmatprep.subr.mxu0 0.0
        %3463 = vmatpush1.msra.mxu0 0.0
        %3464 = vmatprep.subr.mxu0 0.0
        %3465 = vmatpush1.msra.mxu0 0.0
        %3466 = vmatprep.subr.mxu0 0.0
        %3467 = vmatpush1.msra.mxu0 0.0
        %3468 = vmatprep.subr.mxu0 0.0
        %3469 = vmatpush1.msra.mxu0 0.0
        %3470 = vmatprep.subr.mxu0 0.0
        %3471 = vmatpush1.msra.mxu0 0.0
        %3472 = vmatprep.subr.mxu0 0.0
        %3473 = vmatpush1.msra.mxu0 0.0
        %3474 = vmatprep.subr.mxu0 0.0
        %3475 = vmatpush1.msra.mxu0 0.0
        %3476 = vmatprep.subr.mxu0 0.0
        %3477 = vmatpush1.msra.mxu0 0.0
        %3478 = vmatprep.subr.mxu0 0.0
        %3479 = vmatpush1.msra.mxu0 0.0
        %3480 = vmatprep.subr.mxu0 0.0
        %3481 = vmatpush1.msra.mxu0 0.0
        %3482 = vmatprep.subr.mxu0 0.0
        %3483 = vmatpush1.msra.mxu0 0.0
        %3484 = vmatprep.subr.mxu0 0.0
        %3485 = vmatpush1.msra.mxu0 0.0
        %3486 = vmatprep.subr.mxu0 0.0
        %3487 = vmatpush1.msra.mxu0 0.0
        %3488 = vmatprep.subr.mxu0 0.0
        %3489 = vmatpush1.msra.mxu0 0.0
        %3490 = vmatprep.subr.mxu0 0.0
        %3491 = vmatpush1.msra.mxu0 0.0
        %3492 = vmatprep.subr.mxu0 0.0
        %3493 = vmatpush1.msra.mxu0 0.0
        %3494 = vmatprep.subr.mxu0 0.0
        %3495 = vmatpush1.msra.mxu0 0.0
        %3496 = vmatprep.mubr.f32.mxu0 0.0
        %v3497 = vand.u32 %v3115, 4294901760
        %3498 = vmatmul.mubr.f32.gmra.mrb[0].mxu0 %v3497
        %v3499 = vpop.f32.mrb[0].mxu0
        %v3500 = vadd.f32 %v3423, %v3499
        %v3501 = vpop.f32.mrb[0].mxu0
        %3502 = vdwg.mxu0
        %3503 = vmatprep.subr.mxu0 0.0
        %v3504 = vand.u32 %v2154, 4294901760
        %3505 = vmatpush1.msra.mxu0 %v3504
        %3506 = vmatprep.subr.mxu0 0.0
        %v3507 = vand.u32 %v2160, 4294901760
        %3508 = vmatpush1.msra.mxu0 %v3507
        %3509 = vmatprep.subr.mxu0 0.0
        %3510 = vmatpush1.msra.mxu0 0.0
        %3511 = vmatprep.subr.mxu0 0.0
        %3512 = vmatpush1.msra.mxu0 0.0
        %3513 = vmatprep.subr.mxu0 0.0
        %3514 = vmatpush1.msra.mxu0 0.0
        %3515 = vmatprep.subr.mxu0 0.0
        %3516 = vmatpush1.msra.mxu0 0.0
        %3517 = vmatprep.subr.mxu0 0.0
        %3518 = vmatpush1.msra.mxu0 0.0
        %3519 = vmatprep.subr.mxu0 0.0
        %3520 = vmatpush1.msra.mxu0 0.0
        %3521 = vmatprep.subr.mxu0 0.0
        %3522 = vmatpush1.msra.mxu0 0.0
        %3523 = vmatprep.subr.mxu0 0.0
        %3524 = vmatpush1.msra.mxu0 0.0
        %3525 = vmatprep.subr.mxu0 0.0
        %3526 = vmatpush1.msra.mxu0 0.0
        %3527 = vmatprep.subr.mxu0 0.0
        %3528 = vmatpush1.msra.mxu0 0.0
        %3529 = vmatprep.subr.mxu0 0.0
        %3530 = vmatpush1.msra.mxu0 0.0
        %3531 = vmatprep.subr.mxu0 0.0
        %3532 = vmatpush1.msra.mxu0 0.0
        %3533 = vmatprep.subr.mxu0 0.0
        %3534 = vmatpush1.msra.mxu0 0.0
        %3535 = vmatprep.subr.mxu0 0.0
        %3536 = vmatpush1.msra.mxu0 0.0
        %3537 = vmatprep.subr.mxu0 0.0
        %3538 = vmatpush1.msra.mxu0 0.0
        %3539 = vmatprep.subr.mxu0 0.0
        %3540 = vmatpush1.msra.mxu0 0.0
        %3541 = vmatprep.subr.mxu0 0.0
        %3542 = vmatpush1.msra.mxu0 0.0
        %3543 = vmatprep.subr.mxu0 0.0
        %3544 = vmatpush1.msra.mxu0 0.0
        %3545 = vmatprep.subr.mxu0 0.0
        %3546 = vmatpush1.msra.mxu0 0.0
        %3547 = vmatprep.subr.mxu0 0.0
        %3548 = vmatpush1.msra.mxu0 0.0
        %3549 = vmatprep.subr.mxu0 0.0
        %3550 = vmatpush1.msra.mxu0 0.0
        %3551 = vmatprep.subr.mxu0 0.0
        %3552 = vmatpush1.msra.mxu0 0.0
        %3553 = vmatprep.subr.mxu0 0.0
        %3554 = vmatpush1.msra.mxu0 0.0
        %3555 = vmatprep.subr.mxu0 0.0
        %3556 = vmatpush1.msra.mxu0 0.0
        %3557 = vmatprep.subr.mxu0 0.0
        %3558 = vmatpush1.msra.mxu0 0.0
        %3559 = vmatprep.subr.mxu0 0.0
        %3560 = vmatpush1.msra.mxu0 0.0
        %3561 = vmatprep.subr.mxu0 0.0
        %3562 = vmatpush1.msra.mxu0 0.0
        %3563 = vmatprep.subr.mxu0 0.0
        %3564 = vmatpush1.msra.mxu0 0.0
        %3565 = vmatprep.subr.mxu0 0.0
        %3566 = vmatpush1.msra.mxu0 0.0
        %3567 = vmatprep.subr.mxu0 0.0
        %3568 = vmatpush1.msra.mxu0 0.0
        %3569 = vmatprep.mubr.f32.mxu0 0.0
        %v3570 = vand.u32 %v3115, 4294901760
        %3571 = vmatmul.mubr.f32.gmra.mrb[0].mxu0 %v3570
        %v3572 = vpop.f32.mrb[0].mxu0
        %v3573 = vadd.f32 %v3500, %v3572
        %v3574 = vpop.f32.mrb[0].mxu0
        %3575 = vdwg.mxu0
        %3576 = vmatprep.subr.mxu0 0.0
        %v3577 = vand.u32 %v488, 4294901760
        %3578 = vmatpush1.msra.mxu0 %v3577
        %3579 = vmatprep.subr.mxu0 0.0
        %3580 = vmatpush1.msra.mxu0 0.0
        %3581 = vmatprep.subr.mxu0 0.0
        %3582 = vmatpush1.msra.mxu0 0.0
        %3583 = vmatprep.subr.mxu0 0.0
        %3584 = vmatpush1.msra.mxu0 0.0
        %3585 = vmatprep.subr.mxu0 0.0
        %3586 = vmatpush1.msra.mxu0 0.0
        %3587 = vmatprep.subr.mxu0 0.0
        %3588 = vmatpush1.msra.mxu0 0.0
        %3589 = vmatprep.subr.mxu0 0.0
        %3590 = vmatpush1.msra.mxu0 0.0
        %3591 = vmatprep.subr.mxu0 0.0
        %3592 = vmatpush1.msra.mxu0 0.0
        %3593 = vmatprep.subr.mxu0 0.0
        %3594 = vmatpush1.msra.mxu0 0.0
        %3595 = vmatprep.subr.mxu0 0.0
        %3596 = vmatpush1.msra.mxu0 0.0
        %3597 = vmatprep.subr.mxu0 0.0
        %3598 = vmatpush1.msra.mxu0 0.0
        %3599 = vmatprep.subr.mxu0 0.0
        %3600 = vmatpush1.msra.mxu0 0.0
        %3601 = vmatprep.subr.mxu0 0.0
        %3602 = vmatpush1.msra.mxu0 0.0
        %3603 = vmatprep.subr.mxu0 0.0
        %3604 = vmatpush1.msra.mxu0 0.0
        %3605 = vmatprep.subr.mxu0 0.0
        %3606 = vmatpush1.msra.mxu0 0.0
        %3607 = vmatprep.subr.mxu0 0.0
        %3608 = vmatpush1.msra.mxu0 0.0
        %3609 = vmatprep.subr.mxu0 0.0
        %3610 = vmatpush1.msra.mxu0 0.0
        %3611 = vmatprep.subr.mxu0 0.0
        %3612 = vmatpush1.msra.mxu0 0.0
        %3613 = vmatprep.subr.mxu0 0.0
        %3614 = vmatpush1.msra.mxu0 0.0
        %3615 = vmatprep.subr.mxu0 0.0
        %3616 = vmatpush1.msra.mxu0 0.0
        %3617 = vmatprep.subr.mxu0 0.0
        %3618 = vmatpush1.msra.mxu0 0.0
        %3619 = vmatprep.subr.mxu0 0.0
        %3620 = vmatpush1.msra.mxu0 0.0
        %3621 = vmatprep.subr.mxu0 0.0
        %3622 = vmatpush1.msra.mxu0 0.0
        %3623 = vmatprep.subr.mxu0 0.0
        %3624 = vmatpush1.msra.mxu0 0.0
        %3625 = vmatprep.subr.mxu0 0.0
        %3626 = vmatpush1.msra.mxu0 0.0
        %3627 = vmatprep.subr.mxu0 0.0
        %3628 = vmatpush1.msra.mxu0 0.0
        %3629 = vmatprep.subr.mxu0 0.0
        %3630 = vmatpush1.msra.mxu0 0.0
        %3631 = vmatprep.subr.mxu0 0.0
        %3632 = vmatpush1.msra.mxu0 0.0
        %3633 = vmatprep.subr.mxu0 0.0
        %3634 = vmatpush1.msra.mxu0 0.0
        %3635 = vmatprep.subr.mxu0 0.0
        %3636 = vmatpush1.msra.mxu0 0.0
        %3637 = vmatprep.subr.mxu0 0.0
        %3638 = vmatpush1.msra.mxu0 0.0
        %3639 = vmatprep.subr.mxu0 0.0
        %3640 = vmatpush1.msra.mxu0 0.0
        %3641 = vmatprep.mubr.f32.mxu0 0.0
        %v3642 = vand.u32 %v630, 4294901760
        %v3643 = vsub.f32 %v630, %v3642
        %v3644 = vand.u32 %v3643, 4294901760
        %v3645 = vsub.f32 %v3643, %v3644
        %v3646 = vand.u32 %v3645, 4294901760
        %3647 = vmatmul.mubr.f32.gmra.mrb[0].mxu0 %v3646
        %v3648 = vpop.f32.mrb[0].mxu0
        %v3649 = vadd.f32 0.0, %v3648
        %v3650 = vpop.f32.mrb[0].mxu0
        %3651 = vmatprep.mubr.f32.mxu0 0.0
        %v3652 = vand.u32 %v633, 4294901760
        %v3653 = vsub.f32 %v633, %v3652
        %v3654 = vand.u32 %v3653, 4294901760
        %v3655 = vsub.f32 %v3653, %v3654
        %v3656 = vand.u32 %v3655, 4294901760
        %3657 = vmatmul.mubr.f32.gmra.mrb[0].mxu0 %v3656
        %v3658 = vpop.f32.mrb[0].mxu0
        %v3659 = vadd.f32 0.0, %v3658
        %v3660 = vpop.f32.mrb[0].mxu0
        %3661 = vdwg.mxu0
        %3662 = vmatprep.subr.mxu0 0.0
        %v3663 = vand.u32 %v488, 4294901760
        %v3664 = vsub.f32 %v488, %v3663
        %v3665 = vand.u32 %v3664, 4294901760
        %v3666 = vsub.f32 %v3664, %v3665
        %v3667 = vand.u32 %v3666, 4294901760
        %3668 = vmatpush1.msra.mxu0 %v3667
        %3669 = vmatprep.subr.mxu0 0.0
        %3670 = vmatpush1.msra.mxu0 0.0
        %3671 = vmatprep.subr.mxu0 0.0
        %3672 = vmatpush1.msra.mxu0 0.0
        %3673 = vmatprep.subr.mxu0 0.0
        %3674 = vmatpush1.msra.mxu0 0.0
        %3675 = vmatprep.subr.mxu0 0.0
        %3676 = vmatpush1.msra.mxu0 0.0
        %3677 = vmatprep.subr.mxu0 0.0
        %3678 = vmatpush1.msra.mxu0 0.0
        %3679 = vmatprep.subr.mxu0 0.0
        %3680 = vmatpush1.msra.mxu0 0.0
        %3681 = vmatprep.subr.mxu0 0.0
        %3682 = vmatpush1.msra.mxu0 0.0
        %3683 = vmatprep.subr.mxu0 0.0
        %3684 = vmatpush1.msra.mxu0 0.0
        %3685 = vmatprep.subr.mxu0 0.0
        %3686 = vmatpush1.msra.mxu0 0.0
        %3687 = vmatprep.subr.mxu0 0.0
        %3688 = vmatpush1.msra.mxu0 0.0
        %3689 = vmatprep.subr.mxu0 0.0
        %3690 = vmatpush1.msra.mxu0 0.0
        %3691 = vmatprep.subr.mxu0 0.0
        %3692 = vmatpush1.msra.mxu0 0.0
        %3693 = vmatprep.subr.mxu0 0.0
        %3694 = vmatpush1.msra.mxu0 0.0
        %3695 = vmatprep.subr.mxu0 0.0
        %3696 = vmatpush1.msra.mxu0 0.0
        %3697 = vmatprep.subr.mxu0 0.0
        %3698 = vmatpush1.msra.mxu0 0.0
        %3699 = vmatprep.subr.mxu0 0.0
        %3700 = vmatpush1.msra.mxu0 0.0
        %3701 = vmatprep.subr.mxu0 0.0
        %3702 = vmatpush1.msra.mxu0 0.0
        %3703 = vmatprep.subr.mxu0 0.0
        %3704 = vmatpush1.msra.mxu0 0.0
        %3705 = vmatprep.subr.mxu0 0.0
        %3706 = vmatpush1.msra.mxu0 0.0
        %3707 = vmatprep.subr.mxu0 0.0
        %3708 = vmatpush1.msra.mxu0 0.0
        %3709 = vmatprep.subr.mxu0 0.0
        %3710 = vmatpush1.msra.mxu0 0.0
        %3711 = vmatprep.subr.mxu0 0.0
        %3712 = vmatpush1.msra.mxu0 0.0
        %3713 = vmatprep.subr.mxu0 0.0
        %3714 = vmatpush1.msra.mxu0 0.0
        %3715 = vmatprep.subr.mxu0 0.0
        %3716 = vmatpush1.msra.mxu0 0.0
        %3717 = vmatprep.subr.mxu0 0.0
        %3718 = vmatpush1.msra.mxu0 0.0
        %3719 = vmatprep.subr.mxu0 0.0
        %3720 = vmatpush1.msra.mxu0 0.0
        %3721 = vmatprep.subr.mxu0 0.0
        %3722 = vmatpush1.msra.mxu0 0.0
        %3723 = vmatprep.subr.mxu0 0.0
        %3724 = vmatpush1.msra.mxu0 0.0
        %3725 = vmatprep.subr.mxu0 0.0
        %3726 = vmatpush1.msra.mxu0 0.0
        %3727 = vmatprep.subr.mxu0 0.0
        %3728 = vmatpush1.msra.mxu0 0.0
        %3729 = vmatprep.subr.mxu0 0.0
        %3730 = vmatpush1.msra.mxu0 0.0
        %3731 = vmatprep.mubr.f32.mxu0 0.0
        %v3732 = vand.u32 %v630, 4294901760
        %3733 = vmatmul.mubr.f32.gmra.mrb[0].mxu0 %v3732
        %v3734 = vpop.f32.mrb[0].mxu0
        %v3735 = vadd.f32 %v3649, %v3734
        %v3736 = vpop.f32.mrb[0].mxu0
        %3737 = vmatprep.mubr.f32.mxu0 0.0
        %v3738 = vand.u32 %v633, 4294901760
        %3739 = vmatmul.mubr.f32.gmra.mrb[0].mxu0 %v3738
        %v3740 = vpop.f32.mrb[0].mxu0
        %v3741 = vadd.f32 %v3659, %v3740
        %v3742 = vpop.f32.mrb[0].mxu0
        %3743 = vdwg.mxu0
        %3744 = vmatprep.subr.mxu0 0.0
        %v3745 = vand.u32 %v488, 4294901760
        %v3746 = vsub.f32 %v488, %v3745
        %3747 = vmatpush1.msra.mxu0 %v3746
        %3748 = vmatprep.subr.mxu0 0.0
        %3749 = vmatpush1.msra.mxu0 0.0
        %3750 = vmatprep.subr.mxu0 0.0
        %3751 = vmatpush1.msra.mxu0 0.0
        %3752 = vmatprep.subr.mxu0 0.0
        %3753 = vmatpush1.msra.mxu0 0.0
        %3754 = vmatprep.subr.mxu0 0.0
        %3755 = vmatpush1.msra.mxu0 0.0
        %3756 = vmatprep.subr.mxu0 0.0
        %3757 = vmatpush1.msra.mxu0 0.0
        %3758 = vmatprep.subr.mxu0 0.0
        %3759 = vmatpush1.msra.mxu0 0.0
        %3760 = vmatprep.subr.mxu0 0.0
        %3761 = vmatpush1.msra.mxu0 0.0
        %3762 = vmatprep.subr.mxu0 0.0
        %3763 = vmatpush1.msra.mxu0 0.0
        %3764 = vmatprep.subr.mxu0 0.0
        %3765 = vmatpush1.msra.mxu0 0.0
        %3766 = vmatprep.subr.mxu0 0.0
        %3767 = vmatpush1.msra.mxu0 0.0
        %3768 = vmatprep.subr.mxu0 0.0
        %3769 = vmatpush1.msra.mxu0 0.0
        %3770 = vmatprep.subr.mxu0 0.0
        %3771 = vmatpush1.msra.mxu0 0.0
        %3772 = vmatprep.subr.mxu0 0.0
        %3773 = vmatpush1.msra.mxu0 0.0
        %3774 = vmatprep.subr.mxu0 0.0
        %3775 = vmatpush1.msra.mxu0 0.0
        %3776 = vmatprep.subr.mxu0 0.0
        %3777 = vmatpush1.msra.mxu0 0.0
        %3778 = vmatprep.subr.mxu0 0.0
        %3779 = vmatpush1.msra.mxu0 0.0
        %3780 = vmatprep.subr.mxu0 0.0
        %3781 = vmatpush1.msra.mxu0 0.0
        %3782 = vmatprep.subr.mxu0 0.0
        %3783 = vmatpush1.msra.mxu0 0.0
        %3784 = vmatprep.subr.mxu0 0.0
        %3785 = vmatpush1.msra.mxu0 0.0
        %3786 = vmatprep.subr.mxu0 0.0
        %3787 = vmatpush1.msra.mxu0 0.0
        %3788 = vmatprep.subr.mxu0 0.0
        %3789 = vmatpush1.msra.mxu0 0.0
        %3790 = vmatprep.subr.mxu0 0.0
        %3791 = vmatpush1.msra.mxu0 0.0
        %3792 = vmatprep.subr.mxu0 0.0
        %3793 = vmatpush1.msra.mxu0 0.0
        %3794 = vmatprep.subr.mxu0 0.0
        %3795 = vmatpush1.msra.mxu0 0.0
        %3796 = vmatprep.subr.mxu0 0.0
        %3797 = vmatpush1.msra.mxu0 0.0
        %3798 = vmatprep.subr.mxu0 0.0
        %3799 = vmatpush1.msra.mxu0 0.0
        %3800 = vmatprep.subr.mxu0 0.0
        %3801 = vmatpush1.msra.mxu0 0.0
        %3802 = vmatprep.subr.mxu0 0.0
        %3803 = vmatpush1.msra.mxu0 0.0
        %3804 = vmatprep.subr.mxu0 0.0
        %3805 = vmatpush1.msra.mxu0 0.0
        %3806 = vmatprep.subr.mxu0 0.0
        %3807 = vmatpush1.msra.mxu0 0.0
        %3808 = vmatprep.subr.mxu0 0.0
        %3809 = vmatpush1.msra.mxu0 0.0
        %3810 = vmatprep.mubr.f32.mxu0 0.0
        %v3811 = vand.u32 %v630, 4294901760
        %v3812 = vsub.f32 %v630, %v3811
        %3813 = vmatmul.mubr.f32.gmra.mrb[0].mxu0 %v3812
        %v3814 = vpop.f32.mrb[0].mxu0
        %v3815 = vadd.f32 %v3735, %v3814
        %v3816 = vpop.f32.mrb[0].mxu0
        %3817 = vmatprep.mubr.f32.mxu0 0.0
        %v3818 = vand.u32 %v633, 4294901760
        %v3819 = vsub.f32 %v633, %v3818
        %3820 = vmatmul.mubr.f32.gmra.mrb[0].mxu0 %v3819
        %v3821 = vpop.f32.mrb[0].mxu0
        %v3822 = vadd.f32 %v3741, %v3821
        %v3823 = vpop.f32.mrb[0].mxu0
        %3824 = vdwg.mxu0
        %3825 = vmatprep.subr.mxu0 0.0
        %v3826 = vand.u32 %v488, 4294901760
        %3827 = vmatpush1.msra.mxu0 %v3826
        %3828 = vmatprep.subr.mxu0 0.0
        %3829 = vmatpush1.msra.mxu0 0.0
        %3830 = vmatprep.subr.mxu0 0.0
        %3831 = vmatpush1.msra.mxu0 0.0
        %3832 = vmatprep.subr.mxu0 0.0
        %3833 = vmatpush1.msra.mxu0 0.0
        %3834 = vmatprep.subr.mxu0 0.0
        %3835 = vmatpush1.msra.mxu0 0.0
        %3836 = vmatprep.subr.mxu0 0.0
        %3837 = vmatpush1.msra.mxu0 0.0
        %3838 = vmatprep.subr.mxu0 0.0
        %3839 = vmatpush1.msra.mxu0 0.0
        %3840 = vmatprep.subr.mxu0 0.0
        %3841 = vmatpush1.msra.mxu0 0.0
        %3842 = vmatprep.subr.mxu0 0.0
        %3843 = vmatpush1.msra.mxu0 0.0
        %3844 = vmatprep.subr.mxu0 0.0
        %3845 = vmatpush1.msra.mxu0 0.0
        %3846 = vmatprep.subr.mxu0 0.0
        %3847 = vmatpush1.msra.mxu0 0.0
        %3848 = vmatprep.subr.mxu0 0.0
        %3849 = vmatpush1.msra.mxu0 0.0
        %3850 = vmatprep.subr.mxu0 0.0
        %3851 = vmatpush1.msra.mxu0 0.0
        %3852 = vmatprep.subr.mxu0 0.0
        %3853 = vmatpush1.msra.mxu0 0.0
        %3854 = vmatprep.subr.mxu0 0.0
        %3855 = vmatpush1.msra.mxu0 0.0
        %3856 = vmatprep.subr.mxu0 0.0
        %3857 = vmatpush1.msra.mxu0 0.0
        %3858 = vmatprep.subr.mxu0 0.0
        %3859 = vmatpush1.msra.mxu0 0.0
        %3860 = vmatprep.subr.mxu0 0.0
        %3861 = vmatpush1.msra.mxu0 0.0
        %3862 = vmatprep.subr.mxu0 0.0
        %3863 = vmatpush1.msra.mxu0 0.0
        %3864 = vmatprep.subr.mxu0 0.0
        %3865 = vmatpush1.msra.mxu0 0.0
        %3866 = vmatprep.subr.mxu0 0.0
        %3867 = vmatpush1.msra.mxu0 0.0
        %3868 = vmatprep.subr.mxu0 0.0
        %3869 = vmatpush1.msra.mxu0 0.0
        %3870 = vmatprep.subr.mxu0 0.0
        %3871 = vmatpush1.msra.mxu0 0.0
        %3872 = vmatprep.subr.mxu0 0.0
        %3873 = vmatpush1.msra.mxu0 0.0
        %3874 = vmatprep.subr.mxu0 0.0
        %3875 = vmatpush1.msra.mxu0 0.0
        %3876 = vmatprep.subr.mxu0 0.0
        %3877 = vmatpush1.msra.mxu0 0.0
        %3878 = vmatprep.subr.mxu0 0.0
        %3879 = vmatpush1.msra.mxu0 0.0
        %3880 = vmatprep.subr.mxu0 0.0
        %3881 = vmatpush1.msra.mxu0 0.0
        %3882 = vmatprep.subr.mxu0 0.0
        %3883 = vmatpush1.msra.mxu0 0.0
        %3884 = vmatprep.subr.mxu0 0.0
        %3885 = vmatpush1.msra.mxu0 0.0
        %3886 = vmatprep.subr.mxu0 0.0
        %3887 = vmatpush1.msra.mxu0 0.0
        %3888 = vmatprep.subr.mxu0 0.0
        %3889 = vmatpush1.msra.mxu0 0.0
        %3890 = vmatprep.mubr.f32.mxu0 0.0
        %v3891 = vand.u32 %v630, 4294901760
        %v3892 = vsub.f32 %v630, %v3891
        %v3893 = vand.u32 %v3892, 4294901760
        %3894 = vmatmul.mubr.f32.gmra.mrb[0].mxu0 %v3893
        %v3895 = vpop.f32.mrb[0].mxu0
        %v3896 = vadd.f32 %v3815, %v3895
        %v3897 = vpop.f32.mrb[0].mxu0
        %3898 = vmatprep.mubr.f32.mxu0 0.0
        %v3899 = vand.u32 %v633, 4294901760
        %v3900 = vsub.f32 %v633, %v3899
        %v3901 = vand.u32 %v3900, 4294901760
        %3902 = vmatmul.mubr.f32.gmra.mrb[0].mxu0 %v3901
        %v3903 = vpop.f32.mrb[0].mxu0
        %v3904 = vadd.f32 %v3822, %v3903
        %v3905 = vpop.f32.mrb[0].mxu0
        %3906 = vdwg.mxu0
        %3907 = vmatprep.subr.mxu0 0.0
        %v3908 = vand.u32 %v488, 4294901760
        %v3909 = vsub.f32 %v488, %v3908
        %v3910 = vand.u32 %v3909, 4294901760
        %3911 = vmatpush1.msra.mxu0 %v3910
        %3912 = vmatprep.subr.mxu0 0.0
        %3913 = vmatpush1.msra.mxu0 0.0
        %3914 = vmatprep.subr.mxu0 0.0
        %3915 = vmatpush1.msra.mxu0 0.0
        %3916 = vmatprep.subr.mxu0 0.0
        %3917 = vmatpush1.msra.mxu0 0.0
        %3918 = vmatprep.subr.mxu0 0.0
        %3919 = vmatpush1.msra.mxu0 0.0
        %3920 = vmatprep.subr.mxu0 0.0
        %3921 = vmatpush1.msra.mxu0 0.0
        %3922 = vmatprep.subr.mxu0 0.0
        %3923 = vmatpush1.msra.mxu0 0.0
        %3924 = vmatprep.subr.mxu0 0.0
        %3925 = vmatpush1.msra.mxu0 0.0
        %3926 = vmatprep.subr.mxu0 0.0
        %3927 = vmatpush1.msra.mxu0 0.0
        %3928 = vmatprep.subr.mxu0 0.0
        %3929 = vmatpush1.msra.mxu0 0.0
        %3930 = vmatprep.subr.mxu0 0.0
        %3931 = vmatpush1.msra.mxu0 0.0
        %3932 = vmatprep.subr.mxu0 0.0
        %3933 = vmatpush1.msra.mxu0 0.0
        %3934 = vmatprep.subr.mxu0 0.0
        %3935 = vmatpush1.msra.mxu0 0.0
        %3936 = vmatprep.subr.mxu0 0.0
        %3937 = vmatpush1.msra.mxu0 0.0
        %3938 = vmatprep.subr.mxu0 0.0
        %3939 = vmatpush1.msra.mxu0 0.0
        %3940 = vmatprep.subr.mxu0 0.0
        %3941 = vmatpush1.msra.mxu0 0.0
        %3942 = vmatprep.subr.mxu0 0.0
        %3943 = vmatpush1.msra.mxu0 0.0
        %3944 = vmatprep.subr.mxu0 0.0
        %3945 = vmatpush1.msra.mxu0 0.0
        %3946 = vmatprep.subr.mxu0 0.0
        %3947 = vmatpush1.msra.mxu0 0.0
        %3948 = vmatprep.subr.mxu0 0.0
        %3949 = vmatpush1.msra.mxu0 0.0
        %3950 = vmatprep.subr.mxu0 0.0
        %3951 = vmatpush1.msra.mxu0 0.0
        %3952 = vmatprep.subr.mxu0 0.0
        %3953 = vmatpush1.msra.mxu0 0.0
        %3954 = vmatprep.subr.mxu0 0.0
        %3955 = vmatpush1.msra.mxu0 0.0
        %3956 = vmatprep.subr.mxu0 0.0
        %3957 = vmatpush1.msra.mxu0 0.0
        %3958 = vmatprep.subr.mxu0 0.0
        %3959 = vmatpush1.msra.mxu0 0.0
        %3960 = vmatprep.subr.mxu0 0.0
        %3961 = vmatpush1.msra.mxu0 0.0
        %3962 = vmatprep.subr.mxu0 0.0
        %3963 = vmatpush1.msra.mxu0 0.0
        %3964 = vmatprep.subr.mxu0 0.0
        %3965 = vmatpush1.msra.mxu0 0.0
        %3966 = vmatprep.subr.mxu0 0.0
        %3967 = vmatpush1.msra.mxu0 0.0
        %3968 = vmatprep.subr.mxu0 0.0
        %3969 = vmatpush1.msra.mxu0 0.0
        %3970 = vmatprep.subr.mxu0 0.0
        %3971 = vmatpush1.msra.mxu0 0.0
        %3972 = vmatprep.subr.mxu0 0.0
        %3973 = vmatpush1.msra.mxu0 0.0
        %3974 = vmatprep.mubr.f32.mxu0 0.0
        %v3975 = vand.u32 %v630, 4294901760
        %3976 = vmatmul.mubr.f32.gmra.mrb[0].mxu0 %v3975
        %v3977 = vpop.f32.mrb[0].mxu0
        %v3978 = vadd.f32 %v3896, %v3977
        %v3979 = vpop.f32.mrb[0].mxu0
        %3980 = vmatprep.mubr.f32.mxu0 0.0
        %v3981 = vand.u32 %v633, 4294901760
        %3982 = vmatmul.mubr.f32.gmra.mrb[0].mxu0 %v3981
        %v3983 = vpop.f32.mrb[0].mxu0
        %v3984 = vadd.f32 %v3904, %v3983
        %v3985 = vpop.f32.mrb[0].mxu0
        %3986 = vdwg.mxu0
        %3987 = vmatprep.subr.mxu0 0.0
        %v3988 = vand.u32 %v488, 4294901760
        %3989 = vmatpush1.msra.mxu0 %v3988
        %3990 = vmatprep.subr.mxu0 0.0
        %3991 = vmatpush1.msra.mxu0 0.0
        %3992 = vmatprep.subr.mxu0 0.0
        %3993 = vmatpush1.msra.mxu0 0.0
        %3994 = vmatprep.subr.mxu0 0.0
        %3995 = vmatpush1.msra.mxu0 0.0
        %3996 = vmatprep.subr.mxu0 0.0
        %3997 = vmatpush1.msra.mxu0 0.0
        %3998 = vmatprep.subr.mxu0 0.0
        %3999 = vmatpush1.msra.mxu0 0.0
        %4000 = vmatprep.subr.mxu0 0.0
        %4001 = vmatpush1.msra.mxu0 0.0
        %4002 = vmatprep.subr.mxu0 0.0
        %4003 = vmatpush1.msra.mxu0 0.0
        %4004 = vmatprep.subr.mxu0 0.0
        %4005 = vmatpush1.msra.mxu0 0.0
        %4006 = vmatprep.subr.mxu0 0.0
        %4007 = vmatpush1.msra.mxu0 0.0
        %4008 = vmatprep.subr.mxu0 0.0
        %4009 = vmatpush1.msra.mxu0 0.0
        %4010 = vmatprep.subr.mxu0 0.0
        %4011 = vmatpush1.msra.mxu0 0.0
        %4012 = vmatprep.subr.mxu0 0.0
        %4013 = vmatpush1.msra.mxu0 0.0
        %4014 = vmatprep.subr.mxu0 0.0
        %4015 = vmatpush1.msra.mxu0 0.0
        %4016 = vmatprep.subr.mxu0 0.0
        %4017 = vmatpush1.msra.mxu0 0.0
        %4018 = vmatprep.subr.mxu0 0.0
        %4019 = vmatpush1.msra.mxu0 0.0
        %4020 = vmatprep.subr.mxu0 0.0
        %4021 = vmatpush1.msra.mxu0 0.0
        %4022 = vmatprep.subr.mxu0 0.0
        %4023 = vmatpush1.msra.mxu0 0.0
        %4024 = vmatprep.subr.mxu0 0.0
        %4025 = vmatpush1.msra.mxu0 0.0
        %4026 = vmatprep.subr.mxu0 0.0
        %4027 = vmatpush1.msra.mxu0 0.0
        %4028 = vmatprep.subr.mxu0 0.0
        %4029 = vmatpush1.msra.mxu0 0.0
        %4030 = vmatprep.subr.mxu0 0.0
        %4031 = vmatpush1.msra.mxu0 0.0
        %4032 = vmatprep.subr.mxu0 0.0
        %4033 = vmatpush1.msra.mxu0 0.0
        %4034 = vmatprep.subr.mxu0 0.0
        %4035 = vmatpush1.msra.mxu0 0.0
        %4036 = vmatprep.subr.mxu0 0.0
        %4037 = vmatpush1.msra.mxu0 0.0
        %4038 = vmatprep.subr.mxu0 0.0
        %4039 = vmatpush1.msra.mxu0 0.0
        %4040 = vmatprep.subr.mxu0 0.0
        %4041 = vmatpush1.msra.mxu0 0.0
        %4042 = vmatprep.subr.mxu0 0.0
        %4043 = vmatpush1.msra.mxu0 0.0
        %4044 = vmatprep.subr.mxu0 0.0
        %4045 = vmatpush1.msra.mxu0 0.0
        %4046 = vmatprep.subr.mxu0 0.0
        %4047 = vmatpush1.msra.mxu0 0.0
        %4048 = vmatprep.subr.mxu0 0.0
        %4049 = vmatpush1.msra.mxu0 0.0
        %4050 = vmatprep.subr.mxu0 0.0
        %4051 = vmatpush1.msra.mxu0 0.0
        %4052 = vmatprep.mubr.f32.mxu0 0.0
        %v4053 = vand.u32 %v630, 4294901760
        %4054 = vmatmul.mubr.f32.gmra.mrb[0].mxu0 %v4053
        %v4055 = vpop.f32.mrb[0].mxu0
        %v4056 = vadd.f32 %v3978, %v4055
        %v4057 = vpop.f32.mrb[0].mxu0
        %4058 = vmatprep.mubr.f32.mxu0 0.0
        %v4059 = vand.u32 %v633, 4294901760
        %4060 = vmatmul.mubr.f32.gmra.mrb[0].mxu0 %v4059
        %v4061 = vpop.f32.mrb[0].mxu0
        %v4062 = vadd.f32 %v3984, %v4061
        %v4063 = vpop.f32.mrb[0].mxu0
        %4064 = vdwg.mxu0
        %v4066 = vsel %vm1142, %v481, 0
        %4068 = vmatprep.subr.mxu0 0.0
        %v4069 = vand.u32 %v4056, 4294901760
        %4070 = vmatpush1.msra.mxu0 %v4069
        %4071 = vmatprep.subr.mxu0 0.0
        %v4072 = vand.u32 %v4062, 4294901760
        %4073 = vmatpush1.msra.mxu0 %v4072
        %4074 = vmatprep.subr.mxu0 0.0
        %4075 = vmatpush1.msra.mxu0 0.0
        %4076 = vmatprep.subr.mxu0 0.0
        %4077 = vmatpush1.msra.mxu0 0.0
        %4078 = vmatprep.subr.mxu0 0.0
        %4079 = vmatpush1.msra.mxu0 0.0
        %4080 = vmatprep.subr.mxu0 0.0
        %4081 = vmatpush1.msra.mxu0 0.0
        %4082 = vmatprep.subr.mxu0 0.0
        %4083 = vmatpush1.msra.mxu0 0.0
        %4084 = vmatprep.subr.mxu0 0.0
        %4085 = vmatpush1.msra.mxu0 0.0
        %4086 = vmatprep.subr.mxu0 0.0
        %4087 = vmatpush1.msra.mxu0 0.0
        %4088 = vmatprep.subr.mxu0 0.0
        %4089 = vmatpush1.msra.mxu0 0.0
        %4090 = vmatprep.subr.mxu0 0.0
        %4091 = vmatpush1.msra.mxu0 0.0
        %4092 = vmatprep.subr.mxu0 0.0
        %4093 = vmatpush1.msra.mxu0 0.0
        %4094 = vmatprep.subr.mxu0 0.0
        %4095 = vmatpush1.msra.mxu0 0.0
        %4096 = vmatprep.subr.mxu0 0.0
        %4097 = vmatpush1.msra.mxu0 0.0
        %4098 = vmatprep.subr.mxu0 0.0
        %4099 = vmatpush1.msra.mxu0 0.0
        %4100 = vmatprep.subr.mxu0 0.0
        %4101 = vmatpush1.msra.mxu0 0.0
        %4102 = vmatprep.subr.mxu0 0.0
        %4103 = vmatpush1.msra.mxu0 0.0
        %4104 = vmatprep.subr.mxu0 0.0
        %4105 = vmatpush1.msra.mxu0 0.0
        %4106 = vmatprep.subr.mxu0 0.0
        %4107 = vmatpush1.msra.mxu0 0.0
        %4108 = vmatprep.subr.mxu0 0.0
        %4109 = vmatpush1.msra.mxu0 0.0
        %4110 = vmatprep.subr.mxu0 0.0
        %4111 = vmatpush1.msra.mxu0 0.0
        %4112 = vmatprep.subr.mxu0 0.0
        %4113 = vmatpush1.msra.mxu0 0.0
        %4114 = vmatprep.subr.mxu0 0.0
        %4115 = vmatpush1.msra.mxu0 0.0
        %4116 = vmatprep.subr.mxu0 0.0
        %4117 = vmatpush1.msra.mxu0 0.0
        %4118 = vmatprep.subr.mxu0 0.0
        %4119 = vmatpush1.msra.mxu0 0.0
        %4120 = vmatprep.subr.mxu0 0.0
        %4121 = vmatpush1.msra.mxu0 0.0
        %4122 = vmatprep.subr.mxu0 0.0
        %4123 = vmatpush1.msra.mxu0 0.0
        %4124 = vmatprep.subr.mxu0 0.0
        %4125 = vmatpush1.msra.mxu0 0.0
        %4126 = vmatprep.subr.mxu0 0.0
        %4127 = vmatpush1.msra.mxu0 0.0
        %4128 = vmatprep.subr.mxu0 0.0
        %4129 = vmatpush1.msra.mxu0 0.0
        %4130 = vmatprep.subr.mxu0 0.0
        %4131 = vmatpush1.msra.mxu0 0.0
        %4132 = vmatprep.subr.mxu0 0.0
        %4133 = vmatpush1.msra.mxu0 0.0
        %4134 = vmatprep.mubr.f32.mxu0 0.0
        %v4135 = vand.u32 %v4066, 4294901760
        %v4136 = vsub.f32 %v4066, %v4135
        %v4137 = vand.u32 %v4136, 4294901760
        %v4138 = vsub.f32 %v4136, %v4137
        %v4139 = vand.u32 %v4138, 4294901760
        %4140 = vmatmul.mubr.f32.gmra.mrb[0].mxu0 %v4139
        %v4141 = vpop.f32.mrb[0].mxu0
        %v4142 = vadd.f32 0.0, %v4141
        %v4143 = vpop.f32.mrb[0].mxu0
        %4144 = vdwg.mxu0
        %4145 = vmatprep.subr.mxu0 0.0
        %v4146 = vand.u32 %v4056, 4294901760
        %v4147 = vsub.f32 %v4056, %v4146
        %v4148 = vand.u32 %v4147, 4294901760
        %v4149 = vsub.f32 %v4147, %v4148
        %v4150 = vand.u32 %v4149, 4294901760
        %4151 = vmatpush1.msra.mxu0 %v4150
        %4152 = vmatprep.subr.mxu0 0.0
        %v4153 = vand.u32 %v4062, 4294901760
        %v4154 = vsub.f32 %v4062, %v4153
        %v4155 = vand.u32 %v4154, 4294901760
        %v4156 = vsub.f32 %v4154, %v4155
        %v4157 = vand.u32 %v4156, 4294901760
        %4158 = vmatpush1.msra.mxu0 %v4157
        %4159 = vmatprep.subr.mxu0 0.0
        %4160 = vmatpush1.msra.mxu0 0.0
        %4161 = vmatprep.subr.mxu0 0.0
        %4162 = vmatpush1.msra.mxu0 0.0
        %4163 = vmatprep.subr.mxu0 0.0
        %4164 = vmatpush1.msra.mxu0 0.0
        %4165 = vmatprep.subr.mxu0 0.0
        %4166 = vmatpush1.msra.mxu0 0.0
        %4167 = vmatprep.subr.mxu0 0.0
        %4168 = vmatpush1.msra.mxu0 0.0
        %4169 = vmatprep.subr.mxu0 0.0
        %4170 = vmatpush1.msra.mxu0 0.0
        %4171 = vmatprep.subr.mxu0 0.0
        %4172 = vmatpush1.msra.mxu0 0.0
        %4173 = vmatprep.subr.mxu0 0.0
        %4174 = vmatpush1.msra.mxu0 0.0
        %4175 = vmatprep.subr.mxu0 0.0
        %4176 = vmatpush1.msra.mxu0 0.0
        %4177 = vmatprep.subr.mxu0 0.0
        %4178 = vmatpush1.msra.mxu0 0.0
        %4179 = vmatprep.subr.mxu0 0.0
        %4180 = vmatpush1.msra.mxu0 0.0
        %4181 = vmatprep.subr.mxu0 0.0
        %4182 = vmatpush1.msra.mxu0 0.0
        %4183 = vmatprep.subr.mxu0 0.0
        %4184 = vmatpush1.msra.mxu0 0.0
        %4185 = vmatprep.subr.mxu0 0.0
        %4186 = vmatpush1.msra.mxu0 0.0
        %4187 = vmatprep.subr.mxu0 0.0
        %4188 = vmatpush1.msra.mxu0 0.0
        %4189 = vmatprep.subr.mxu0 0.0
        %4190 = vmatpush1.msra.mxu0 0.0
        %4191 = vmatprep.subr.mxu0 0.0
        %4192 = vmatpush1.msra.mxu0 0.0
        %4193 = vmatprep.subr.mxu0 0.0
        %4194 = vmatpush1.msra.mxu0 0.0
        %4195 = vmatprep.subr.mxu0 0.0
        %4196 = vmatpush1.msra.mxu0 0.0
        %4197 = vmatprep.subr.mxu0 0.0
        %4198 = vmatpush1.msra.mxu0 0.0
        %4199 = vmatprep.subr.mxu0 0.0
        %4200 = vmatpush1.msra.mxu0 0.0
        %4201 = vmatprep.subr.mxu0 0.0
        %4202 = vmatpush1.msra.mxu0 0.0
        %4203 = vmatprep.subr.mxu0 0.0
        %4204 = vmatpush1.msra.mxu0 0.0
        %4205 = vmatprep.subr.mxu0 0.0
        %4206 = vmatpush1.msra.mxu0 0.0
        %4207 = vmatprep.subr.mxu0 0.0
        %4208 = vmatpush1.msra.mxu0 0.0
        %4209 = vmatprep.subr.mxu0 0.0
        %4210 = vmatpush1.msra.mxu0 0.0
        %4211 = vmatprep.subr.mxu0 0.0
        %4212 = vmatpush1.msra.mxu0 0.0
        %4213 = vmatprep.subr.mxu0 0.0
        %4214 = vmatpush1.msra.mxu0 0.0
        %4215 = vmatprep.subr.mxu0 0.0
        %4216 = vmatpush1.msra.mxu0 0.0
        %4217 = vmatprep.subr.mxu0 0.0
        %4218 = vmatpush1.msra.mxu0 0.0
        %4219 = vmatprep.mubr.f32.mxu0 0.0
        %v4220 = vand.u32 %v4066, 4294901760
        %4221 = vmatmul.mubr.f32.gmra.mrb[0].mxu0 %v4220
        %v4222 = vpop.f32.mrb[0].mxu0
        %v4223 = vadd.f32 %v4142, %v4222
        %v4224 = vpop.f32.mrb[0].mxu0
        %4225 = vdwg.mxu0
        %4226 = vmatprep.subr.mxu0 0.0
        %v4227 = vand.u32 %v4056, 4294901760
        %v4228 = vsub.f32 %v4056, %v4227
        %4229 = vmatpush1.msra.mxu0 %v4228
        %4230 = vmatprep.subr.mxu0 0.0
        %v4231 = vand.u32 %v4062, 4294901760
        %v4232 = vsub.f32 %v4062, %v4231
        %4233 = vmatpush1.msra.mxu0 %v4232
        %4234 = vmatprep.subr.mxu0 0.0
        %4235 = vmatpush1.msra.mxu0 0.0
        %4236 = vmatprep.subr.mxu0 0.0
        %4237 = vmatpush1.msra.mxu0 0.0
        %4238 = vmatprep.subr.mxu0 0.0
        %4239 = vmatpush1.msra.mxu0 0.0
        %4240 = vmatprep.subr.mxu0 0.0
        %4241 = vmatpush1.msra.mxu0 0.0
        %4242 = vmatprep.subr.mxu0 0.0
        %4243 = vmatpush1.msra.mxu0 0.0
        %4244 = vmatprep.subr.mxu0 0.0
        %4245 = vmatpush1.msra.mxu0 0.0
        %4246 = vmatprep.subr.mxu0 0.0
        %4247 = vmatpush1.msra.mxu0 0.0
        %4248 = vmatprep.subr.mxu0 0.0
        %4249 = vmatpush1.msra.mxu0 0.0
        %4250 = vmatprep.subr.mxu0 0.0
        %4251 = vmatpush1.msra.mxu0 0.0
        %4252 = vmatprep.subr.mxu0 0.0
        %4253 = vmatpush1.msra.mxu0 0.0
        %4254 = vmatprep.subr.mxu0 0.0
        %4255 = vmatpush1.msra.mxu0 0.0
        %4256 = vmatprep.subr.mxu0 0.0
        %4257 = vmatpush1.msra.mxu0 0.0
        %4258 = vmatprep.subr.mxu0 0.0
        %4259 = vmatpush1.msra.mxu0 0.0
        %4260 = vmatprep.subr.mxu0 0.0
        %4261 = vmatpush1.msra.mxu0 0.0
        %4262 = vmatprep.subr.mxu0 0.0
        %4263 = vmatpush1.msra.mxu0 0.0
        %4264 = vmatprep.subr.mxu0 0.0
        %4265 = vmatpush1.msra.mxu0 0.0
        %4266 = vmatprep.subr.mxu0 0.0
        %4267 = vmatpush1.msra.mxu0 0.0
        %4268 = vmatprep.subr.mxu0 0.0
        %4269 = vmatpush1.msra.mxu0 0.0
        %4270 = vmatprep.subr.mxu0 0.0
        %4271 = vmatpush1.msra.mxu0 0.0
        %4272 = vmatprep.subr.mxu0 0.0
        %4273 = vmatpush1.msra.mxu0 0.0
        %4274 = vmatprep.subr.mxu0 0.0
        %4275 = vmatpush1.msra.mxu0 0.0
        %4276 = vmatprep.subr.mxu0 0.0
        %4277 = vmatpush1.msra.mxu0 0.0
        %4278 = vmatprep.subr.mxu0 0.0
        %4279 = vmatpush1.msra.mxu0 0.0
        %4280 = vmatprep.subr.mxu0 0.0
        %4281 = vmatpush1.msra.mxu0 0.0
        %4282 = vmatprep.subr.mxu0 0.0
        %4283 = vmatpush1.msra.mxu0 0.0
        %4284 = vmatprep.subr.mxu0 0.0
        %4285 = vmatpush1.msra.mxu0 0.0
        %4286 = vmatprep.subr.mxu0 0.0
        %4287 = vmatpush1.msra.mxu0 0.0
        %4288 = vmatprep.subr.mxu0 0.0
        %4289 = vmatpush1.msra.mxu0 0.0
        %4290 = vmatprep.subr.mxu0 0.0
        %4291 = vmatpush1.msra.mxu0 0.0
        %4292 = vmatprep.subr.mxu0 0.0
        %4293 = vmatpush1.msra.mxu0 0.0
        %4294 = vmatprep.mubr.f32.mxu0 0.0
        %v4295 = vand.u32 %v4066, 4294901760
        %v4296 = vsub.f32 %v4066, %v4295
        %4297 = vmatmul.mubr.f32.gmra.mrb[0].mxu0 %v4296
        %v4298 = vpop.f32.mrb[0].mxu0
        %v4299 = vadd.f32 %v4223, %v4298
        %v4300 = vpop.f32.mrb[0].mxu0
        %4301 = vdwg.mxu0
        %4302 = vmatprep.subr.mxu0 0.0
        %v4303 = vand.u32 %v4056, 4294901760
        %4304 = vmatpush1.msra.mxu0 %v4303
        %4305 = vmatprep.subr.mxu0 0.0
        %v4306 = vand.u32 %v4062, 4294901760
        %4307 = vmatpush1.msra.mxu0 %v4306
        %4308 = vmatprep.subr.mxu0 0.0
        %4309 = vmatpush1.msra.mxu0 0.0
        %4310 = vmatprep.subr.mxu0 0.0
        %4311 = vmatpush1.msra.mxu0 0.0
        %4312 = vmatprep.subr.mxu0 0.0
        %4313 = vmatpush1.msra.mxu0 0.0
        %4314 = vmatprep.subr.mxu0 0.0
        %4315 = vmatpush1.msra.mxu0 0.0
        %4316 = vmatprep.subr.mxu0 0.0
        %4317 = vmatpush1.msra.mxu0 0.0
        %4318 = vmatprep.subr.mxu0 0.0
        %4319 = vmatpush1.msra.mxu0 0.0
        %4320 = vmatprep.subr.mxu0 0.0
        %4321 = vmatpush1.msra.mxu0 0.0
        %4322 = vmatprep.subr.mxu0 0.0
        %4323 = vmatpush1.msra.mxu0 0.0
        %4324 = vmatprep.subr.mxu0 0.0
        %4325 = vmatpush1.msra.mxu0 0.0
        %4326 = vmatprep.subr.mxu0 0.0
        %4327 = vmatpush1.msra.mxu0 0.0
        %4328 = vmatprep.subr.mxu0 0.0
        %4329 = vmatpush1.msra.mxu0 0.0
        %4330 = vmatprep.subr.mxu0 0.0
        %4331 = vmatpush1.msra.mxu0 0.0
        %4332 = vmatprep.subr.mxu0 0.0
        %4333 = vmatpush1.msra.mxu0 0.0
        %4334 = vmatprep.subr.mxu0 0.0
        %4335 = vmatpush1.msra.mxu0 0.0
        %4336 = vmatprep.subr.mxu0 0.0
        %4337 = vmatpush1.msra.mxu0 0.0
        %4338 = vmatprep.subr.mxu0 0.0
        %4339 = vmatpush1.msra.mxu0 0.0
        %4340 = vmatprep.subr.mxu0 0.0
        %4341 = vmatpush1.msra.mxu0 0.0
        %4342 = vmatprep.subr.mxu0 0.0
        %4343 = vmatpush1.msra.mxu0 0.0
        %4344 = vmatprep.subr.mxu0 0.0
        %4345 = vmatpush1.msra.mxu0 0.0
        %4346 = vmatprep.subr.mxu0 0.0
        %4347 = vmatpush1.msra.mxu0 0.0
        %4348 = vmatprep.subr.mxu0 0.0
        %4349 = vmatpush1.msra.mxu0 0.0
        %4350 = vmatprep.subr.mxu0 0.0
        %4351 = vmatpush1.msra.mxu0 0.0
        %4352 = vmatprep.subr.mxu0 0.0
        %4353 = vmatpush1.msra.mxu0 0.0
        %4354 = vmatprep.subr.mxu0 0.0
        %4355 = vmatpush1.msra.mxu0 0.0
        %4356 = vmatprep.subr.mxu0 0.0
        %4357 = vmatpush1.msra.mxu0 0.0
        %4358 = vmatprep.subr.mxu0 0.0
        %4359 = vmatpush1.msra.mxu0 0.0
        %4360 = vmatprep.subr.mxu0 0.0
        %4361 = vmatpush1.msra.mxu0 0.0
        %4362 = vmatprep.subr.mxu0 0.0
        %4363 = vmatpush1.msra.mxu0 0.0
        %4364 = vmatprep.subr.mxu0 0.0
        %4365 = vmatpush1.msra.mxu0 0.0
        %4366 = vmatprep.subr.mxu0 0.0
        %4367 = vmatpush1.msra.mxu0 0.0
        %4368 = vmatprep.mubr.f32.mxu0 0.0
        %v4369 = vand.u32 %v4066, 4294901760
        %v4370 = vsub.f32 %v4066, %v4369
        %v4371 = vand.u32 %v4370, 4294901760
        %4372 = vmatmul.mubr.f32.gmra.mrb[0].mxu0 %v4371
        %v4373 = vpop.f32.mrb[0].mxu0
        %v4374 = vadd.f32 %v4299, %v4373
        %v4375 = vpop.f32.mrb[0].mxu0
        %4376 = vdwg.mxu0
        %4377 = vmatprep.subr.mxu0 0.0
        %v4378 = vand.u32 %v4056, 4294901760
        %v4379 = vsub.f32 %v4056, %v4378
        %v4380 = vand.u32 %v4379, 4294901760
        %4381 = vmatpush1.msra.mxu0 %v4380
        %4382 = vmatprep.subr.mxu0 0.0
        %v4383 = vand.u32 %v4062, 4294901760
        %v4384 = vsub.f32 %v4062, %v4383
        %v4385 = vand.u32 %v4384, 4294901760
        %4386 = vmatpush1.msra.mxu0 %v4385
        %4387 = vmatprep.subr.mxu0 0.0
        %4388 = vmatpush1.msra.mxu0 0.0
        %4389 = vmatprep.subr.mxu0 0.0
        %4390 = vmatpush1.msra.mxu0 0.0
        %4391 = vmatprep.subr.mxu0 0.0
        %4392 = vmatpush1.msra.mxu0 0.0
        %4393 = vmatprep.subr.mxu0 0.0
        %4394 = vmatpush1.msra.mxu0 0.0
        %4395 = vmatprep.subr.mxu0 0.0
        %4396 = vmatpush1.msra.mxu0 0.0
        %4397 = vmatprep.subr.mxu0 0.0
        %4398 = vmatpush1.msra.mxu0 0.0
        %4399 = vmatprep.subr.mxu0 0.0
        %4400 = vmatpush1.msra.mxu0 0.0
        %4401 = vmatprep.subr.mxu0 0.0
        %4402 = vmatpush1.msra.mxu0 0.0
        %4403 = vmatprep.subr.mxu0 0.0
        %4404 = vmatpush1.msra.mxu0 0.0
        %4405 = vmatprep.subr.mxu0 0.0
        %4406 = vmatpush1.msra.mxu0 0.0
        %4407 = vmatprep.subr.mxu0 0.0
        %4408 = vmatpush1.msra.mxu0 0.0
        %4409 = vmatprep.subr.mxu0 0.0
        %4410 = vmatpush1.msra.mxu0 0.0
        %4411 = vmatprep.subr.mxu0 0.0
        %4412 = vmatpush1.msra.mxu0 0.0
        %4413 = vmatprep.subr.mxu0 0.0
        %4414 = vmatpush1.msra.mxu0 0.0
        %4415 = vmatprep.subr.mxu0 0.0
        %4416 = vmatpush1.msra.mxu0 0.0
        %4417 = vmatprep.subr.mxu0 0.0
        %4418 = vmatpush1.msra.mxu0 0.0
        %4419 = vmatprep.subr.mxu0 0.0
        %4420 = vmatpush1.msra.mxu0 0.0
        %4421 = vmatprep.subr.mxu0 0.0
        %4422 = vmatpush1.msra.mxu0 0.0
        %4423 = vmatprep.subr.mxu0 0.0
        %4424 = vmatpush1.msra.mxu0 0.0
        %4425 = vmatprep.subr.mxu0 0.0
        %4426 = vmatpush1.msra.mxu0 0.0
        %4427 = vmatprep.subr.mxu0 0.0
        %4428 = vmatpush1.msra.mxu0 0.0
        %4429 = vmatprep.subr.mxu0 0.0
        %4430 = vmatpush1.msra.mxu0 0.0
        %4431 = vmatprep.subr.mxu0 0.0
        %4432 = vmatpush1.msra.mxu0 0.0
        %4433 = vmatprep.subr.mxu0 0.0
        %4434 = vmatpush1.msra.mxu0 0.0
        %4435 = vmatprep.subr.mxu0 0.0
        %4436 = vmatpush1.msra.mxu0 0.0
        %4437 = vmatprep.subr.mxu0 0.0
        %4438 = vmatpush1.msra.mxu0 0.0
        %4439 = vmatprep.subr.mxu0 0.0
        %4440 = vmatpush1.msra.mxu0 0.0
        %4441 = vmatprep.subr.mxu0 0.0
        %4442 = vmatpush1.msra.mxu0 0.0
        %4443 = vmatprep.subr.mxu0 0.0
        %4444 = vmatpush1.msra.mxu0 0.0
        %4445 = vmatprep.subr.mxu0 0.0
        %4446 = vmatpush1.msra.mxu0 0.0
        %4447 = vmatprep.mubr.f32.mxu0 0.0
        %v4448 = vand.u32 %v4066, 4294901760
        %4449 = vmatmul.mubr.f32.gmra.mrb[0].mxu0 %v4448
        %v4450 = vpop.f32.mrb[0].mxu0
        %v4451 = vadd.f32 %v4374, %v4450
        %v4452 = vpop.f32.mrb[0].mxu0
        %4453 = vdwg.mxu0
        %4454 = vmatprep.subr.mxu0 0.0
        %v4455 = vand.u32 %v4056, 4294901760
        %4456 = vmatpush1.msra.mxu0 %v4455
        %4457 = vmatprep.subr.mxu0 0.0
        %v4458 = vand.u32 %v4062, 4294901760
        %4459 = vmatpush1.msra.mxu0 %v4458
        %4460 = vmatprep.subr.mxu0 0.0
        %4461 = vmatpush1.msra.mxu0 0.0
        %4462 = vmatprep.subr.mxu0 0.0
        %4463 = vmatpush1.msra.mxu0 0.0
        %4464 = vmatprep.subr.mxu0 0.0
        %4465 = vmatpush1.msra.mxu0 0.0
        %4466 = vmatprep.subr.mxu0 0.0
        %4467 = vmatpush1.msra.mxu0 0.0
        %4468 = vmatprep.subr.mxu0 0.0
        %4469 = vmatpush1.msra.mxu0 0.0
        %4470 = vmatprep.subr.mxu0 0.0
        %4471 = vmatpush1.msra.mxu0 0.0
        %4472 = vmatprep.subr.mxu0 0.0
        %4473 = vmatpush1.msra.mxu0 0.0
        %4474 = vmatprep.subr.mxu0 0.0
        %4475 = vmatpush1.msra.mxu0 0.0
        %4476 = vmatprep.subr.mxu0 0.0
        %4477 = vmatpush1.msra.mxu0 0.0
        %4478 = vmatprep.subr.mxu0 0.0
        %4479 = vmatpush1.msra.mxu0 0.0
        %4480 = vmatprep.subr.mxu0 0.0
        %4481 = vmatpush1.msra.mxu0 0.0
        %4482 = vmatprep.subr.mxu0 0.0
        %4483 = vmatpush1.msra.mxu0 0.0
        %4484 = vmatprep.subr.mxu0 0.0
        %4485 = vmatpush1.msra.mxu0 0.0
        %4486 = vmatprep.subr.mxu0 0.0
        %4487 = vmatpush1.msra.mxu0 0.0
        %4488 = vmatprep.subr.mxu0 0.0
        %4489 = vmatpush1.msra.mxu0 0.0
        %4490 = vmatprep.subr.mxu0 0.0
        %4491 = vmatpush1.msra.mxu0 0.0
        %4492 = vmatprep.subr.mxu0 0.0
        %4493 = vmatpush1.msra.mxu0 0.0
        %4494 = vmatprep.subr.mxu0 0.0
        %4495 = vmatpush1.msra.mxu0 0.0
        %4496 = vmatprep.subr.mxu0 0.0
        %4497 = vmatpush1.msra.mxu0 0.0
        %4498 = vmatprep.subr.mxu0 0.0
        %4499 = vmatpush1.msra.mxu0 0.0
        %4500 = vmatprep.subr.mxu0 0.0
        %4501 = vmatpush1.msra.mxu0 0.0
        %4502 = vmatprep.subr.mxu0 0.0
        %4503 = vmatpush1.msra.mxu0 0.0
        %4504 = vmatprep.subr.mxu0 0.0
        %4505 = vmatpush1.msra.mxu0 0.0
        %4506 = vmatprep.subr.mxu0 0.0
        %4507 = vmatpush1.msra.mxu0 0.0
        %4508 = vmatprep.subr.mxu0 0.0
        %4509 = vmatpush1.msra.mxu0 0.0
        %4510 = vmatprep.subr.mxu0 0.0
        %4511 = vmatpush1.msra.mxu0 0.0
        %4512 = vmatprep.subr.mxu0 0.0
        %4513 = vmatpush1.msra.mxu0 0.0
        %4514 = vmatprep.subr.mxu0 0.0
        %4515 = vmatpush1.msra.mxu0 0.0
        %4516 = vmatprep.subr.mxu0 0.0
        %4517 = vmatpush1.msra.mxu0 0.0
        %4518 = vmatprep.subr.mxu0 0.0
        %4519 = vmatpush1.msra.mxu0 0.0
        %4520 = vmatprep.mubr.f32.mxu0 0.0
        %v4521 = vand.u32 %v4066, 4294901760
        %4522 = vmatmul.mubr.f32.gmra.mrb[0].mxu0 %v4521
        %v4523 = vpop.f32.mrb[0].mxu0
        %v4524 = vadd.f32 %v4451, %v4523
        %v4525 = vpop.f32.mrb[0].mxu0
        %4526 = vdwg.mxu0
        %v4527 = vadd.f32 %v3573, %v4524
        %4529 = vset.pattern.permute.xlu0 0
        %4530 = vperm.xlu0 %4529, %v482
        %v4531 = vpop.permute.xlu0 %4530
        %v4533 = vmul.f32 %v4527, %v4531
        %4535 = vset.pattern.permute.xlu0 0
        %4536 = vperm.xlu0 %4535, %v483
        %v4537 = vpop.permute.xlu0 %4536
        %v4539 = vadd.f32 %v4533, %v4537
        %v4540 = vmax.f32 %v4539, 0.0
        %vm4541 = vcmask 31744
        %v4543 = vsel %vm4541, %v484, 0
        %v4546 = vsel %vm4541, %v485, 0
        %vm4548 = vcmask 1043456
        %v4550 = vsel %vm4548, %v4540, 0
        %4552 = vmatprep.subr.mxu0 0.0
        %v4553 = vand.u32 %v4550, 4294901760
        %4554 = vmatpush1.msra.mxu0 %v4553
        %4555 = vmatprep.subr.mxu0 0.0
        %4556 = vmatpush1.msra.mxu0 0.0
        %4557 = vmatprep.subr.mxu0 0.0
        %4558 = vmatpush1.msra.mxu0 0.0
        %4559 = vmatprep.subr.mxu0 0.0
        %4560 = vmatpush1.msra.mxu0 0.0
        %4561 = vmatprep.subr.mxu0 0.0
        %4562 = vmatpush1.msra.mxu0 0.0
        %4563 = vmatprep.subr.mxu0 0.0
        %4564 = vmatpush1.msra.mxu0 0.0
        %4565 = vmatprep.subr.mxu0 0.0
        %4566 = vmatpush1.msra.mxu0 0.0
        %4567 = vmatprep.subr.mxu0 0.0
        %4568 = vmatpush1.msra.mxu0 0.0
        %4569 = vmatprep.subr.mxu0 0.0
        %4570 = vmatpush1.msra.mxu0 0.0
        %4571 = vmatprep.subr.mxu0 0.0
        %4572 = vmatpush1.msra.mxu0 0.0
        %4573 = vmatprep.subr.mxu0 0.0
        %4574 = vmatpush1.msra.mxu0 0.0
        %4575 = vmatprep.subr.mxu0 0.0
        %4576 = vmatpush1.msra.mxu0 0.0
        %4577 = vmatprep.subr.mxu0 0.0
        %4578 = vmatpush1.msra.mxu0 0.0
        %4579 = vmatprep.subr.mxu0 0.0
        %4580 = vmatpush1.msra.mxu0 0.0
        %4581 = vmatprep.subr.mxu0 0.0
        %4582 = vmatpush1.msra.mxu0 0.0
        %4583 = vmatprep.subr.mxu0 0.0
        %4584 = vmatpush1.msra.mxu0 0.0
        %4585 = vmatprep.subr.mxu0 0.0
        %4586 = vmatpush1.msra.mxu0 0.0
        %4587 = vmatprep.subr.mxu0 0.0
        %4588 = vmatpush1.msra.mxu0 0.0
        %4589 = vmatprep.subr.mxu0 0.0
        %4590 = vmatpush1.msra.mxu0 0.0
        %4591 = vmatprep.subr.mxu0 0.0
        %4592 = vmatpush1.msra.mxu0 0.0
        %4593 = vmatprep.subr.mxu0 0.0
        %4594 = vmatpush1.msra.mxu0 0.0
        %4595 = vmatprep.subr.mxu0 0.0
        %4596 = vmatpush1.msra.mxu0 0.0
        %4597 = vmatprep.subr.mxu0 0.0
        %4598 = vmatpush1.msra.mxu0 0.0
        %4599 = vmatprep.subr.mxu0 0.0
        %4600 = vmatpush1.msra.mxu0 0.0
        %4601 = vmatprep.subr.mxu0 0.0
        %4602 = vmatpush1.msra.mxu0 0.0
        %4603 = vmatprep.subr.mxu0 0.0
        %4604 = vmatpush1.msra.mxu0 0.0
        %4605 = vmatprep.subr.mxu0 0.0
        %4606 = vmatpush1.msra.mxu0 0.0
        %4607 = vmatprep.subr.mxu0 0.0
        %4608 = vmatpush1.msra.mxu0 0.0
        %4609 = vmatprep.subr.mxu0 0.0
        %4610 = vmatpush1.msra.mxu0 0.0
        %4611 = vmatprep.subr.mxu0 0.0
        %4612 = vmatpush1.msra.mxu0 0.0
        %4613 = vmatprep.subr.mxu0 0.0
        %4614 = vmatpush1.msra.mxu0 0.0
        %4615 = vmatprep.subr.mxu0 0.0
        %4616 = vmatpush1.msra.mxu0 0.0
        %4617 = vmatprep.mubr.f32.mxu0 0.0
        %v4618 = vand.u32 %v4543, 4294901760
        %v4619 = vsub.f32 %v4543, %v4618
        %v4620 = vand.u32 %v4619, 4294901760
        %v4621 = vsub.f32 %v4619, %v4620
        %v4622 = vand.u32 %v4621, 4294901760
        %4623 = vmatmul.mubr.f32.gmra.mrb[0].mxu0 %v4622
        %v4624 = vpop.f32.mrb[0].mxu0
        %v4625 = vadd.f32 0.0, %v4624
        %v4626 = vpop.f32.mrb[0].mxu0
        %4627 = vmatprep.mubr.f32.mxu0 0.0
        %v4628 = vand.u32 %v4546, 4294901760
        %v4629 = vsub.f32 %v4546, %v4628
        %v4630 = vand.u32 %v4629, 4294901760
        %v4631 = vsub.f32 %v4629, %v4630
        %v4632 = vand.u32 %v4631, 4294901760
        %4633 = vmatmul.mubr.f32.gmra.mrb[0].mxu0 %v4632
        %v4634 = vpop.f32.mrb[0].mxu0
        %v4635 = vadd.f32 0.0, %v4634
        %v4636 = vpop.f32.mrb[0].mxu0
        %4637 = vdwg.mxu0
        %4638 = vmatprep.subr.mxu0 0.0
        %v4639 = vand.u32 %v4550, 4294901760
        %v4640 = vsub.f32 %v4550, %v4639
        %v4641 = vand.u32 %v4640, 4294901760
        %v4642 = vsub.f32 %v4640, %v4641
        %v4643 = vand.u32 %v4642, 4294901760
        %4644 = vmatpush1.msra.mxu0 %v4643
        %4645 = vmatprep.subr.mxu0 0.0
        %4646 = vmatpush1.msra.mxu0 0.0
        %4647 = vmatprep.subr.mxu0 0.0
        %4648 = vmatpush1.msra.mxu0 0.0
        %4649 = vmatprep.subr.mxu0 0.0
        %4650 = vmatpush1.msra.mxu0 0.0
        %4651 = vmatprep.subr.mxu0 0.0
        %4652 = vmatpush1.msra.mxu0 0.0
        %4653 = vmatprep.subr.mxu0 0.0
        %4654 = vmatpush1.msra.mxu0 0.0
        %4655 = vmatprep.subr.mxu0 0.0
        %4656 = vmatpush1.msra.mxu0 0.0
        %4657 = vmatprep.subr.mxu0 0.0
        %4658 = vmatpush1.msra.mxu0 0.0
        %4659 = vmatprep.subr.mxu0 0.0
        %4660 = vmatpush1.msra.mxu0 0.0
        %4661 = vmatprep.subr.mxu0 0.0
        %4662 = vmatpush1.msra.mxu0 0.0
        %4663 = vmatprep.subr.mxu0 0.0
        %4664 = vmatpush1.msra.mxu0 0.0
        %4665 = vmatprep.subr.mxu0 0.0
        %4666 = vmatpush1.msra.mxu0 0.0
        %4667 = vmatprep.subr.mxu0 0.0
        %4668 = vmatpush1.msra.mxu0 0.0
        %4669 = vmatprep.subr.mxu0 0.0
        %4670 = vmatpush1.msra.mxu0 0.0
        %4671 = vmatprep.subr.mxu0 0.0
        %4672 = vmatpush1.msra.mxu0 0.0
        %4673 = vmatprep.subr.mxu0 0.0
        %4674 = vmatpush1.msra.mxu0 0.0
        %4675 = vmatprep.subr.mxu0 0.0
        %4676 = vmatpush1.msra.mxu0 0.0
        %4677 = vmatprep.subr.mxu0 0.0
        %4678 = vmatpush1.msra.mxu0 0.0
        %4679 = vmatprep.subr.mxu0 0.0
        %4680 = vmatpush1.msra.mxu0 0.0
        %4681 = vmatprep.subr.mxu0 0.0
        %4682 = vmatpush1.msra.mxu0 0.0
        %4683 = vmatprep.subr.mxu0 0.0
        %4684 = vmatpush1.msra.mxu0 0.0
        %4685 = vmatprep.subr.mxu0 0.0
        %4686 = vmatpush1.msra.mxu0 0.0
        %4687 = vmatprep.subr.mxu0 0.0
        %4688 = vmatpush1.msra.mxu0 0.0
        %4689 = vmatprep.subr.mxu0 0.0
        %4690 = vmatpush1.msra.mxu0 0.0
        %4691 = vmatprep.subr.mxu0 0.0
        %4692 = vmatpush1.msra.mxu0 0.0
        %4693 = vmatprep.subr.mxu0 0.0
        %4694 = vmatpush1.msra.mxu0 0.0
        %4695 = vmatprep.subr.mxu0 0.0
        %4696 = vmatpush1.msra.mxu0 0.0
        %4697 = vmatprep.subr.mxu0 0.0
        %4698 = vmatpush1.msra.mxu0 0.0
        %4699 = vmatprep.subr.mxu0 0.0
        %4700 = vmatpush1.msra.mxu0 0.0
        %4701 = vmatprep.subr.mxu0 0.0
        %4702 = vmatpush1.msra.mxu0 0.0
        %4703 = vmatprep.subr.mxu0 0.0
        %4704 = vmatpush1.msra.mxu0 0.0
        %4705 = vmatprep.subr.mxu0 0.0
        %4706 = vmatpush1.msra.mxu0 0.0
        %4707 = vmatprep.mubr.f32.mxu0 0.0
        %v4708 = vand.u32 %v4543, 4294901760
        %4709 = vmatmul.mubr.f32.gmra.mrb[0].mxu0 %v4708
        %v4710 = vpop.f32.mrb[0].mxu0
        %v4711 = vadd.f32 %v4625, %v4710
        %v4712 = vpop.f32.mrb[0].mxu0
        %4713 = vmatprep.mubr.f32.mxu0 0.0
        %v4714 = vand.u32 %v4546, 4294901760
        %4715 = vmatmul.mubr.f32.gmra.mrb[0].mxu0 %v4714
        %v4716 = vpop.f32.mrb[0].mxu0
        %v4717 = vadd.f32 %v4635, %v4716
        %v4718 = vpop.f32.mrb[0].mxu0
        %4719 = vdwg.mxu0
        %4720 = vmatprep.subr.mxu0 0.0
        %v4721 = vand.u32 %v4550, 4294901760
        %v4722 = vsub.f32 %v4550, %v4721
        %4723 = vmatpush1.msra.mxu0 %v4722
        %4724 = vmatprep.subr.mxu0 0.0
        %4725 = vmatpush1.msra.mxu0 0.0
        %4726 = vmatprep.subr.mxu0 0.0
        %4727 = vmatpush1.msra.mxu0 0.0
        %4728 = vmatprep.subr.mxu0 0.0
        %4729 = vmatpush1.msra.mxu0 0.0
        %4730 = vmatprep.subr.mxu0 0.0
        %4731 = vmatpush1.msra.mxu0 0.0
        %4732 = vmatprep.subr.mxu0 0.0
        %4733 = vmatpush1.msra.mxu0 0.0
        %4734 = vmatprep.subr.mxu0 0.0
        %4735 = vmatpush1.msra.mxu0 0.0
        %4736 = vmatprep.subr.mxu0 0.0
        %4737 = vmatpush1.msra.mxu0 0.0
        %4738 = vmatprep.subr.mxu0 0.0
        %4739 = vmatpush1.msra.mxu0 0.0
        %4740 = vmatprep.subr.mxu0 0.0
        %4741 = vmatpush1.msra.mxu0 0.0
        %4742 = vmatprep.subr.mxu0 0.0
        %4743 = vmatpush1.msra.mxu0 0.0
        %4744 = vmatprep.subr.mxu0 0.0
        %4745 = vmatpush1.msra.mxu0 0.0
        %4746 = vmatprep.subr.mxu0 0.0
        %4747 = vmatpush1.msra.mxu0 0.0
        %4748 = vmatprep.subr.mxu0 0.0
        %4749 = vmatpush1.msra.mxu0 0.0
        %4750 = vmatprep.subr.mxu0 0.0
        %4751 = vmatpush1.msra.mxu0 0.0
        %4752 = vmatprep.subr.mxu0 0.0
        %4753 = vmatpush1.msra.mxu0 0.0
        %4754 = vmatprep.subr.mxu0 0.0
        %4755 = vmatpush1.msra.mxu0 0.0
        %4756 = vmatprep.subr.mxu0 0.0
        %4757 = vmatpush1.msra.mxu0 0.0
        %4758 = vmatprep.subr.mxu0 0.0
        %4759 = vmatpush1.msra.mxu0 0.0
        %4760 = vmatprep.subr.mxu0 0.0
        %4761 = vmatpush1.msra.mxu0 0.0
        %4762 = vmatprep.subr.mxu0 0.0
        %4763 = vmatpush1.msra.mxu0 0.0
        %4764 = vmatprep.subr.mxu0 0.0
        %4765 = vmatpush1.msra.mxu0 0.0
        %4766 = vmatprep.subr.mxu0 0.0
        %4767 = vmatpush1.msra.mxu0 0.0
        %4768 = vmatprep.subr.mxu0 0.0
        %4769 = vmatpush1.msra.mxu0 0.0
        %4770 = vmatprep.subr.mxu0 0.0
        %4771 = vmatpush1.msra.mxu0 0.0
        %4772 = vmatprep.subr.mxu0 0.0
        %4773 = vmatpush1.msra.mxu0 0.0
        %4774 = vmatprep.subr.mxu0 0.0
        %4775 = vmatpush1.msra.mxu0 0.0
        %4776 = vmatprep.subr.mxu0 0.0
        %4777 = vmatpush1.msra.mxu0 0.0
        %4778 = vmatprep.subr.mxu0 0.0
        %4779 = vmatpush1.msra.mxu0 0.0
        %4780 = vmatprep.subr.mxu0 0.0
        %4781 = vmatpush1.msra.mxu0 0.0
        %4782 = vmatprep.subr.mxu0 0.0
        %4783 = vmatpush1.msra.mxu0 0.0
        %4784 = vmatprep.subr.mxu0 0.0
        %4785 = vmatpush1.msra.mxu0 0.0
        %4786 = vmatprep.mubr.f32.mxu0 0.0
        %v4787 = vand.u32 %v4543, 4294901760
        %v4788 = vsub.f32 %v4543, %v4787
        %4789 = vmatmul.mubr.f32.gmra.mrb[0].mxu0 %v4788
        %v4790 = vpop.f32.mrb[0].mxu0
        %v4791 = vadd.f32 %v4711, %v4790
        %v4792 = vpop.f32.mrb[0].mxu0
        %4793 = vmatprep.mubr.f32.mxu0 0.0
        %v4794 = vand.u32 %v4546, 4294901760
        %v4795 = vsub.f32 %v4546, %v4794
        %4796 = vmatmul.mubr.f32.gmra.mrb[0].mxu0 %v4795
        %v4797 = vpop.f32.mrb[0].mxu0
        %v4798 = vadd.f32 %v4717, %v4797
        %v4799 = vpop.f32.mrb[0].mxu0
        %4800 = vdwg.mxu0
        %4801 = vmatprep.subr.mxu0 0.0
        %v4802 = vand.u32 %v4550, 4294901760
        %4803 = vmatpush1.msra.mxu0 %v4802
        %4804 = vmatprep.subr.mxu0 0.0
        %4805 = vmatpush1.msra.mxu0 0.0
        %4806 = vmatprep.subr.mxu0 0.0
        %4807 = vmatpush1.msra.mxu0 0.0
        %4808 = vmatprep.subr.mxu0 0.0
        %4809 = vmatpush1.msra.mxu0 0.0
        %4810 = vmatprep.subr.mxu0 0.0
        %4811 = vmatpush1.msra.mxu0 0.0
        %4812 = vmatprep.subr.mxu0 0.0
        %4813 = vmatpush1.msra.mxu0 0.0
        %4814 = vmatprep.subr.mxu0 0.0
        %4815 = vmatpush1.msra.mxu0 0.0
        %4816 = vmatprep.subr.mxu0 0.0
        %4817 = vmatpush1.msra.mxu0 0.0
        %4818 = vmatprep.subr.mxu0 0.0
        %4819 = vmatpush1.msra.mxu0 0.0
        %4820 = vmatprep.subr.mxu0 0.0
        %4821 = vmatpush1.msra.mxu0 0.0
        %4822 = vmatprep.subr.mxu0 0.0
        %4823 = vmatpush1.msra.mxu0 0.0
        %4824 = vmatprep.subr.mxu0 0.0
        %4825 = vmatpush1.msra.mxu0 0.0
        %4826 = vmatprep.subr.mxu0 0.0
        %4827 = vmatpush1.msra.mxu0 0.0
        %4828 = vmatprep.subr.mxu0 0.0
        %4829 = vmatpush1.msra.mxu0 0.0
        %4830 = vmatprep.subr.mxu0 0.0
        %4831 = vmatpush1.msra.mxu0 0.0
        %4832 = vmatprep.subr.mxu0 0.0
        %4833 = vmatpush1.msra.mxu0 0.0
        %4834 = vmatprep.subr.mxu0 0.0
        %4835 = vmatpush1.msra.mxu0 0.0
        %4836 = vmatprep.subr.mxu0 0.0
        %4837 = vmatpush1.msra.mxu0 0.0
        %4838 = vmatprep.subr.mxu0 0.0
        %4839 = vmatpush1.msra.mxu0 0.0
        %4840 = vmatprep.subr.mxu0 0.0
        %4841 = vmatpush1.msra.mxu0 0.0
        %4842 = vmatprep.subr.mxu0 0.0
        %4843 = vmatpush1.msra.mxu0 0.0
        %4844 = vmatprep.subr.mxu0 0.0
        %4845 = vmatpush1.msra.mxu0 0.0
        %4846 = vmatprep.subr.mxu0 0.0
        %4847 = vmatpush1.msra.mxu0 0.0
        %4848 = vmatprep.subr.mxu0 0.0
        %4849 = vmatpush1.msra.mxu0 0.0
        %4850 = vmatprep.subr.mxu0 0.0
        %4851 = vmatpush1.msra.mxu0 0.0
        %4852 = vmatprep.subr.mxu0 0.0
        %4853 = vmatpush1.msra.mxu0 0.0
        %4854 = vmatprep.subr.mxu0 0.0
        %4855 = vmatpush1.msra.mxu0 0.0
        %4856 = vmatprep.subr.mxu0 0.0
        %4857 = vmatpush1.msra.mxu0 0.0
        %4858 = vmatprep.subr.mxu0 0.0
        %4859 = vmatpush1.msra.mxu0 0.0
        %4860 = vmatprep.subr.mxu0 0.0
        %4861 = vmatpush1.msra.mxu0 0.0
        %4862 = vmatprep.subr.mxu0 0.0
        %4863 = vmatpush1.msra.mxu0 0.0
        %4864 = vmatprep.subr.mxu0 0.0
        %4865 = vmatpush1.msra.mxu0 0.0
        %4866 = vmatprep.mubr.f32.mxu0 0.0
        %v4867 = vand.u32 %v4543, 4294901760
        %v4868 = vsub.f32 %v4543, %v4867
        %v4869 = vand.u32 %v4868, 4294901760
        %4870 = vmatmul.mubr.f32.gmra.mrb[0].mxu0 %v4869
        %v4871 = vpop.f32.mrb[0].mxu0
        %v4872 = vadd.f32 %v4791, %v4871
        %v4873 = vpop.f32.mrb[0].mxu0
        %4874 = vmatprep.mubr.f32.mxu0 0.0
        %v4875 = vand.u32 %v4546, 4294901760
        %v4876 = vsub.f32 %v4546, %v4875
        %v4877 = vand.u32 %v4876, 4294901760
        %4878 = vmatmul.mubr.f32.gmra.mrb[0].mxu0 %v4877
        %v4879 = vpop.f32.mrb[0].mxu0
        %v4880 = vadd.f32 %v4798, %v4879
        %v4881 = vpop.f32.mrb[0].mxu0
        %4882 = vdwg.mxu0
        %4883 = vmatprep.subr.mxu0 0.0
        %v4884 = vand.u32 %v4550, 4294901760
        %v4885 = vsub.f32 %v4550, %v4884
        %v4886 = vand.u32 %v4885, 4294901760
        %4887 = vmatpush1.msra.mxu0 %v4886
        %4888 = vmatprep.subr.mxu0 0.0
        %4889 = vmatpush1.msra.mxu0 0.0
        %4890 = vmatprep.subr.mxu0 0.0
        %4891 = vmatpush1.msra.mxu0 0.0
        %4892 = vmatprep.subr.mxu0 0.0
        %4893 = vmatpush1.msra.mxu0 0.0
        %4894 = vmatprep.subr.mxu0 0.0
        %4895 = vmatpush1.msra.mxu0 0.0
        %4896 = vmatprep.subr.mxu0 0.0
        %4897 = vmatpush1.msra.mxu0 0.0
        %4898 = vmatprep.subr.mxu0 0.0
        %4899 = vmatpush1.msra.mxu0 0.0
        %4900 = vmatprep.subr.mxu0 0.0
        %4901 = vmatpush1.msra.mxu0 0.0
        %4902 = vmatprep.subr.mxu0 0.0
        %4903 = vmatpush1.msra.mxu0 0.0
        %4904 = vmatprep.subr.mxu0 0.0
        %4905 = vmatpush1.msra.mxu0 0.0
        %4906 = vmatprep.subr.mxu0 0.0
        %4907 = vmatpush1.msra.mxu0 0.0
        %4908 = vmatprep.subr.mxu0 0.0
        %4909 = vmatpush1.msra.mxu0 0.0
        %4910 = vmatprep.subr.mxu0 0.0
        %4911 = vmatpush1.msra.mxu0 0.0
        %4912 = vmatprep.subr.mxu0 0.0
        %4913 = vmatpush1.msra.mxu0 0.0
        %4914 = vmatprep.subr.mxu0 0.0
        %4915 = vmatpush1.msra.mxu0 0.0
        %4916 = vmatprep.subr.mxu0 0.0
        %4917 = vmatpush1.msra.mxu0 0.0
        %4918 = vmatprep.subr.mxu0 0.0
        %4919 = vmatpush1.msra.mxu0 0.0
        %4920 = vmatprep.subr.mxu0 0.0
        %4921 = vmatpush1.msra.mxu0 0.0
        %4922 = vmatprep.subr.mxu0 0.0
        %4923 = vmatpush1.msra.mxu0 0.0
        %4924 = vmatprep.subr.mxu0 0.0
        %4925 = vmatpush1.msra.mxu0 0.0
        %4926 = vmatprep.subr.mxu0 0.0
        %4927 = vmatpush1.msra.mxu0 0.0
        %4928 = vmatprep.subr.mxu0 0.0
        %4929 = vmatpush1.msra.mxu0 0.0
        %4930 = vmatprep.subr.mxu0 0.0
        %4931 = vmatpush1.msra.mxu0 0.0
        %4932 = vmatprep.subr.mxu0 0.0
        %4933 = vmatpush1.msra.mxu0 0.0
        %4934 = vmatprep.subr.mxu0 0.0
        %4935 = vmatpush1.msra.mxu0 0.0
        %4936 = vmatprep.subr.mxu0 0.0
        %4937 = vmatpush1.msra.mxu0 0.0
        %4938 = vmatprep.subr.mxu0 0.0
        %4939 = vmatpush1.msra.mxu0 0.0
        %4940 = vmatprep.subr.mxu0 0.0
        %4941 = vmatpush1.msra.mxu0 0.0
        %4942 = vmatprep.subr.mxu0 0.0
        %4943 = vmatpush1.msra.mxu0 0.0
        %4944 = vmatprep.subr.mxu0 0.0
        %4945 = vmatpush1.msra.mxu0 0.0
        %4946 = vmatprep.subr.mxu0 0.0
        %4947 = vmatpush1.msra.mxu0 0.0
        %4948 = vmatprep.subr.mxu0 0.0
        %4949 = vmatpush1.msra.mxu0 0.0
        %4950 = vmatprep.mubr.f32.mxu0 0.0
        %v4951 = vand.u32 %v4543, 4294901760
        %4952 = vmatmul.mubr.f32.gmra.mrb[0].mxu0 %v4951
        %v4953 = vpop.f32.mrb[0].mxu0
        %v4954 = vadd.f32 %v4872, %v4953
        %v4955 = vpop.f32.mrb[0].mxu0
        %4956 = vmatprep.mubr.f32.mxu0 0.0
        %v4957 = vand.u32 %v4546, 4294901760
        %4958 = vmatmul.mubr.f32.gmra.mrb[0].mxu0 %v4957
        %v4959 = vpop.f32.mrb[0].mxu0
        %v4960 = vadd.f32 %v4880, %v4959
        %v4961 = vpop.f32.mrb[0].mxu0
        %4962 = vdwg.mxu0
        %4963 = vmatprep.subr.mxu0 0.0
        %v4964 = vand.u32 %v4550, 4294901760
        %4965 = vmatpush1.msra.mxu0 %v4964
        %4966 = vmatprep.subr.mxu0 0.0
        %4967 = vmatpush1.msra.mxu0 0.0
        %4968 = vmatprep.subr.mxu0 0.0
        %4969 = vmatpush1.msra.mxu0 0.0
        %4970 = vmatprep.subr.mxu0 0.0
        %4971 = vmatpush1.msra.mxu0 0.0
        %4972 = vmatprep.subr.mxu0 0.0
        %4973 = vmatpush1.msra.mxu0 0.0
        %4974 = vmatprep.subr.mxu0 0.0
        %4975 = vmatpush1.msra.mxu0 0.0
        %4976 = vmatprep.subr.mxu0 0.0
        %4977 = vmatpush1.msra.mxu0 0.0
        %4978 = vmatprep.subr.mxu0 0.0
        %4979 = vmatpush1.msra.mxu0 0.0
        %4980 = vmatprep.subr.mxu0 0.0
        %4981 = vmatpush1.msra.mxu0 0.0
        %4982 = vmatprep.subr.mxu0 0.0
        %4983 = vmatpush1.msra.mxu0 0.0
        %4984 = vmatprep.subr.mxu0 0.0
        %4985 = vmatpush1.msra.mxu0 0.0
        %4986 = vmatprep.subr.mxu0 0.0
        %4987 = vmatpush1.msra.mxu0 0.0
        %4988 = vmatprep.subr.mxu0 0.0
        %4989 = vmatpush1.msra.mxu0 0.0
        %4990 = vmatprep.subr.mxu0 0.0
        %4991 = vmatpush1.msra.mxu0 0.0
        %4992 = vmatprep.subr.mxu0 0.0
        %4993 = vmatpush1.msra.mxu0 0.0
        %4994 = vmatprep.subr.mxu0 0.0
        %4995 = vmatpush1.msra.mxu0 0.0
        %4996 = vmatprep.subr.mxu0 0.0
        %4997 = vmatpush1.msra.mxu0 0.0
        %4998 = vmatprep.subr.mxu0 0.0
        %4999 = vmatpush1.msra.mxu0 0.0
        %5000 = vmatprep.subr.mxu0 0.0
        %5001 = vmatpush1.msra.mxu0 0.0
        %5002 = vmatprep.subr.mxu0 0.0
        %5003 = vmatpush1.msra.mxu0 0.0
        %5004 = vmatprep.subr.mxu0 0.0
        %5005 = vmatpush1.msra.mxu0 0.0
        %5006 = vmatprep.subr.mxu0 0.0
        %5007 = vmatpush1.msra.mxu0 0.0
        %5008 = vmatprep.subr.mxu0 0.0
        %5009 = vmatpush1.msra.mxu0 0.0
        %5010 = vmatprep.subr.mxu0 0.0
        %5011 = vmatpush1.msra.mxu0 0.0
        %5012 = vmatprep.subr.mxu0 0.0
        %5013 = vmatpush1.msra.mxu0 0.0
        %5014 = vmatprep.subr.mxu0 0.0
        %5015 = vmatpush1.msra.mxu0 0.0
        %5016 = vmatprep.subr.mxu0 0.0
        %5017 = vmatpush1.msra.mxu0 0.0
        %5018 = vmatprep.subr.mxu0 0.0
        %5019 = vmatpush1.msra.mxu0 0.0
        %5020 = vmatprep.subr.mxu0 0.0
        %5021 = vmatpush1.msra.mxu0 0.0
        %5022 = vmatprep.subr.mxu0 0.0
        %5023 = vmatpush1.msra.mxu0 0.0
        %5024 = vmatprep.subr.mxu0 0.0
        %5025 = vmatpush1.msra.mxu0 0.0
        %5026 = vmatprep.subr.mxu0 0.0
        %5027 = vmatpush1.msra.mxu0 0.0
        %5028 = vmatprep.mubr.f32.mxu0 0.0
        %v5029 = vand.u32 %v4543, 4294901760
        %5030 = vmatmul.mubr.f32.gmra.mrb[0].mxu0 %v5029
        %v5031 = vpop.f32.mrb[0].mxu0
        %v5032 = vadd.f32 %v4954, %v5031
        %v5033 = vpop.f32.mrb[0].mxu0
        %5034 = vmatprep.mubr.f32.mxu0 0.0
        %v5035 = vand.u32 %v4546, 4294901760
        %5036 = vmatmul.mubr.f32.gmra.mrb[0].mxu0 %v5035
        %v5037 = vpop.f32.mrb[0].mxu0
        %v5038 = vadd.f32 %v4960, %v5037
        %v5039 = vpop.f32.mrb[0].mxu0
        %5040 = vdwg.mxu0
        %v5041 = vsub.f32 0.0, %v5032
        %v5042 = vsub.f32 0.0, %v5038
        %v5043 = vmul.f32 %v5041, 1.442695
        %v5044 = vpow.pop %v5043
        %v5045 = vmul.f32 %v5042, 1.442695
        %v5046 = vpow.pop %v5045
        %v5047 = vadd.f32 %v5044, 1.0
        %v5048 = vadd.f32 %v5046, 1.0
        %v5049 = vrcp.pop %v5047
        %v5050 = vmul.f32 1.0, %v5049
        %v5051 = vrcp.pop %v5048
        %v5052 = vmul.f32 1.0, %v5051
        %5055 = vrot.lane.b32.xlu0 %v5050, 1
        %v5056 = vpop.permute.xlu0 %5055
        %5057 = vrot.lane.b32.xlu0 %v5052, 1
        %v5058 = vpop.permute.xlu0 %5057
        %v5061 = vmul.f32 %v1671, %v5056
        %v5062 = vmul.f32 %v1673, %v5058
        %v5063 = vld [vmem:[%s341] sm:$0xff]
        %v5064 = vld [vmem:[%s341 + $0x8] sm:$0xff]
        %v5065 = vld [vmem:[%s341 + $0x10] sm:$0xff]
        %v5066 = vld [vmem:[%s341 + $0x18] sm:$0xff]
        %5068 = vset.pattern.permute.xlu0 1
        %5069 = vperm.xlu0 %5068, %v5061
        %v5070 = vpop.permute.xlu0 %5069
        %5073 = vset.pattern.permute.xlu0 1
        %5074 = vperm.xlu0 %5073, %v5062
        %v5075 = vpop.permute.xlu0 %5074
        %v5077 = vmul.f32 %v5070, %v5063
        %v5078 = vmul.f32 %v5070, %v5064
        %v5079 = vmul.f32 %v5075, %v5065
        %v5080 = vmul.f32 %v5075, %v5066
        %s5081 = scalar_lea.vmem %s341, 32 [#allocation2]
        %v5082 = vld [vmem:[%s5081] sm:$0xff]
        %v5083 = vld [vmem:[%s5081 + $0x8] sm:$0xff]
        %v5084 = vld [vmem:[%s5081 + $0x10] sm:$0xff]
        %v5085 = vld [vmem:[%s5081 + $0x18] sm:$0xff]
        %5086 = vset.pattern.permute.xlu0 2
        %5087 = vperm.xlu0 %5086, %v5061
        %v5088 = vpop.permute.xlu0 %5087
        %5090 = vset.pattern.permute.xlu0 2
        %5091 = vperm.xlu0 %5090, %v5062
        %v5092 = vpop.permute.xlu0 %5091
        %v5094 = vmul.f32 %v5088, %v5082
        %v5095 = vmul.f32 %v5088, %v5083
        %v5096 = vmul.f32 %v5092, %v5084
        %v5097 = vmul.f32 %v5092, %v5085
        %v5098 = vadd.f32 %v5077, %v5094
        %v5099 = vadd.f32 %v5078, %v5095
        %v5100 = vadd.f32 %v5079, %v5096
        %v5101 = vadd.f32 %v5080, %v5097
        %5102 = vst [vmem:[%s377] sm:$0xff] %v5098
        %5103 = vst [vmem:[%s377 + $0x8] sm:$0xff] %v5099
        %5104 = vst [vmem:[%s377 + $0x10] sm:$0xff] %v5100
        %5105 = vst [vmem:[%s377 + $0x18] sm:$0xff] %v5101
        %v5106 = vmul.f32 %v1671, %v5050
        %v5107 = vmul.f32 %v1673, %v5052
        %5109 = vset.pattern.permute.xlu0 0
        %5110 = vperm.xlu0 %5109, %v5106
        %v5111 = vpop.permute.xlu0 %5110
        %5114 = vset.pattern.permute.xlu0 0
        %5115 = vperm.xlu0 %5114, %v5107
        %v5116 = vpop.permute.xlu0 %5115
        %v5118 = vmul.f32 %v5111, %v5063
        %v5119 = vmul.f32 %v5111, %v5064
        %v5120 = vmul.f32 %v5116, %v5065
        %v5121 = vmul.f32 %v5116, %v5066
        %5122 = vset.pattern.permute.xlu0 1
        %5123 = vperm.xlu0 %5122, %v5106
        %v5124 = vpop.permute.xlu0 %5123
        %5126 = vset.pattern.permute.xlu0 1
        %5127 = vperm.xlu0 %5126, %v5107
        %v5128 = vpop.permute.xlu0 %5127
        %v5130 = vmul.f32 %v5124, %v5082
        %v5131 = vmul.f32 %v5124, %v5083
        %v5132 = vmul.f32 %v5128, %v5084
        %v5133 = vmul.f32 %v5128, %v5085
        %v5134 = vadd.f32 %v5118, %v5130
        %v5135 = vadd.f32 %v5119, %v5131
        %v5136 = vadd.f32 %v5120, %v5132
        %v5137 = vadd.f32 %v5121, %v5133
        %s5138 = scalar_lea.vmem %s341, 64 [#allocation2]
        %v5139 = vld [vmem:[%s5138] sm:$0xff]
        %v5140 = vld [vmem:[%s5138 + $0x8] sm:$0xff]
        %v5141 = vld [vmem:[%s5138 + $0x10] sm:$0xff]
        %v5142 = vld [vmem:[%s5138 + $0x18] sm:$0xff]
        %5143 = vset.pattern.permute.xlu0 2
        %5144 = vperm.xlu0 %5143, %v5106
        %v5145 = vpop.permute.xlu0 %5144
        %5147 = vset.pattern.permute.xlu0 2
        %5148 = vperm.xlu0 %5147, %v5107
        %v5149 = vpop.permute.xlu0 %5148
        %v5151 = vmul.f32 %v5145, %v5139
        %v5152 = vmul.f32 %v5145, %v5140
        %v5153 = vmul.f32 %v5149, %v5141
        %v5154 = vmul.f32 %v5149, %v5142
        %v5155 = vadd.f32 %v5134, %v5151
        %v5156 = vadd.f32 %v5135, %v5152
        %v5157 = vadd.f32 %v5136, %v5153
        %v5158 = vadd.f32 %v5137, %v5154
        %s5159 = scalar_lea.vmem %s377, 32 [#allocation5]
        %5160 = vst [vmem:[%s5159] sm:$0xff] %v5155
        %5161 = vst [vmem:[%s5159 + $0x8] sm:$0xff] %v5156
        %5162 = vst [vmem:[%s5159 + $0x10] sm:$0xff] %v5157
        %5163 = vst [vmem:[%s5159 + $0x18] sm:$0xff] %v5158
        %5164 = vrot.lane.b32.xlu0 %v5050, 127
        %v5165 = vpop.permute.xlu0 %5164
        %5166 = vrot.lane.b32.xlu0 %v5052, 127
        %v5167 = vpop.permute.xlu0 %5166
        %v5170 = vmul.f32 %v1671, %v5165
        %v5171 = vmul.f32 %v1673, %v5167
        %5173 = vset.pattern.permute.xlu0 0
        %5174 = vperm.xlu0 %5173, %v5170
        %v5175 = vpop.permute.xlu0 %5174
        %5178 = vset.pattern.permute.xlu0 0
        %5179 = vperm.xlu0 %5178, %v5171
        %v5180 = vpop.permute.xlu0 %5179
        %v5182 = vmul.f32 %v5175, %v5082
        %v5183 = vmul.f32 %v5175, %v5083
        %v5184 = vmul.f32 %v5180, %v5084
        %v5185 = vmul.f32 %v5180, %v5085
        %5186 = vset.pattern.permute.xlu0 1
        %5187 = vperm.xlu0 %5186, %v5170
        %v5188 = vpop.permute.xlu0 %5187
        %5190 = vset.pattern.permute.xlu0 1
        %5191 = vperm.xlu0 %5190, %v5171
        %v5192 = vpop.permute.xlu0 %5191
        %v5194 = vmul.f32 %v5188, %v5139
        %v5195 = vmul.f32 %v5188, %v5140
        %v5196 = vmul.f32 %v5192, %v5141
        %v5197 = vmul.f32 %v5192, %v5142
        %v5198 = vadd.f32 %v5182, %v5194
        %v5199 = vadd.f32 %v5183, %v5195
        %v5200 = vadd.f32 %v5184, %v5196
        %v5201 = vadd.f32 %v5185, %v5197
        %s5202 = scalar_lea.vmem %s341, 96 [#allocation2]
        %v5203 = vld [vmem:[%s5202] sm:$0xff]
        %v5204 = vld [vmem:[%s5202 + $0x8] sm:$0xff]
        %v5205 = vld [vmem:[%s5202 + $0x10] sm:$0xff]
        %v5206 = vld [vmem:[%s5202 + $0x18] sm:$0xff]
        %5207 = vset.pattern.permute.xlu0 2
        %5208 = vperm.xlu0 %5207, %v5170
        %v5209 = vpop.permute.xlu0 %5208
        %5211 = vset.pattern.permute.xlu0 2
        %5212 = vperm.xlu0 %5211, %v5171
        %v5213 = vpop.permute.xlu0 %5212
        %v5215 = vmul.f32 %v5209, %v5203
        %v5216 = vmul.f32 %v5209, %v5204
        %v5217 = vmul.f32 %v5213, %v5205
        %v5218 = vmul.f32 %v5213, %v5206
        %v5219 = vadd.f32 %v5198, %v5215
        %v5220 = vadd.f32 %v5199, %v5216
        %v5221 = vadd.f32 %v5200, %v5217
        %v5222 = vadd.f32 %v5201, %v5218
        %s5223 = scalar_lea.vmem %s377, 64 [#allocation5]
        %5224 = vst [vmem:[%s5223] sm:$0xff] %v5219
        %5225 = vst [vmem:[%s5223 + $0x8] sm:$0xff] %v5220
        %5226 = vst [vmem:[%s5223 + $0x10] sm:$0xff] %v5221
        %5227 = vst [vmem:[%s5223 + $0x18] sm:$0xff] %v5222
        %5228 = vrot.lane.b32.xlu0 %v5050, 126
        %v5229 = vpop.permute.xlu0 %5228
        %5230 = vrot.lane.b32.xlu0 %v5052, 126
        %v5231 = vpop.permute.xlu0 %5230
        %v5234 = vmul.f32 %v1671, %v5229
        %v5235 = vmul.f32 %v1673, %v5231
        %5237 = vset.pattern.permute.xlu0 0
        %5238 = vperm.xlu0 %5237, %v5234
        %v5239 = vpop.permute.xlu0 %5238
        %5242 = vset.pattern.permute.xlu0 0
        %5243 = vperm.xlu0 %5242, %v5235
        %v5244 = vpop.permute.xlu0 %5243
        %v5246 = vmul.f32 %v5239, %v5139
        %v5247 = vmul.f32 %v5239, %v5140
        %v5248 = vmul.f32 %v5244, %v5141
        %v5249 = vmul.f32 %v5244, %v5142
        %5250 = vset.pattern.permute.xlu0 1
        %5251 = vperm.xlu0 %5250, %v5234
        %v5252 = vpop.permute.xlu0 %5251
        %5254 = vset.pattern.permute.xlu0 1
        %5255 = vperm.xlu0 %5254, %v5235
        %v5256 = vpop.permute.xlu0 %5255
        %v5258 = vmul.f32 %v5252, %v5203
        %v5259 = vmul.f32 %v5252, %v5204
        %v5260 = vmul.f32 %v5256, %v5205
        %v5261 = vmul.f32 %v5256, %v5206
        %v5262 = vadd.f32 %v5246, %v5258
        %v5263 = vadd.f32 %v5247, %v5259
        %v5264 = vadd.f32 %v5248, %v5260
        %v5265 = vadd.f32 %v5249, %v5261
        %s5266 = scalar_lea.vmem %s341, 128 [#allocation2]
        %v5267 = vld [vmem:[%s5266] sm:$0xff]
        %v5268 = vld [vmem:[%s5266 + $0x8] sm:$0xff]
        %v5269 = vld [vmem:[%s5266 + $0x10] sm:$0xff]
        %v5270 = vld [vmem:[%s5266 + $0x18] sm:$0xff]
        %5271 = vset.pattern.permute.xlu0 2
        %5272 = vperm.xlu0 %5271, %v5234
        %v5273 = vpop.permute.xlu0 %5272
        %5275 = vset.pattern.permute.xlu0 2
        %5276 = vperm.xlu0 %5275, %v5235
        %v5277 = vpop.permute.xlu0 %5276
        %v5279 = vmul.f32 %v5273, %v5267
        %v5280 = vmul.f32 %v5273, %v5268
        %v5281 = vmul.f32 %v5277, %v5269
        %v5282 = vmul.f32 %v5277, %v5270
        %v5283 = vadd.f32 %v5262, %v5279
        %v5284 = vadd.f32 %v5263, %v5280
        %v5285 = vadd.f32 %v5264, %v5281
        %v5286 = vadd.f32 %v5265, %v5282
        %s5287 = scalar_lea.vmem %s377, 96 [#allocation5]
        %5288 = vst [vmem:[%s5287] sm:$0xff] %v5283
        %5289 = vst [vmem:[%s5287 + $0x8] sm:$0xff] %v5284
        %5290 = vst [vmem:[%s5287 + $0x10] sm:$0xff] %v5285
        %5291 = vst [vmem:[%s5287 + $0x18] sm:$0xff] %v5286
        %5292 = vrot.lane.b32.xlu0 %v5050, 125
        %v5293 = vpop.permute.xlu0 %5292
        %5294 = vrot.lane.b32.xlu0 %v5052, 125
        %v5295 = vpop.permute.xlu0 %5294
        %v5298 = vmul.f32 %v1671, %v5293
        %v5299 = vmul.f32 %v1673, %v5295
        %5301 = vset.pattern.permute.xlu0 0
        %5302 = vperm.xlu0 %5301, %v5298
        %v5303 = vpop.permute.xlu0 %5302
        %5306 = vset.pattern.permute.xlu0 0
        %5307 = vperm.xlu0 %5306, %v5299
        %v5308 = vpop.permute.xlu0 %5307
        %v5310 = vmul.f32 %v5303, %v5203
        %v5311 = vmul.f32 %v5303, %v5204
        %v5312 = vmul.f32 %v5308, %v5205
        %v5313 = vmul.f32 %v5308, %v5206
        %5314 = vset.pattern.permute.xlu0 1
        %5315 = vperm.xlu0 %5314, %v5298
        %v5316 = vpop.permute.xlu0 %5315
        %5318 = vset.pattern.permute.xlu0 1
        %5319 = vperm.xlu0 %5318, %v5299
        %v5320 = vpop.permute.xlu0 %5319
        %v5322 = vmul.f32 %v5316, %v5267
        %v5323 = vmul.f32 %v5316, %v5268
        %v5324 = vmul.f32 %v5320, %v5269
        %v5325 = vmul.f32 %v5320, %v5270
        %v5326 = vadd.f32 %v5310, %v5322
        %v5327 = vadd.f32 %v5311, %v5323
        %v5328 = vadd.f32 %v5312, %v5324
        %v5329 = vadd.f32 %v5313, %v5325
        %s5330 = scalar_lea.vmem %s341, 160 [#allocation2]
        %v5331 = vld [vmem:[%s5330] sm:$0xff]
        %v5332 = vld [vmem:[%s5330 + $0x8] sm:$0xff]
        %v5333 = vld [vmem:[%s5330 + $0x10] sm:$0xff]
        %v5334 = vld [vmem:[%s5330 + $0x18] sm:$0xff]
        %5335 = vset.pattern.permute.xlu0 2
        %5336 = vperm.xlu0 %5335, %v5298
        %v5337 = vpop.permute.xlu0 %5336
        %5339 = vset.pattern.permute.xlu0 2
        %5340 = vperm.xlu0 %5339, %v5299
        %v5341 = vpop.permute.xlu0 %5340
        %v5343 = vmul.f32 %v5337, %v5331
        %v5344 = vmul.f32 %v5337, %v5332
        %v5345 = vmul.f32 %v5341, %v5333
        %v5346 = vmul.f32 %v5341, %v5334
        %v5347 = vadd.f32 %v5326, %v5343
        %v5348 = vadd.f32 %v5327, %v5344
        %v5349 = vadd.f32 %v5328, %v5345
        %v5350 = vadd.f32 %v5329, %v5346
        %s5351 = scalar_lea.vmem %s377, 128 [#allocation5]
        %5352 = vst [vmem:[%s5351] sm:$0xff] %v5347
        %5353 = vst [vmem:[%s5351 + $0x8] sm:$0xff] %v5348
        %5354 = vst [vmem:[%s5351 + $0x10] sm:$0xff] %v5349
        %5355 = vst [vmem:[%s5351 + $0x18] sm:$0xff] %v5350
        %5356 = vrot.lane.b32.xlu0 %v5050, 124
        %v5357 = vpop.permute.xlu0 %5356
        %5358 = vrot.lane.b32.xlu0 %v5052, 124
        %v5359 = vpop.permute.xlu0 %5358
        %v5362 = vmul.f32 %v1671, %v5357
        %v5363 = vmul.f32 %v1673, %v5359
        %5365 = vset.pattern.permute.xlu0 0
        %5366 = vperm.xlu0 %5365, %v5362
        %v5367 = vpop.permute.xlu0 %5366
        %5370 = vset.pattern.permute.xlu0 0
        %5371 = vperm.xlu0 %5370, %v5363
        %v5372 = vpop.permute.xlu0 %5371
        %v5374 = vmul.f32 %v5367, %v5267
        %v5375 = vmul.f32 %v5367, %v5268
        %v5376 = vmul.f32 %v5372, %v5269
        %v5377 = vmul.f32 %v5372, %v5270
        %5378 = vset.pattern.permute.xlu0 1
        %5379 = vperm.xlu0 %5378, %v5362
        %v5380 = vpop.permute.xlu0 %5379
        %5382 = vset.pattern.permute.xlu0 1
        %5383 = vperm.xlu0 %5382, %v5363
        %v5384 = vpop.permute.xlu0 %5383
        %v5386 = vmul.f32 %v5380, %v5331
        %v5387 = vmul.f32 %v5380, %v5332
        %v5388 = vmul.f32 %v5384, %v5333
        %v5389 = vmul.f32 %v5384, %v5334
        %v5390 = vadd.f32 %v5374, %v5386
        %v5391 = vadd.f32 %v5375, %v5387
        %v5392 = vadd.f32 %v5376, %v5388
        %v5393 = vadd.f32 %v5377, %v5389
        %s5394 = scalar_lea.vmem %s341, 192 [#allocation2]
        %v5395 = vld [vmem:[%s5394] sm:$0xff]
        %v5396 = vld [vmem:[%s5394 + $0x8] sm:$0xff]
        %v5397 = vld [vmem:[%s5394 + $0x10] sm:$0xff]
        %v5398 = vld [vmem:[%s5394 + $0x18] sm:$0xff]
        %5399 = vset.pattern.permute.xlu0 2
        %5400 = vperm.xlu0 %5399, %v5362
        %v5401 = vpop.permute.xlu0 %5400
        %5403 = vset.pattern.permute.xlu0 2
        %5404 = vperm.xlu0 %5403, %v5363
        %v5405 = vpop.permute.xlu0 %5404
        %v5407 = vmul.f32 %v5401, %v5395
        %v5408 = vmul.f32 %v5401, %v5396
        %v5409 = vmul.f32 %v5405, %v5397
        %v5410 = vmul.f32 %v5405, %v5398
        %v5411 = vadd.f32 %v5390, %v5407
        %v5412 = vadd.f32 %v5391, %v5408
        %v5413 = vadd.f32 %v5392, %v5409
        %v5414 = vadd.f32 %v5393, %v5410
        %s5415 = scalar_lea.vmem %s377, 160 [#allocation5]
        %5416 = vst [vmem:[%s5415] sm:$0xff] %v5411
        %5417 = vst [vmem:[%s5415 + $0x8] sm:$0xff] %v5412
        %5418 = vst [vmem:[%s5415 + $0x10] sm:$0xff] %v5413
        %5419 = vst [vmem:[%s5415 + $0x18] sm:$0xff] %v5414
        %5420 = vrot.lane.b32.xlu0 %v5050, 123
        %v5421 = vpop.permute.xlu0 %5420
        %5422 = vrot.lane.b32.xlu0 %v5052, 123
        %v5423 = vpop.permute.xlu0 %5422
        %v5426 = vmul.f32 %v1671, %v5421
        %v5427 = vmul.f32 %v1673, %v5423
        %5429 = vset.pattern.permute.xlu0 0
        %5430 = vperm.xlu0 %5429, %v5426
        %v5431 = vpop.permute.xlu0 %5430
        %5434 = vset.pattern.permute.xlu0 0
        %5435 = vperm.xlu0 %5434, %v5427
        %v5436 = vpop.permute.xlu0 %5435
        %v5438 = vmul.f32 %v5431, %v5331
        %v5439 = vmul.f32 %v5431, %v5332
        %v5440 = vmul.f32 %v5436, %v5333
        %v5441 = vmul.f32 %v5436, %v5334
        %5442 = vset.pattern.permute.xlu0 1
        %5443 = vperm.xlu0 %5442, %v5426
        %v5444 = vpop.permute.xlu0 %5443
        %5446 = vset.pattern.permute.xlu0 1
        %5447 = vperm.xlu0 %5446, %v5427
        %v5448 = vpop.permute.xlu0 %5447
        %v5450 = vmul.f32 %v5444, %v5395
        %v5451 = vmul.f32 %v5444, %v5396
        %v5452 = vmul.f32 %v5448, %v5397
        %v5453 = vmul.f32 %v5448, %v5398
        %v5454 = vadd.f32 %v5438, %v5450
        %v5455 = vadd.f32 %v5439, %v5451
        %v5456 = vadd.f32 %v5440, %v5452
        %v5457 = vadd.f32 %v5441, %v5453
        %s5458 = scalar_lea.vmem %s341, 224 [#allocation2]
        %v5459 = vld [vmem:[%s5458] sm:$0xff]
        %v5460 = vld [vmem:[%s5458 + $0x8] sm:$0xff]
        %v5461 = vld [vmem:[%s5458 + $0x10] sm:$0xff]
        %v5462 = vld [vmem:[%s5458 + $0x18] sm:$0xff]
        %5463 = vset.pattern.permute.xlu0 2
        %5464 = vperm.xlu0 %5463, %v5426
        %v5465 = vpop.permute.xlu0 %5464
        %5467 = vset.pattern.permute.xlu0 2
        %5468 = vperm.xlu0 %5467, %v5427
        %v5469 = vpop.permute.xlu0 %5468
        %v5471 = vmul.f32 %v5465, %v5459
        %v5472 = vmul.f32 %v5465, %v5460
        %v5473 = vmul.f32 %v5469, %v5461
        %v5474 = vmul.f32 %v5469, %v5462
        %v5475 = vadd.f32 %v5454, %v5471
        %v5476 = vadd.f32 %v5455, %v5472
        %v5477 = vadd.f32 %v5456, %v5473
        %v5478 = vadd.f32 %v5457, %v5474
        %s5479 = scalar_lea.vmem %s377, 192 [#allocation5]
        %5480 = vst [vmem:[%s5479] sm:$0xff] %v5475
        %5481 = vst [vmem:[%s5479 + $0x8] sm:$0xff] %v5476
        %5482 = vst [vmem:[%s5479 + $0x10] sm:$0xff] %v5477
        %5483 = vst [vmem:[%s5479 + $0x18] sm:$0xff] %v5478
        %5484 = vrot.lane.b32.xlu0 %v5050, 122
        %v5485 = vpop.permute.xlu0 %5484
        %5486 = vrot.lane.b32.xlu0 %v5052, 122
        %v5487 = vpop.permute.xlu0 %5486
        %v5490 = vmul.f32 %v1671, %v5485
        %v5491 = vmul.f32 %v1673, %v5487
        %5493 = vset.pattern.permute.xlu0 0
        %5494 = vperm.xlu0 %5493, %v5490
        %v5495 = vpop.permute.xlu0 %5494
        %5498 = vset.pattern.permute.xlu0 0
        %5499 = vperm.xlu0 %5498, %v5491
        %v5500 = vpop.permute.xlu0 %5499
        %v5502 = vmul.f32 %v5495, %v5395
        %v5503 = vmul.f32 %v5495, %v5396
        %v5504 = vmul.f32 %v5500, %v5397
        %v5505 = vmul.f32 %v5500, %v5398
        %5506 = vset.pattern.permute.xlu0 1
        %5507 = vperm.xlu0 %5506, %v5490
        %v5508 = vpop.permute.xlu0 %5507
        %5510 = vset.pattern.permute.xlu0 1
        %5511 = vperm.xlu0 %5510, %v5491
        %v5512 = vpop.permute.xlu0 %5511
        %v5514 = vmul.f32 %v5508, %v5459
        %v5515 = vmul.f32 %v5508, %v5460
        %v5516 = vmul.f32 %v5512, %v5461
        %v5517 = vmul.f32 %v5512, %v5462
        %v5518 = vadd.f32 %v5502, %v5514
        %v5519 = vadd.f32 %v5503, %v5515
        %v5520 = vadd.f32 %v5504, %v5516
        %v5521 = vadd.f32 %v5505, %v5517
        %s5522 = scalar_lea.vmem %s377, 224 [#allocation5]
        %5523 = vst [vmem:[%s5522] sm:$0xff] %v5518
        %5524 = vst [vmem:[%s5522 + $0x8] sm:$0xff] %v5519
        %5525 = vst [vmem:[%s5522 + $0x10] sm:$0xff] %v5520
        %5526 = vst [vmem:[%s5522 + $0x18] sm:$0xff] %v5521
        %s5527 = sand.u32 %s250, 1
        %s5528 = scalar_lea.sflag [#allocation4], %s5527
        %s5529 = sand.u32 %s250, 1
        %s5530 = smul.addr %s5529, 256
        %s5531 = scalar_lea.vmem [#allocation5], %s5530
        // Predicated region
        $region65: #{tpu_custom_call.1} parent=59 // pred_check
          %p5532 = pneg %p260
        $region66: #{tpu_custom_call.1} parent=59 // pred_check_branch
          %5534 = sbr.rel (%p5532) target = $region68
        $region67: #{tpu_custom_call.1} parent=59 // pred_region
          %s5536 = ssub.s32 4096, 4096
          %5537 = vsyncadd %s5528, %s5536
          %s5538 = smul.addr %s27, 32
          %s5539 = smul.addr %s5538, 128
          %s5540 = scalar_lea.hbm %s10, %s5539
          %s5541 = sshll.u32 %s5531, 4
          %s5542 = int_to_ptr.vmem [resolvable:$true] %s5541
          %5547 = dma.vmem_to_hbm [thread:$0]  %s5542, 4096, %s5540, %s5528, 256, 256, 16
        $region68: #{tpu_custom_call.1} parent=59 // pred_fallthru
          _
      $region60: #{tpu_custom_call.1} parent=5 // pred_fallthru
        _
      %p5548 = scmp.le.s32.totalorder 2, %s22
      // Predicated region
      $region69: #{tpu_custom_call.1} parent=5 // pred_check
        %p5549 = pneg %p5548
      $region70: #{tpu_custom_call.1} parent=5 // pred_check_branch
        %5551 = sbr.rel (%p5549) target = $region72
      $region71: #{tpu_custom_call.1} parent=5 // pred_region
        %s5552 = ssub.s32 %s22, 2
        // Predicated region
        $region73: #{tpu_custom_call.1} parent=71 // pred_check
          %p5553 = pneg %p266
        $region74: #{tpu_custom_call.1} parent=71 // pred_check_branch
          %5555 = sbr.rel (%p5553) target = $region76
        $region75: #{tpu_custom_call.1} parent=71 // pred_region
          %s5556 = sand.u32 %s251, 1
          %s5557 = scalar_lea.sflag [#allocation4], %s5556
          %s5558 = sand.u32 %s251, 1
          %s5559 = smul.addr %s5558, 256
          %s5560 = scalar_lea.vmem [#allocation5], %s5559
          %5561 = dma.done %s5557, 4096
        $region76: #{tpu_custom_call.1} parent=71 // pred_fallthru
          _
      $region72: #{tpu_custom_call.1} parent=5 // pred_fallthru
        _
    $region6: #{tpu_custom_call.1} parent=1 // loop_footer
      %s26 = sadd.s32 1, %s22
    $region7: #{tpu_custom_call.1} parent=1 // loop_footer_branch
      %21 = sbr.rel target = $region3
    $region8: #{tpu_custom_call.1} parent=1 // loop_exit
      _
    %5562 = vsyncpa [#allocation3], 1
    %s5563 = scalar_lea.sflag [#allocation3], 1
    %5564 = vsyncpa %s5563, 1
    %5565 = vsyncpa [#allocation4], 1
    %s5566 = scalar_lea.sflag [#allocation4], 1
    %5567 = vsyncpa %s5566, 1

</llo_original>
